<compile_context>
chip_gen: v6e
topology: v6e:2x2x1
jax: 0.10.0
libtpu: 0.0.40
codegen_flags: <defaults>
</compile_context>

<pallas_src>
import math

import jax
import jax.numpy as jnp
from jax import lax
from jax.experimental import pallas as pl
from jax.experimental.pallas import tpu as pltpu


def _make_kernel(th, Wo, C, fused):
    """th: output-row tile, Wo: output width, C: (padded) input channels per tap."""
    M = th * Wo

    def kernel(x_ee, x_eo, x_oe, x_oo, w_ref, b_ref, o_ref):
        # x_??:  (1, Hq, Wq, C)   parity quadrants, VMEM-resident for the whole batch item
        # w_ref: fused -> (9*C, tn)    |  per-tap -> (9, C, tn)
        # b_ref: (1, tn) f32
        # o_ref: (1, th*Wo, tn)   flat, lane-dense output slab
        quads = (x_ee, x_eo, x_oe, x_oo)
        r0 = pl.program_id(1) * th

        taps = []
        for kh in range(3):
            for kw in range(3):
                # padded-input pixel (2*ho+kh, 2*wo+kw) lives in quadrant (kh%2, kw%2)
                # at quadrant coordinates (ho + kh//2, wo + kw//2).
                quad = quads[2 * (kh % 2) + (kw % 2)]
                taps.append(quad[0, pl.ds(r0 + kh // 2, th), pl.ds(kw // 2, Wo), :])

        if fused:
            # Small-C path: one MXU matmul with K = 9*C (taps concatenated along channels,
            # matching the (kh, kw, c) ordering of the fused weight).
            patch = jnp.concatenate(taps, axis=-1).reshape(M, 9 * C)
            acc = jnp.dot(patch, w_ref[...], preferred_element_type=jnp.float32)
        else:
            # Large-C path: per-tap matmuls, K = C (>= 128, lane-dense), f32 accumulation.
            acc = jnp.zeros((M, o_ref.shape[-1]), jnp.float32)
            for t in range(9):
                acc = acc + jnp.dot(taps[t].reshape(M, C), w_ref[t],
                                    preferred_element_type=jnp.float32)

        acc = acc + b_ref[...].astype(jnp.float32)
        o_ref[0] = acc.astype(o_ref.dtype)   # flat (M, tn) store: no in-kernel H/W reshape

    return kernel


def downsample_forward(x_nchw, weight, bias, *, compute_dtype=jnp.bfloat16,
                       m_target=256, n_tile=256, vmem_limit_bytes=None):
    """x_nchw: (B, C, H, W); weight: (C_out, C_in, 3, 3) OIHW; bias: (C_out,). Returns NCHW."""
    B, C, H, W = x_nchw.shape
    C_out = weight.shape[0]

    # F.pad(x, (0, 1, 0, 1)): pad W right by 1, H bottom by 1 (done virtually via quadrants).
    Hp, Wp = H + 1, W + 1
    Ho = (Hp - 3) // 2 + 1
    Wo = (Wp - 3) // 2 + 1

    # Row tile: target M = th*Wo ~ m_target and keep M a sublane multiple when row-tiling.
    th = min(Ho, max(1, -(-m_target // Wo)))
    g = 8 // math.gcd(Wo, 8)                 # smallest th granule s.t. th*Wo % 8 == 0
    th = -(-th // g) * g
    if th >= Ho:
        th = Ho                              # single row tile -> full-dim block, always legal
    n_rows = -(-Ho // th)
    Ho_pad = n_rows * th
    Hq, Wq = Ho_pad + 1, Wo + 1              # quadrant extents (incl. the +1 taps)
    M = th * Wo

    fuse_pref = C < 128                      # small C: fuse the 9 taps into K = 9C
    Cq = C if fuse_pref else (-(-C // 128)) * 128   # large C: lane-dense padded K = C

    lane = 128
    Npad = -(-C_out // lane) * lane
    tn = n_tile if (n_tile <= Npad and Npad % n_tile == 0) else lane
    n_n = Npad // tn

    out_dtype = x_nchw.dtype
    x_nhwc = jnp.transpose(x_nchw, (0, 2, 3, 1)).astype(compute_dtype)

    def fit(a):
        # Crop / zero-pad dims 1 (rows), 2 (cols), 3 (channels) to (Hq, Wq, Cq); the zero
        # row/col doubles as the F.pad(0,1,0,1) padding, so no padded input copy in HBM.
        a = a[:, :Hq, :Wq, :Cq]
        pr, pc, pk = Hq - a.shape[1], Wq - a.shape[2], Cq - a.shape[3]
        if pr or pc or pk:
            a = jnp.pad(a, ((0, 0), (0, pr), (0, pc), (0, pk)))
        return a

    # Parity quadrants (even/odd rows x even/odd cols) -- together exactly one input copy.
    quads = [fit(x_nhwc[:, p::2, q::2, :]) for p in (0, 1) for q in (0, 1)]

    # Weight OIHW -> (kh, kw, Cin, Cout); bias stays f32 and is added before the final cast.
    w_khwio = jnp.transpose(weight, (2, 3, 1, 0))
    b_row = jnp.pad(bias.astype(jnp.float32), (0, Npad - C_out)).reshape(1, Npad)

    cb = jnp.dtype(compute_dtype).itemsize
    ob = jnp.dtype(out_dtype).itemsize
    if vmem_limit_bytes is None:
        need = (4 * Hq * Wq * Cq * cb * 2           # quadrants (double-buffered across b)
                + 9 * Cq * tn * cb * 2              # weight block
                + tn * 4 * 2                        # bias block
                + M * tn * ob * 2                   # output tile (double-buffered)
                + M * (9 * Cq * cb + 2 * tn * 4))   # in-flight patch + f32 acc
        vmem_limit_bytes = int(min(max(2 * need + (4 << 20), 32 << 20), 56 << 20))

    quad_spec = pl.BlockSpec((1, Hq, Wq, Cq), lambda b, i, n: (b, 0, 0, 0))
    out_spec = pl.BlockSpec((1, M, tn), lambda b, i, n: (b, i, n))

    def run(fused, single_buffer_consts):
        if fused:
            w_mat = w_khwio.reshape(9 * C, C_out)
            w_mat = jnp.pad(w_mat, ((0, 0), (0, Npad - C_out))).astype(compute_dtype)
            w_block, w_map = (9 * C, tn), (lambda b, i, n: (0, n))
        else:
            w_mat = jnp.pad(w_khwio,
                            ((0, 0), (0, 0), (0, Cq - C), (0, Npad - C_out)))
            w_mat = w_mat.reshape(9, Cq, Npad).astype(compute_dtype)
            w_block, w_map = (9, Cq, tn), (lambda b, i, n: (0, 0, n))

        b_map = lambda b, i, n: (0, n)
        if single_buffer_consts:
            # Constant blocks (index_map independent of the grid): no point double-buffering.
            w_spec = pl.BlockSpec(w_block, w_map, pipeline_mode=pl.Buffered(1))
            b_spec = pl.BlockSpec((1, tn), b_map, pipeline_mode=pl.Buffered(1))
        else:
            w_spec = pl.BlockSpec(w_block, w_map)
            b_spec = pl.BlockSpec((1, tn), b_map)

        out = pl.pallas_call(
            _make_kernel(th, Wo, Cq, fused),
            out_shape=jax.ShapeDtypeStruct((B, Ho_pad * Wo, Npad), out_dtype),
            grid=(B, n_rows, n_n),
            in_specs=[quad_spec] * 4 + [w_spec, b_spec],
            out_specs=out_spec,
            compiler_params=pltpu.CompilerParams(
                dimension_semantics=("parallel", "parallel", "parallel"),
                vmem_limit_bytes=vmem_limit_bytes),
        )(*quads, w_mat, b_row)
        return jax.block_until_ready(out)

    # Preferred config first; gracefully fall back if this JAX/Mosaic build rejects an
    # optional feature (single-buffered constants, unaligned minor-dim concat).
    attempts = [(fuse_pref, True), (fuse_pref, False)]
    if fuse_pref:
        attempts += [(False, True), (False, False)]
    errs = []
    for f, sb in attempts:
        try:
            out = run(f, sb)
            break
        except Exception as e:  # noqa: BLE001 - deliberate fallback chain
            errs.append(e)
    else:
        raise errs[0]

    # Free row-major H/W split, drop lane / row-tile padding, back to NCHW.
    out = out.reshape(B, Ho_pad, Wo, Npad)[:, :Ho, :, :C_out]
    return jnp.transpose(out, (0, 3, 1, 2))


def _reference_forward(x_nchw, weight, bias):
    x_pad = jnp.pad(x_nchw, ((0, 0), (0, 0), (0, 1), (0, 1)))
    out = lax.conv_general_dilated(
        x_pad, weight, window_strides=(2, 2), padding="VALID",
        dimension_numbers=("NCHW", "OIHW", "NCHW"))
    return out + bias.reshape(1, -1, 1, 1)


if __name__ == "__main__":
    B, C, H, W = 2, 4, 16, 16
    key = jax.random.PRNGKey(0)
    kx, kwt, kb = jax.random.split(key, 3)

    x = jax.random.normal(kx, (B, C, H, W), dtype=jnp.float32)

    # Deterministic Conv2d(C, C, k=3) params (PyTorch-style uniform init bounds).
    fan_in = C * 3 * 3
    bound = 1.0 / (fan_in ** 0.5)
    weight = jax.random.uniform(kwt, (C, C, 3, 3), jnp.float32, -bound, bound)
    bias = jax.random.uniform(kb, (C,), jnp.float32, -bound, bound)

    ref = _reference_forward(x, weight, bias)

    # Strict check: f32 operands (bit-tight vs the f32 reference conv).
    out_f32 = jax.block_until_ready(
        downsample_forward(x, weight, bias, compute_dtype=jnp.float32))
    assert out_f32.shape == (B, C, 8, 8), out_f32.shape
    assert jnp.allclose(out_f32, ref, atol=1e-5, rtol=1e-5), "mismatch vs reference conv (f32)"

    # Default (perf) path: bf16 MXU operands, f32 accumulation — loose tolerance vs f32 ref.
    out_bf16 = jax.block_until_ready(downsample_forward(x, weight, bias))
    assert out_bf16.shape == (B, C, 8, 8), out_bf16.shape
    max_err = float(jnp.max(jnp.abs(out_bf16 - ref)))
    assert max_err < 0.1, f"bf16-operand path deviates too much from reference: {max_err}"

    print("KERNEL_OK")
</pallas_src>

<mosaic_0001>
module attributes {stable_mosaic.version = 11 : i64} {
  func.func @kernel(%arg0: i32, %arg1: i32, %arg2: i32, %arg3: memref<1x9x9x4xf32, #tpu.memory_space<vmem>>, %arg4: memref<1x9x9x4xf32, #tpu.memory_space<vmem>>, %arg5: memref<1x9x9x4xf32, #tpu.memory_space<vmem>>, %arg6: memref<1x9x9x4xf32, #tpu.memory_space<vmem>>, %arg7: memref<36x128xf32, #tpu.memory_space<vmem>>, %arg8: memref<1x128xf32, #tpu.memory_space<vmem>>, %arg9: memref<1x64x128xf32, #tpu.memory_space<vmem>>) attributes {dimension_semantics = [#tpu.dimension_semantics<parallel>, #tpu.dimension_semantics<parallel>, #tpu.dimension_semantics<parallel>], iteration_bounds = array<i64: 2, 1, 1>, scalar_prefetch = 0 : i64, scratch_operands = 0 : i64, tpu.core_type = #tpu.core_type<tc>, window_params = [{transform_indices = @transform_0, window_bounds = array<i64: 1, 9, 9, 4>}, {transform_indices = @transform_1, window_bounds = array<i64: 1, 9, 9, 4>}, {transform_indices = @transform_2, window_bounds = array<i64: 1, 9, 9, 4>}, {transform_indices = @transform_3, window_bounds = array<i64: 1, 9, 9, 4>}, {pipeline_mode = #tpu.pipeline_mode<synchronous>, transform_indices = @transform_4, window_bounds = array<i64: 36, 128>}, {pipeline_mode = #tpu.pipeline_mode<synchronous>, transform_indices = @transform_5, window_bounds = array<i64: 1, 128>}, {transform_indices = @transform_6, window_bounds = array<i64: 1, 64, 128>}]} {
    %c8_i32 = arith.constant 8 : i32
    %0 = arith.muli %arg1, %c8_i32 : i32
    %c0_i32 = arith.constant 0 : i32
    %1 = arith.addi %0, %c0_i32 : i32
    %c0 = arith.constant 0 : index
    %2 = arith.index_cast %1 : i32 to index
    %c0_0 = arith.constant 0 : index
    %c0_1 = arith.constant 0 : index
    %3 = vector.load %arg3[%c0, %2, %c0_0, %c0_1] : memref<1x9x9x4xf32, #tpu.memory_space<vmem>>, vector<1x8x8x4xf32>
    %4 = vector.shape_cast %3 : vector<1x8x8x4xf32> to vector<8x8x4xf32>
    %c0_i32_2 = arith.constant 0 : i32
    %5 = arith.addi %0, %c0_i32_2 : i32
    %c0_3 = arith.constant 0 : index
    %6 = arith.index_cast %5 : i32 to index
    %c0_4 = arith.constant 0 : index
    %c0_5 = arith.constant 0 : index
    %7 = vector.load %arg4[%c0_3, %6, %c0_4, %c0_5] : memref<1x9x9x4xf32, #tpu.memory_space<vmem>>, vector<1x8x8x4xf32>
    %8 = vector.shape_cast %7 : vector<1x8x8x4xf32> to vector<8x8x4xf32>
    %c0_i32_6 = arith.constant 0 : i32
    %9 = arith.addi %0, %c0_i32_6 : i32
    %c0_7 = arith.constant 0 : index
    %10 = arith.index_cast %9 : i32 to index
    %c1 = arith.constant 1 : index
    %c0_8 = arith.constant 0 : index
    %11 = vector.load %arg3[%c0_7, %10, %c1, %c0_8] : memref<1x9x9x4xf32, #tpu.memory_space<vmem>>, vector<1x8x8x4xf32>
    %12 = vector.shape_cast %11 : vector<1x8x8x4xf32> to vector<8x8x4xf32>
    %c0_i32_9 = arith.constant 0 : i32
    %13 = arith.addi %0, %c0_i32_9 : i32
    %c0_10 = arith.constant 0 : index
    %14 = arith.index_cast %13 : i32 to index
    %c0_11 = arith.constant 0 : index
    %c0_12 = arith.constant 0 : index
    %15 = vector.load %arg5[%c0_10, %14, %c0_11, %c0_12] : memref<1x9x9x4xf32, #tpu.memory_space<vmem>>, vector<1x8x8x4xf32>
    %16 = vector.shape_cast %15 : vector<1x8x8x4xf32> to vector<8x8x4xf32>
    %c0_i32_13 = arith.constant 0 : i32
    %17 = arith.addi %0, %c0_i32_13 : i32
    %c0_14 = arith.constant 0 : index
    %18 = arith.index_cast %17 : i32 to index
    %c0_15 = arith.constant 0 : index
    %c0_16 = arith.constant 0 : index
    %19 = vector.load %arg6[%c0_14, %18, %c0_15, %c0_16] : memref<1x9x9x4xf32, #tpu.memory_space<vmem>>, vector<1x8x8x4xf32>
    %20 = vector.shape_cast %19 : vector<1x8x8x4xf32> to vector<8x8x4xf32>
    %c0_i32_17 = arith.constant 0 : i32
    %21 = arith.addi %0, %c0_i32_17 : i32
    %c0_18 = arith.constant 0 : index
    %22 = arith.index_cast %21 : i32 to index
    %c1_19 = arith.constant 1 : index
    %c0_20 = arith.constant 0 : index
    %23 = vector.load %arg5[%c0_18, %22, %c1_19, %c0_20] : memref<1x9x9x4xf32, #tpu.memory_space<vmem>>, vector<1x8x8x4xf32>
    %24 = vector.shape_cast %23 : vector<1x8x8x4xf32> to vector<8x8x4xf32>
    %c1_i32 = arith.constant 1 : i32
    %25 = arith.addi %0, %c1_i32 : i32
    %c0_21 = arith.constant 0 : index
    %26 = arith.index_cast %25 : i32 to index
    %c0_22 = arith.constant 0 : index
    %c0_23 = arith.constant 0 : index
    %27 = vector.load %arg3[%c0_21, %26, %c0_22, %c0_23] : memref<1x9x9x4xf32, #tpu.memory_space<vmem>>, vector<1x8x8x4xf32>
    %28 = vector.shape_cast %27 : vector<1x8x8x4xf32> to vector<8x8x4xf32>
    %c1_i32_24 = arith.constant 1 : i32
    %29 = arith.addi %0, %c1_i32_24 : i32
    %c0_25 = arith.constant 0 : index
    %30 = arith.index_cast %29 : i32 to index
    %c0_26 = arith.constant 0 : index
    %c0_27 = arith.constant 0 : index
    %31 = vector.load %arg4[%c0_25, %30, %c0_26, %c0_27] : memref<1x9x9x4xf32, #tpu.memory_space<vmem>>, vector<1x8x8x4xf32>
    %32 = vector.shape_cast %31 : vector<1x8x8x4xf32> to vector<8x8x4xf32>
    %c1_i32_28 = arith.constant 1 : i32
    %33 = arith.addi %0, %c1_i32_28 : i32
    %c0_29 = arith.constant 0 : index
    %34 = arith.index_cast %33 : i32 to index
    %c1_30 = arith.constant 1 : index
    %c0_31 = arith.constant 0 : index
    %35 = vector.load %arg3[%c0_29, %34, %c1_30, %c0_31] : memref<1x9x9x4xf32, #tpu.memory_space<vmem>>, vector<1x8x8x4xf32>
    %36 = vector.shape_cast %35 : vector<1x8x8x4xf32> to vector<8x8x4xf32>
    %37 = tpu.concatenate %4, %8, %12, %16, %20, %24, %28, %32, %36 in 2 : vector<8x8x4xf32>, vector<8x8x4xf32>, vector<8x8x4xf32>, vector<8x8x4xf32>, vector<8x8x4xf32>, vector<8x8x4xf32>, vector<8x8x4xf32>, vector<8x8x4xf32>, vector<8x8x4xf32> -> vector<8x8x36xf32>
    %38 = vector.shape_cast %37 : vector<8x8x36xf32> to vector<64x36xf32>
    %c0_32 = arith.constant 0 : index
    %c0_33 = arith.constant 0 : index
    %39 = vector.load %arg7[%c0_32, %c0_33] : memref<36x128xf32, #tpu.memory_space<vmem>>, vector<36x128xf32>
    %cst = arith.constant dense<0.000000e+00> : vector<64x128xf32>
    %40 = tpu.matmul %38, %39, %cst {dimension_numbers = #tpu.dot_dimension_numbers<[1], [0], [0], [1], [0, 0, 1, 1], [], []>} : vector<64x36xf32>, vector<36x128xf32>, vector<64x128xf32> -> vector<64x128xf32>
    %c0_34 = arith.constant 0 : index
    %c0_35 = arith.constant 0 : index
    %41 = vector.load %arg8[%c0_34, %c0_35] : memref<1x128xf32, #tpu.memory_space<vmem>>, vector<1x128xf32>
    %42 = vector.broadcast %41 : vector<1x128xf32> to vector<64x128xf32>
    %43 = arith.addf %40, %42 : vector<64x128xf32>
    %c0_36 = arith.constant 0 : index
    %c0_37 = arith.constant 0 : index
    %c0_38 = arith.constant 0 : index
    %44 = vector.load %arg9[%c0_36, %c0_37, %c0_38] : memref<1x64x128xf32, #tpu.memory_space<vmem>>, vector<1x64x128xf32>
    %45 = vector.shape_cast %44 : vector<1x64x128xf32> to vector<64x128xf32>
    %46 = vector.shape_cast %43 : vector<64x128xf32> to vector<1x64x128xf32>
    tpu.vector_store %arg9[%c0_36, %c0_37, %c0_38], %46 {strides = array<i32>} : memref<1x64x128xf32, #tpu.memory_space<vmem>>, vector<1x64x128xf32>,
    return
  }
  func.func @transform_0(%arg0: i32, %arg1: i32, %arg2: i32) -> (i32, i32, i32, i32) {
    %c0_i32 = arith.constant 0 : i32
    %c0_i32_0 = arith.constant 0 : i32
    %c0_i32_1 = arith.constant 0 : i32
    %c0_i32_2 = arith.constant 0 : i32
    return %arg0, %c0_i32, %c0_i32_0, %c0_i32_1 : i32, i32, i32, i32
  }
  func.func @transform_1(%arg0: i32, %arg1: i32, %arg2: i32) -> (i32, i32, i32, i32) {
    %c0_i32 = arith.constant 0 : i32
    %c0_i32_0 = arith.constant 0 : i32
    %c0_i32_1 = arith.constant 0 : i32
    %c0_i32_2 = arith.constant 0 : i32
    return %arg0, %c0_i32, %c0_i32_0, %c0_i32_1 : i32, i32, i32, i32
  }
  func.func @transform_2(%arg0: i32, %arg1: i32, %arg2: i32) -> (i32, i32, i32, i32) {
    %c0_i32 = arith.constant 0 : i32
    %c0_i32_0 = arith.constant 0 : i32
    %c0_i32_1 = arith.constant 0 : i32
    %c0_i32_2 = arith.constant 0 : i32
    return %arg0, %c0_i32, %c0_i32_0, %c0_i32_1 : i32, i32, i32, i32
  }
  func.func @transform_3(%arg0: i32, %arg1: i32, %arg2: i32) -> (i32, i32, i32, i32) {
    %c0_i32 = arith.constant 0 : i32
    %c0_i32_0 = arith.constant 0 : i32
    %c0_i32_1 = arith.constant 0 : i32
    %c0_i32_2 = arith.constant 0 : i32
    return %arg0, %c0_i32, %c0_i32_0, %c0_i32_1 : i32, i32, i32, i32
  }
  func.func @transform_4(%arg0: i32, %arg1: i32, %arg2: i32) -> (i32, i32) {
    %c0_i32 = arith.constant 0 : i32
    %c0_i32_0 = arith.constant 0 : i32
    return %c0_i32, %arg2 : i32, i32
  }
  func.func @transform_5(%arg0: i32, %arg1: i32, %arg2: i32) -> (i32, i32) {
    %c0_i32 = arith.constant 0 : i32
    %c0_i32_0 = arith.constant 0 : i32
    return %c0_i32, %arg2 : i32, i32
  }
  func.func @transform_6(%arg0: i32, %arg1: i32, %arg2: i32) -> (i32, i32, i32) {
    %c0_i32 = arith.constant 0 : i32
    return %arg0, %arg1, %arg2 : i32, i32, i32
  }
}

module attributes {stable_mosaic.version = 11 : i64} {
  func.func @kernel(%arg0: i32, %arg1: i32, %arg2: i32, %arg3: memref<1x9x9x4xf32, #tpu.memory_space<vmem>>, %arg4: memref<1x9x9x4xf32, #tpu.memory_space<vmem>>, %arg5: memref<1x9x9x4xf32, #tpu.memory_space<vmem>>, %arg6: memref<1x9x9x4xf32, #tpu.memory_space<vmem>>, %arg7: memref<36x128xf32, #tpu.memory_space<vmem>>, %arg8: memref<1x128xf32, #tpu.memory_space<vmem>>, %arg9: memref<1x64x128xf32, #tpu.memory_space<vmem>>) attributes {dimension_semantics = [#tpu.dimension_semantics<parallel>, #tpu.dimension_semantics<parallel>, #tpu.dimension_semantics<parallel>], iteration_bounds = array<i64: 2, 1, 1>, scalar_prefetch = 0 : i64, scratch_operands = 0 : i64, tpu.core_type = #tpu.core_type<tc>, window_params = [{transform_indices = @transform_0, window_bounds = array<i64: 1, 9, 9, 4>}, {transform_indices = @transform_1, window_bounds = array<i64: 1, 9, 9, 4>}, {transform_indices = @transform_2, window_bounds = array<i64: 1, 9, 9, 4>}, {transform_indices = @transform_3, window_bounds = array<i64: 1, 9, 9, 4>}, {transform_indices = @transform_4, window_bounds = array<i64: 36, 128>}, {transform_indices = @transform_5, window_bounds = array<i64: 1, 128>}, {transform_indices = @transform_6, window_bounds = array<i64: 1, 64, 128>}]} {
    %c8_i32 = arith.constant 8 : i32
    %0 = arith.muli %arg1, %c8_i32 : i32
    %c0_i32 = arith.constant 0 : i32
    %1 = arith.addi %0, %c0_i32 : i32
    %c0 = arith.constant 0 : index
    %2 = arith.index_cast %1 : i32 to index
    %c0_0 = arith.constant 0 : index
    %c0_1 = arith.constant 0 : index
    %3 = vector.load %arg3[%c0, %2, %c0_0, %c0_1] : memref<1x9x9x4xf32, #tpu.memory_space<vmem>>, vector<1x8x8x4xf32>
    %4 = vector.shape_cast %3 : vector<1x8x8x4xf32> to vector<8x8x4xf32>
    %c0_i32_2 = arith.constant 0 : i32
    %5 = arith.addi %0, %c0_i32_2 : i32
    %c0_3 = arith.constant 0 : index
    %6 = arith.index_cast %5 : i32 to index
    %c0_4 = arith.constant 0 : index
    %c0_5 = arith.constant 0 : index
    %7 = vector.load %arg4[%c0_3, %6, %c0_4, %c0_5] : memref<1x9x9x4xf32, #tpu.memory_space<vmem>>, vector<1x8x8x4xf32>
    %8 = vector.shape_cast %7 : vector<1x8x8x4xf32> to vector<8x8x4xf32>
    %c0_i32_6 = arith.constant 0 : i32
    %9 = arith.addi %0, %c0_i32_6 : i32
    %c0_7 = arith.constant 0 : index
    %10 = arith.index_cast %9 : i32 to index
    %c1 = arith.constant 1 : index
    %c0_8 = arith.constant 0 : index
    %11 = vector.load %arg3[%c0_7, %10, %c1, %c0_8] : memref<1x9x9x4xf32, #tpu.memory_space<vmem>>, vector<1x8x8x4xf32>
    %12 = vector.shape_cast %11 : vector<1x8x8x4xf32> to vector<8x8x4xf32>
    %c0_i32_9 = arith.constant 0 : i32
    %13 = arith.addi %0, %c0_i32_9 : i32
    %c0_10 = arith.constant 0 : index
    %14 = arith.index_cast %13 : i32 to index
    %c0_11 = arith.constant 0 : index
    %c0_12 = arith.constant 0 : index
    %15 = vector.load %arg5[%c0_10, %14, %c0_11, %c0_12] : memref<1x9x9x4xf32, #tpu.memory_space<vmem>>, vector<1x8x8x4xf32>
    %16 = vector.shape_cast %15 : vector<1x8x8x4xf32> to vector<8x8x4xf32>
    %c0_i32_13 = arith.constant 0 : i32
    %17 = arith.addi %0, %c0_i32_13 : i32
    %c0_14 = arith.constant 0 : index
    %18 = arith.index_cast %17 : i32 to index
    %c0_15 = arith.constant 0 : index
    %c0_16 = arith.constant 0 : index
    %19 = vector.load %arg6[%c0_14, %18, %c0_15, %c0_16] : memref<1x9x9x4xf32, #tpu.memory_space<vmem>>, vector<1x8x8x4xf32>
    %20 = vector.shape_cast %19 : vector<1x8x8x4xf32> to vector<8x8x4xf32>
    %c0_i32_17 = arith.constant 0 : i32
    %21 = arith.addi %0, %c0_i32_17 : i32
    %c0_18 = arith.constant 0 : index
    %22 = arith.index_cast %21 : i32 to index
    %c1_19 = arith.constant 1 : index
    %c0_20 = arith.constant 0 : index
    %23 = vector.load %arg5[%c0_18, %22, %c1_19, %c0_20] : memref<1x9x9x4xf32, #tpu.memory_space<vmem>>, vector<1x8x8x4xf32>
    %24 = vector.shape_cast %23 : vector<1x8x8x4xf32> to vector<8x8x4xf32>
    %c1_i32 = arith.constant 1 : i32
    %25 = arith.addi %0, %c1_i32 : i32
    %c0_21 = arith.constant 0 : index
    %26 = arith.index_cast %25 : i32 to index
    %c0_22 = arith.constant 0 : index
    %c0_23 = arith.constant 0 : index
    %27 = vector.load %arg3[%c0_21, %26, %c0_22, %c0_23] : memref<1x9x9x4xf32, #tpu.memory_space<vmem>>, vector<1x8x8x4xf32>
    %28 = vector.shape_cast %27 : vector<1x8x8x4xf32> to vector<8x8x4xf32>
    %c1_i32_24 = arith.constant 1 : i32
    %29 = arith.addi %0, %c1_i32_24 : i32
    %c0_25 = arith.constant 0 : index
    %30 = arith.index_cast %29 : i32 to index
    %c0_26 = arith.constant 0 : index
    %c0_27 = arith.constant 0 : index
    %31 = vector.load %arg4[%c0_25, %30, %c0_26, %c0_27] : memref<1x9x9x4xf32, #tpu.memory_space<vmem>>, vector<1x8x8x4xf32>
    %32 = vector.shape_cast %31 : vector<1x8x8x4xf32> to vector<8x8x4xf32>
    %c1_i32_28 = arith.constant 1 : i32
    %33 = arith.addi %0, %c1_i32_28 : i32
    %c0_29 = arith.constant 0 : index
    %34 = arith.index_cast %33 : i32 to index
    %c1_30 = arith.constant 1 : index
    %c0_31 = arith.constant 0 : index
    %35 = vector.load %arg3[%c0_29, %34, %c1_30, %c0_31] : memref<1x9x9x4xf32, #tpu.memory_space<vmem>>, vector<1x8x8x4xf32>
    %36 = vector.shape_cast %35 : vector<1x8x8x4xf32> to vector<8x8x4xf32>
    %37 = tpu.concatenate %4, %8, %12, %16, %20, %24, %28, %32, %36 in 2 : vector<8x8x4xf32>, vector<8x8x4xf32>, vector<8x8x4xf32>, vector<8x8x4xf32>, vector<8x8x4xf32>, vector<8x8x4xf32>, vector<8x8x4xf32>, vector<8x8x4xf32>, vector<8x8x4xf32> -> vector<8x8x36xf32>
    %38 = vector.shape_cast %37 : vector<8x8x36xf32> to vector<64x36xf32>
    %c0_32 = arith.constant 0 : index
    %c0_33 = arith.constant 0 : index
    %39 = vector.load %arg7[%c0_32, %c0_33] : memref<36x128xf32, #tpu.memory_space<vmem>>, vector<36x128xf32>
    %cst = arith.constant dense<0.000000e+00> : vector<64x128xf32>
    %40 = tpu.matmul %38, %39, %cst {dimension_numbers = #tpu.dot_dimension_numbers<[1], [0], [0], [1], [0, 0, 1, 1], [], []>} : vector<64x36xf32>, vector<36x128xf32>, vector<64x128xf32> -> vector<64x128xf32>
    %c0_34 = arith.constant 0 : index
    %c0_35 = arith.constant 0 : index
    %41 = vector.load %arg8[%c0_34, %c0_35] : memref<1x128xf32, #tpu.memory_space<vmem>>, vector<1x128xf32>
    %42 = vector.broadcast %41 : vector<1x128xf32> to vector<64x128xf32>
    %43 = arith.addf %40, %42 : vector<64x128xf32>
    %c0_36 = arith.constant 0 : index
    %c0_37 = arith.constant 0 : index
    %c0_38 = arith.constant 0 : index
    %44 = vector.load %arg9[%c0_36, %c0_37, %c0_38] : memref<1x64x128xf32, #tpu.memory_space<vmem>>, vector<1x64x128xf32>
    %45 = vector.shape_cast %44 : vector<1x64x128xf32> to vector<64x128xf32>
    %46 = vector.shape_cast %43 : vector<64x128xf32> to vector<1x64x128xf32>
    tpu.vector_store %arg9[%c0_36, %c0_37, %c0_38], %46 {strides = array<i32>} : memref<1x64x128xf32, #tpu.memory_space<vmem>>, vector<1x64x128xf32>,
    return
  }
  func.func @transform_0(%arg0: i32, %arg1: i32, %arg2: i32) -> (i32, i32, i32, i32) {
    %c0_i32 = arith.constant 0 : i32
    %c0_i32_0 = arith.constant 0 : i32
    %c0_i32_1 = arith.constant 0 : i32
    %c0_i32_2 = arith.constant 0 : i32
    return %arg0, %c0_i32, %c0_i32_0, %c0_i32_1 : i32, i32, i32, i32
  }
  func.func @transform_1(%arg0: i32, %arg1: i32, %arg2: i32) -> (i32, i32, i32, i32) {
    %c0_i32 = arith.constant 0 : i32
    %c0_i32_0 = arith.constant 0 : i32
    %c0_i32_1 = arith.constant 0 : i32
    %c0_i32_2 = arith.constant 0 : i32
    return %arg0, %c0_i32, %c0_i32_0, %c0_i32_1 : i32, i32, i32, i32
  }
  func.func @transform_2(%arg0: i32, %arg1: i32, %arg2: i32) -> (i32, i32, i32, i32) {
    %c0_i32 = arith.constant 0 : i32
    %c0_i32_0 = arith.constant 0 : i32
    %c0_i32_1 = arith.constant 0 : i32
    %c0_i32_2 = arith.constant 0 : i32
    return %arg0, %c0_i32, %c0_i32_0, %c0_i32_1 : i32, i32, i32, i32
  }
  func.func @transform_3(%arg0: i32, %arg1: i32, %arg2: i32) -> (i32, i32, i32, i32) {
    %c0_i32 = arith.constant 0 : i32
    %c0_i32_0 = arith.constant 0 : i32
    %c0_i32_1 = arith.constant 0 : i32
    %c0_i32_2 = arith.constant 0 : i32
    return %arg0, %c0_i32, %c0_i32_0, %c0_i32_1 : i32, i32, i32, i32
  }
  func.func @transform_4(%arg0: i32, %arg1: i32, %arg2: i32) -> (i32, i32) {
    %c0_i32 = arith.constant 0 : i32
    %c0_i32_0 = arith.constant 0 : i32
    return %c0_i32, %arg2 : i32, i32
  }
  func.func @transform_5(%arg0: i32, %arg1: i32, %arg2: i32) -> (i32, i32) {
    %c0_i32 = arith.constant 0 : i32
    %c0_i32_0 = arith.constant 0 : i32
    return %c0_i32, %arg2 : i32, i32
  }
  func.func @transform_6(%arg0: i32, %arg1: i32, %arg2: i32) -> (i32, i32, i32) {
    %c0_i32 = arith.constant 0 : i32
    return %arg0, %arg1, %arg2 : i32, i32, i32
  }
}

module attributes {stable_mosaic.version = 11 : i64} {
  func.func @kernel(%arg0: i32, %arg1: i32, %arg2: i32, %arg3: memref<1x9x9x4xf32, #tpu.memory_space<vmem>>, %arg4: memref<1x9x9x4xf32, #tpu.memory_space<vmem>>, %arg5: memref<1x9x9x4xf32, #tpu.memory_space<vmem>>, %arg6: memref<1x9x9x4xf32, #tpu.memory_space<vmem>>, %arg7: memref<9x4x128xf32, #tpu.memory_space<vmem>>, %arg8: memref<1x128xf32, #tpu.memory_space<vmem>>, %arg9: memref<1x64x128xf32, #tpu.memory_space<vmem>>) attributes {dimension_semantics = [#tpu.dimension_semantics<parallel>, #tpu.dimension_semantics<parallel>, #tpu.dimension_semantics<parallel>], iteration_bounds = array<i64: 2, 1, 1>, scalar_prefetch = 0 : i64, scratch_operands = 0 : i64, tpu.core_type = #tpu.core_type<tc>, window_params = [{transform_indices = @transform_0, window_bounds = array<i64: 1, 9, 9, 4>}, {transform_indices = @transform_1, window_bounds = array<i64: 1, 9, 9, 4>}, {transform_indices = @transform_2, window_bounds = array<i64: 1, 9, 9, 4>}, {transform_indices = @transform_3, window_bounds = array<i64: 1, 9, 9, 4>}, {pipeline_mode = #tpu.pipeline_mode<synchronous>, transform_indices = @transform_4, window_bounds = array<i64: 9, 4, 128>}, {pipeline_mode = #tpu.pipeline_mode<synchronous>, transform_indices = @transform_5, window_bounds = array<i64: 1, 128>}, {transform_indices = @transform_6, window_bounds = array<i64: 1, 64, 128>}]} {
    %c8_i32 = arith.constant 8 : i32
    %0 = arith.muli %arg1, %c8_i32 : i32
    %c0_i32 = arith.constant 0 : i32
    %1 = arith.addi %0, %c0_i32 : i32
    %c0 = arith.constant 0 : index
    %2 = arith.index_cast %1 : i32 to index
    %c0_0 = arith.constant 0 : index
    %c0_1 = arith.constant 0 : index
    %3 = vector.load %arg3[%c0, %2, %c0_0, %c0_1] : memref<1x9x9x4xf32, #tpu.memory_space<vmem>>, vector<1x8x8x4xf32>
    %4 = vector.shape_cast %3 : vector<1x8x8x4xf32> to vector<8x8x4xf32>
    %c0_i32_2 = arith.constant 0 : i32
    %5 = arith.addi %0, %c0_i32_2 : i32
    %c0_3 = arith.constant 0 : index
    %6 = arith.index_cast %5 : i32 to index
    %c0_4 = arith.constant 0 : index
    %c0_5 = arith.constant 0 : index
    %7 = vector.load %arg4[%c0_3, %6, %c0_4, %c0_5] : memref<1x9x9x4xf32, #tpu.memory_space<vmem>>, vector<1x8x8x4xf32>
    %8 = vector.shape_cast %7 : vector<1x8x8x4xf32> to vector<8x8x4xf32>
    %c0_i32_6 = arith.constant 0 : i32
    %9 = arith.addi %0, %c0_i32_6 : i32
    %c0_7 = arith.constant 0 : index
    %10 = arith.index_cast %9 : i32 to index
    %c1 = arith.constant 1 : index
    %c0_8 = arith.constant 0 : index
    %11 = vector.load %arg3[%c0_7, %10, %c1, %c0_8] : memref<1x9x9x4xf32, #tpu.memory_space<vmem>>, vector<1x8x8x4xf32>
    %12 = vector.shape_cast %11 : vector<1x8x8x4xf32> to vector<8x8x4xf32>
    %c0_i32_9 = arith.constant 0 : i32
    %13 = arith.addi %0, %c0_i32_9 : i32
    %c0_10 = arith.constant 0 : index
    %14 = arith.index_cast %13 : i32 to index
    %c0_11 = arith.constant 0 : index
    %c0_12 = arith.constant 0 : index
    %15 = vector.load %arg5[%c0_10, %14, %c0_11, %c0_12] : memref<1x9x9x4xf32, #tpu.memory_space<vmem>>, vector<1x8x8x4xf32>
    %16 = vector.shape_cast %15 : vector<1x8x8x4xf32> to vector<8x8x4xf32>
    %c0_i32_13 = arith.constant 0 : i32
    %17 = arith.addi %0, %c0_i32_13 : i32
    %c0_14 = arith.constant 0 : index
    %18 = arith.index_cast %17 : i32 to index
    %c0_15 = arith.constant 0 : index
    %c0_16 = arith.constant 0 : index
    %19 = vector.load %arg6[%c0_14, %18, %c0_15, %c0_16] : memref<1x9x9x4xf32, #tpu.memory_space<vmem>>, vector<1x8x8x4xf32>
    %20 = vector.shape_cast %19 : vector<1x8x8x4xf32> to vector<8x8x4xf32>
    %c0_i32_17 = arith.constant 0 : i32
    %21 = arith.addi %0, %c0_i32_17 : i32
    %c0_18 = arith.constant 0 : index
    %22 = arith.index_cast %21 : i32 to index
    %c1_19 = arith.constant 1 : index
    %c0_20 = arith.constant 0 : index
    %23 = vector.load %arg5[%c0_18, %22, %c1_19, %c0_20] : memref<1x9x9x4xf32, #tpu.memory_space<vmem>>, vector<1x8x8x4xf32>
    %24 = vector.shape_cast %23 : vector<1x8x8x4xf32> to vector<8x8x4xf32>
    %c1_i32 = arith.constant 1 : i32
    %25 = arith.addi %0, %c1_i32 : i32
    %c0_21 = arith.constant 0 : index
    %26 = arith.index_cast %25 : i32 to index
    %c0_22 = arith.constant 0 : index
    %c0_23 = arith.constant 0 : index
    %27 = vector.load %arg3[%c0_21, %26, %c0_22, %c0_23] : memref<1x9x9x4xf32, #tpu.memory_space<vmem>>, vector<1x8x8x4xf32>
    %28 = vector.shape_cast %27 : vector<1x8x8x4xf32> to vector<8x8x4xf32>
    %c1_i32_24 = arith.constant 1 : i32
    %29 = arith.addi %0, %c1_i32_24 : i32
    %c0_25 = arith.constant 0 : index
    %30 = arith.index_cast %29 : i32 to index
    %c0_26 = arith.constant 0 : index
    %c0_27 = arith.constant 0 : index
    %31 = vector.load %arg4[%c0_25, %30, %c0_26, %c0_27] : memref<1x9x9x4xf32, #tpu.memory_space<vmem>>, vector<1x8x8x4xf32>
    %32 = vector.shape_cast %31 : vector<1x8x8x4xf32> to vector<8x8x4xf32>
    %c1_i32_28 = arith.constant 1 : i32
    %33 = arith.addi %0, %c1_i32_28 : i32
    %c0_29 = arith.constant 0 : index
    %34 = arith.index_cast %33 : i32 to index
    %c1_30 = arith.constant 1 : index
    %c0_31 = arith.constant 0 : index
    %35 = vector.load %arg3[%c0_29, %34, %c1_30, %c0_31] : memref<1x9x9x4xf32, #tpu.memory_space<vmem>>, vector<1x8x8x4xf32>
    %36 = vector.shape_cast %35 : vector<1x8x8x4xf32> to vector<8x8x4xf32>
    %cst = arith.constant 0.000000e+00 : f32
    %37 = vector.broadcast %cst : f32 to vector<64x128xf32>
    %38 = vector.shape_cast %4 : vector<8x8x4xf32> to vector<64x4xf32>
    %c0_32 = arith.constant 0 : index
    %c0_33 = arith.constant 0 : index
    %c0_34 = arith.constant 0 : index
    %39 = vector.load %arg7[%c0_32, %c0_33, %c0_34] : memref<9x4x128xf32, #tpu.memory_space<vmem>>, vector<1x4x128xf32>
    %40 = vector.shape_cast %39 : vector<1x4x128xf32> to vector<4x128xf32>
    %cst_35 = arith.constant dense<0.000000e+00> : vector<64x128xf32>
    %41 = tpu.matmul %38, %40, %cst_35 {dimension_numbers = #tpu.dot_dimension_numbers<[1], [0], [0], [1], [0, 0, 1, 1], [], []>} : vector<64x4xf32>, vector<4x128xf32>, vector<64x128xf32> -> vector<64x128xf32>
    %42 = arith.addf %37, %41 : vector<64x128xf32>
    %43 = vector.shape_cast %8 : vector<8x8x4xf32> to vector<64x4xf32>
    %c1_36 = arith.constant 1 : index
    %c0_37 = arith.constant 0 : index
    %c0_38 = arith.constant 0 : index
    %44 = vector.load %arg7[%c1_36, %c0_37, %c0_38] : memref<9x4x128xf32, #tpu.memory_space<vmem>>, vector<1x4x128xf32>
    %45 = vector.shape_cast %44 : vector<1x4x128xf32> to vector<4x128xf32>
    %cst_39 = arith.constant dense<0.000000e+00> : vector<64x128xf32>
    %46 = tpu.matmul %43, %45, %cst_39 {dimension_numbers = #tpu.dot_dimension_numbers<[1], [0], [0], [1], [0, 0, 1, 1], [], []>} : vector<64x4xf32>, vector<4x128xf32>, vector<64x128xf32> -> vector<64x128xf32>
    %47 = arith.addf %42, %46 : vector<64x128xf32>
    %48 = vector.shape_cast %12 : vector<8x8x4xf32> to vector<64x4xf32>
    %c2 = arith.constant 2 : index
    %c0_40 = arith.constant 0 : index
    %c0_41 = arith.constant 0 : index
    %49 = vector.load %arg7[%c2, %c0_40, %c0_41] : memref<9x4x128xf32, #tpu.memory_space<vmem>>, vector<1x4x128xf32>
    %50 = vector.shape_cast %49 : vector<1x4x128xf32> to vector<4x128xf32>
    %cst_42 = arith.constant dense<0.000000e+00> : vector<64x128xf32>
    %51 = tpu.matmul %48, %50, %cst_42 {dimension_numbers = #tpu.dot_dimension_numbers<[1], [0], [0], [1], [0, 0, 1, 1], [], []>} : vector<64x4xf32>, vector<4x128xf32>, vector<64x128xf32> -> vector<64x128xf32>
    %52 = arith.addf %47, %51 : vector<64x128xf32>
    %53 = vector.shape_cast %16 : vector<8x8x4xf32> to vector<64x4xf32>
    %c3 = arith.constant 3 : index
    %c0_43 = arith.constant 0 : index
    %c0_44 = arith.constant 0 : index
    %54 = vector.load %arg7[%c3, %c0_43, %c0_44] : memref<9x4x128xf32, #tpu.memory_space<vmem>>, vector<1x4x128xf32>
    %55 = vector.shape_cast %54 : vector<1x4x128xf32> to vector<4x128xf32>
    %cst_45 = arith.constant dense<0.000000e+00> : vector<64x128xf32>
    %56 = tpu.matmul %53, %55, %cst_45 {dimension_numbers = #tpu.dot_dimension_numbers<[1], [0], [0], [1], [0, 0, 1, 1], [], []>} : vector<64x4xf32>, vector<4x128xf32>, vector<64x128xf32> -> vector<64x128xf32>
    %57 = arith.addf %52, %56 : vector<64x128xf32>
    %58 = vector.shape_cast %20 : vector<8x8x4xf32> to vector<64x4xf32>
    %c4 = arith.constant 4 : index
    %c0_46 = arith.constant 0 : index
    %c0_47 = arith.constant 0 : index
    %59 = vector.load %arg7[%c4, %c0_46, %c0_47] : memref<9x4x128xf32, #tpu.memory_space<vmem>>, vector<1x4x128xf32>
    %60 = vector.shape_cast %59 : vector<1x4x128xf32> to vector<4x128xf32>
    %cst_48 = arith.constant dense<0.000000e+00> : vector<64x128xf32>
    %61 = tpu.matmul %58, %60, %cst_48 {dimension_numbers = #tpu.dot_dimension_numbers<[1], [0], [0], [1], [0, 0, 1, 1], [], []>} : vector<64x4xf32>, vector<4x128xf32>, vector<64x128xf32> -> vector<64x128xf32>
    %62 = arith.addf %57, %61 : vector<64x128xf32>
    %63 = vector.shape_cast %24 : vector<8x8x4xf32> to vector<64x4xf32>
    %c5 = arith.constant 5 : index
    %c0_49 = arith.constant 0 : index
    %c0_50 = arith.constant 0 : index
    %64 = vector.load %arg7[%c5, %c0_49, %c0_50] : memref<9x4x128xf32, #tpu.memory_space<vmem>>, vector<1x4x128xf32>
    %65 = vector.shape_cast %64 : vector<1x4x128xf32> to vector<4x128xf32>
    %cst_51 = arith.constant dense<0.000000e+00> : vector<64x128xf32>
    %66 = tpu.matmul %63, %65, %cst_51 {dimension_numbers = #tpu.dot_dimension_numbers<[1], [0], [0], [1], [0, 0, 1, 1], [], []>} : vector<64x4xf32>, vector<4x128xf32>, vector<64x128xf32> -> vector<64x128xf32>
    %67 = arith.addf %62, %66 : vector<64x128xf32>
    %68 = vector.shape_cast %28 : vector<8x8x4xf32> to vector<64x4xf32>
    %c6 = arith.constant 6 : index
    %c0_52 = arith.constant 0 : index
    %c0_53 = arith.constant 0 : index
    %69 = vector.load %arg7[%c6, %c0_52, %c0_53] : memref<9x4x128xf32, #tpu.memory_space<vmem>>, vector<1x4x128xf32>
    %70 = vector.shape_cast %69 : vector<1x4x128xf32> to vector<4x128xf32>
    %cst_54 = arith.constant dense<0.000000e+00> : vector<64x128xf32>
    %71 = tpu.matmul %68, %70, %cst_54 {dimension_numbers = #tpu.dot_dimension_numbers<[1], [0], [0], [1], [0, 0, 1, 1], [], []>} : vector<64x4xf32>, vector<4x128xf32>, vector<64x128xf32> -> vector<64x128xf32>
    %72 = arith.addf %67, %71 : vector<64x128xf32>
    %73 = vector.shape_cast %32 : vector<8x8x4xf32> to vector<64x4xf32>
    %c7 = arith.constant 7 : index
    %c0_55 = arith.constant 0 : index
    %c0_56 = arith.constant 0 : index
    %74 = vector.load %arg7[%c7, %c0_55, %c0_56] : memref<9x4x128xf32, #tpu.memory_space<vmem>>, vector<1x4x128xf32>
    %75 = vector.shape_cast %74 : vector<1x4x128xf32> to vector<4x128xf32>
    %cst_57 = arith.constant dense<0.000000e+00> : vector<64x128xf32>
    %76 = tpu.matmul %73, %75, %cst_57 {dimension_numbers = #tpu.dot_dimension_numbers<[1], [0], [0], [1], [0, 0, 1, 1], [], []>} : vector<64x4xf32>, vector<4x128xf32>, vector<64x128xf32> -> vector<64x128xf32>
    %77 = arith.addf %72, %76 : vector<64x128xf32>
    %78 = vector.shape_cast %36 : vector<8x8x4xf32> to vector<64x4xf32>
    %c8 = arith.constant 8 : index
    %c0_58 = arith.constant 0 : index
    %c0_59 = arith.constant 0 : index
    %79 = vector.load %arg7[%c8, %c0_58, %c0_59] : memref<9x4x128xf32, #tpu.memory_space<vmem>>, vector<1x4x128xf32>
    %80 = vector.shape_cast %79 : vector<1x4x128xf32> to vector<4x128xf32>
    %cst_60 = arith.constant dense<0.000000e+00> : vector<64x128xf32>
    %81 = tpu.matmul %78, %80, %cst_60 {dimension_numbers = #tpu.dot_dimension_numbers<[1], [0], [0], [1], [0, 0, 1, 1], [], []>} : vector<64x4xf32>, vector<4x128xf32>, vector<64x128xf32> -> vector<64x128xf32>
    %82 = arith.addf %77, %81 : vector<64x128xf32>
    %c0_61 = arith.constant 0 : index
    %c0_62 = arith.constant 0 : index
    %83 = vector.load %arg8[%c0_61, %c0_62] : memref<1x128xf32, #tpu.memory_space<vmem>>, vector<1x128xf32>
    %84 = vector.broadcast %83 : vector<1x128xf32> to vector<64x128xf32>
    %85 = arith.addf %82, %84 : vector<64x128xf32>
    %c0_63 = arith.constant 0 : index
    %c0_64 = arith.constant 0 : index
    %c0_65 = arith.constant 0 : index
    %86 = vector.load %arg9[%c0_63, %c0_64, %c0_65] : memref<1x64x128xf32, #tpu.memory_space<vmem>>, vector<1x64x128xf32>
    %87 = vector.shape_cast %86 : vector<1x64x128xf32> to vector<64x128xf32>
    %88 = vector.shape_cast %85 : vector<64x128xf32> to vector<1x64x128xf32>
    tpu.vector_store %arg9[%c0_63, %c0_64, %c0_65], %88 {strides = array<i32>} : memref<1x64x128xf32, #tpu.memory_space<vmem>>, vector<1x64x128xf32>,
    return
  }
  func.func @transform_0(%arg0: i32, %arg1: i32, %arg2: i32) -> (i32, i32, i32, i32) {
    %c0_i32 = arith.constant 0 : i32
    %c0_i32_0 = arith.constant 0 : i32
    %c0_i32_1 = arith.constant 0 : i32
    %c0_i32_2 = arith.constant 0 : i32
    return %arg0, %c0_i32, %c0_i32_0, %c0_i32_1 : i32, i32, i32, i32
  }
  func.func @transform_1(%arg0: i32, %arg1: i32, %arg2: i32) -> (i32, i32, i32, i32) {
    %c0_i32 = arith.constant 0 : i32
    %c0_i32_0 = arith.constant 0 : i32
    %c0_i32_1 = arith.constant 0 : i32
    %c0_i32_2 = arith.constant 0 : i32
    return %arg0, %c0_i32, %c0_i32_0, %c0_i32_1 : i32, i32, i32, i32
  }
  func.func @transform_2(%arg0: i32, %arg1: i32, %arg2: i32) -> (i32, i32, i32, i32) {
    %c0_i32 = arith.constant 0 : i32
    %c0_i32_0 = arith.constant 0 : i32
    %c0_i32_1 = arith.constant 0 : i32
    %c0_i32_2 = arith.constant 0 : i32
    return %arg0, %c0_i32, %c0_i32_0, %c0_i32_1 : i32, i32, i32, i32
  }
  func.func @transform_3(%arg0: i32, %arg1: i32, %arg2: i32) -> (i32, i32, i32, i32) {
    %c0_i32 = arith.constant 0 : i32
    %c0_i32_0 = arith.constant 0 : i32
    %c0_i32_1 = arith.constant 0 : i32
    %c0_i32_2 = arith.constant 0 : i32
    return %arg0, %c0_i32, %c0_i32_0, %c0_i32_1 : i32, i32, i32, i32
  }
  func.func @transform_4(%arg0: i32, %arg1: i32, %arg2: i32) -> (i32, i32, i32) {
    %c0_i32 = arith.constant 0 : i32
    %c0_i32_0 = arith.constant 0 : i32
    %c0_i32_1 = arith.constant 0 : i32
    return %c0_i32, %c0_i32_0, %arg2 : i32, i32, i32
  }
  func.func @transform_5(%arg0: i32, %arg1: i32, %arg2: i32) -> (i32, i32) {
    %c0_i32 = arith.constant 0 : i32
    %c0_i32_0 = arith.constant 0 : i32
    return %c0_i32, %arg2 : i32, i32
  }
  func.func @transform_6(%arg0: i32, %arg1: i32, %arg2: i32) -> (i32, i32, i32) {
    %c0_i32 = arith.constant 0 : i32
    return %arg0, %arg1, %arg2 : i32, i32, i32
  }
}

module attributes {stable_mosaic.version = 11 : i64} {
  func.func @kernel(%arg0: i32, %arg1: i32, %arg2: i32, %arg3: memref<1x9x9x4xf32, #tpu.memory_space<vmem>>, %arg4: memref<1x9x9x4xf32, #tpu.memory_space<vmem>>, %arg5: memref<1x9x9x4xf32, #tpu.memory_space<vmem>>, %arg6: memref<1x9x9x4xf32, #tpu.memory_space<vmem>>, %arg7: memref<9x4x128xf32, #tpu.memory_space<vmem>>, %arg8: memref<1x128xf32, #tpu.memory_space<vmem>>, %arg9: memref<1x64x128xf32, #tpu.memory_space<vmem>>) attributes {dimension_semantics = [#tpu.dimension_semantics<parallel>, #tpu.dimension_semantics<parallel>, #tpu.dimension_semantics<parallel>], iteration_bounds = array<i64: 2, 1, 1>, scalar_prefetch = 0 : i64, scratch_operands = 0 : i64, tpu.core_type = #tpu.core_type<tc>, window_params = [{transform_indices = @transform_0, window_bounds = array<i64: 1, 9, 9, 4>}, {transform_indices = @transform_1, window_bounds = array<i64: 1, 9, 9, 4>}, {transform_indices = @transform_2, window_bounds = array<i64: 1, 9, 9, 4>}, {transform_indices = @transform_3, window_bounds = array<i64: 1, 9, 9, 4>}, {transform_indices = @transform_4, window_bounds = array<i64: 9, 4, 128>}, {transform_indices = @transform_5, window_bounds = array<i64: 1, 128>}, {transform_indices = @transform_6, window_bounds = array<i64: 1, 64, 128>}]} {
    %c8_i32 = arith.constant 8 : i32
    %0 = arith.muli %arg1, %c8_i32 : i32
    %c0_i32 = arith.constant 0 : i32
    %1 = arith.addi %0, %c0_i32 : i32
    %c0 = arith.constant 0 : index
    %2 = arith.index_cast %1 : i32 to index
    %c0_0 = arith.constant 0 : index
    %c0_1 = arith.constant 0 : index
    %3 = vector.load %arg3[%c0, %2, %c0_0, %c0_1] : memref<1x9x9x4xf32, #tpu.memory_space<vmem>>, vector<1x8x8x4xf32>
    %4 = vector.shape_cast %3 : vector<1x8x8x4xf32> to vector<8x8x4xf32>
    %c0_i32_2 = arith.constant 0 : i32
    %5 = arith.addi %0, %c0_i32_2 : i32
    %c0_3 = arith.constant 0 : index
    %6 = arith.index_cast %5 : i32 to index
    %c0_4 = arith.constant 0 : index
    %c0_5 = arith.constant 0 : index
    %7 = vector.load %arg4[%c0_3, %6, %c0_4, %c0_5] : memref<1x9x9x4xf32, #tpu.memory_space<vmem>>, vector<1x8x8x4xf32>
    %8 = vector.shape_cast %7 : vector<1x8x8x4xf32> to vector<8x8x4xf32>
    %c0_i32_6 = arith.constant 0 : i32
    %9 = arith.addi %0, %c0_i32_6 : i32
    %c0_7 = arith.constant 0 : index
    %10 = arith.index_cast %9 : i32 to index
    %c1 = arith.constant 1 : index
    %c0_8 = arith.constant 0 : index
    %11 = vector.load %arg3[%c0_7, %10, %c1, %c0_8] : memref<1x9x9x4xf32, #tpu.memory_space<vmem>>, vector<1x8x8x4xf32>
    %12 = vector.shape_cast %11 : vector<1x8x8x4xf32> to vector<8x8x4xf32>
    %c0_i32_9 = arith.constant 0 : i32
    %13 = arith.addi %0, %c0_i32_9 : i32
    %c0_10 = arith.constant 0 : index
    %14 = arith.index_cast %13 : i32 to index
    %c0_11 = arith.constant 0 : index
    %c0_12 = arith.constant 0 : index
    %15 = vector.load %arg5[%c0_10, %14, %c0_11, %c0_12] : memref<1x9x9x4xf32, #tpu.memory_space<vmem>>, vector<1x8x8x4xf32>
    %16 = vector.shape_cast %15 : vector<1x8x8x4xf32> to vector<8x8x4xf32>
    %c0_i32_13 = arith.constant 0 : i32
    %17 = arith.addi %0, %c0_i32_13 : i32
    %c0_14 = arith.constant 0 : index
    %18 = arith.index_cast %17 : i32 to index
    %c0_15 = arith.constant 0 : index
    %c0_16 = arith.constant 0 : index
    %19 = vector.load %arg6[%c0_14, %18, %c0_15, %c0_16] : memref<1x9x9x4xf32, #tpu.memory_space<vmem>>, vector<1x8x8x4xf32>
    %20 = vector.shape_cast %19 : vector<1x8x8x4xf32> to vector<8x8x4xf32>
    %c0_i32_17 = arith.constant 0 : i32
    %21 = arith.addi %0, %c0_i32_17 : i32
    %c0_18 = arith.constant 0 : index
    %22 = arith.index_cast %21 : i32 to index
    %c1_19 = arith.constant 1 : index
    %c0_20 = arith.constant 0 : index
    %23 = vector.load %arg5[%c0_18, %22, %c1_19, %c0_20] : memref<1x9x9x4xf32, #tpu.memory_space<vmem>>, vector<1x8x8x4xf32>
    %24 = vector.shape_cast %23 : vector<1x8x8x4xf32> to vector<8x8x4xf32>
    %c1_i32 = arith.constant 1 : i32
    %25 = arith.addi %0, %c1_i32 : i32
    %c0_21 = arith.constant 0 : index
    %26 = arith.index_cast %25 : i32 to index
    %c0_22 = arith.constant 0 : index
    %c0_23 = arith.constant 0 : index
    %27 = vector.load %arg3[%c0_21, %26, %c0_22, %c0_23] : memref<1x9x9x4xf32, #tpu.memory_space<vmem>>, vector<1x8x8x4xf32>
    %28 = vector.shape_cast %27 : vector<1x8x8x4xf32> to vector<8x8x4xf32>
    %c1_i32_24 = arith.constant 1 : i32
    %29 = arith.addi %0, %c1_i32_24 : i32
    %c0_25 = arith.constant 0 : index
    %30 = arith.index_cast %29 : i32 to index
    %c0_26 = arith.constant 0 : index
    %c0_27 = arith.constant 0 : index
    %31 = vector.load %arg4[%c0_25, %30, %c0_26, %c0_27] : memref<1x9x9x4xf32, #tpu.memory_space<vmem>>, vector<1x8x8x4xf32>
    %32 = vector.shape_cast %31 : vector<1x8x8x4xf32> to vector<8x8x4xf32>
    %c1_i32_28 = arith.constant 1 : i32
    %33 = arith.addi %0, %c1_i32_28 : i32
    %c0_29 = arith.constant 0 : index
    %34 = arith.index_cast %33 : i32 to index
    %c1_30 = arith.constant 1 : index
    %c0_31 = arith.constant 0 : index
    %35 = vector.load %arg3[%c0_29, %34, %c1_30, %c0_31] : memref<1x9x9x4xf32, #tpu.memory_space<vmem>>, vector<1x8x8x4xf32>
    %36 = vector.shape_cast %35 : vector<1x8x8x4xf32> to vector<8x8x4xf32>
    %cst = arith.constant 0.000000e+00 : f32
    %37 = vector.broadcast %cst : f32 to vector<64x128xf32>
    %38 = vector.shape_cast %4 : vector<8x8x4xf32> to vector<64x4xf32>
    %c0_32 = arith.constant 0 : index
    %c0_33 = arith.constant 0 : index
    %c0_34 = arith.constant 0 : index
    %39 = vector.load %arg7[%c0_32, %c0_33, %c0_34] : memref<9x4x128xf32, #tpu.memory_space<vmem>>, vector<1x4x128xf32>
    %40 = vector.shape_cast %39 : vector<1x4x128xf32> to vector<4x128xf32>
    %cst_35 = arith.constant dense<0.000000e+00> : vector<64x128xf32>
    %41 = tpu.matmul %38, %40, %cst_35 {dimension_numbers = #tpu.dot_dimension_numbers<[1], [0], [0], [1], [0, 0, 1, 1], [], []>} : vector<64x4xf32>, vector<4x128xf32>, vector<64x128xf32> -> vector<64x128xf32>
    %42 = arith.addf %37, %41 : vector<64x128xf32>
    %43 = vector.shape_cast %8 : vector<8x8x4xf32> to vector<64x4xf32>
    %c1_36 = arith.constant 1 : index
    %c0_37 = arith.constant 0 : index
    %c0_38 = arith.constant 0 : index
    %44 = vector.load %arg7[%c1_36, %c0_37, %c0_38] : memref<9x4x128xf32, #tpu.memory_space<vmem>>, vector<1x4x128xf32>
    %45 = vector.shape_cast %44 : vector<1x4x128xf32> to vector<4x128xf32>
    %cst_39 = arith.constant dense<0.000000e+00> : vector<64x128xf32>
    %46 = tpu.matmul %43, %45, %cst_39 {dimension_numbers = #tpu.dot_dimension_numbers<[1], [0], [0], [1], [0, 0, 1, 1], [], []>} : vector<64x4xf32>, vector<4x128xf32>, vector<64x128xf32> -> vector<64x128xf32>
    %47 = arith.addf %42, %46 : vector<64x128xf32>
    %48 = vector.shape_cast %12 : vector<8x8x4xf32> to vector<64x4xf32>
    %c2 = arith.constant 2 : index
    %c0_40 = arith.constant 0 : index
    %c0_41 = arith.constant 0 : index
    %49 = vector.load %arg7[%c2, %c0_40, %c0_41] : memref<9x4x128xf32, #tpu.memory_space<vmem>>, vector<1x4x128xf32>
    %50 = vector.shape_cast %49 : vector<1x4x128xf32> to vector<4x128xf32>
    %cst_42 = arith.constant dense<0.000000e+00> : vector<64x128xf32>
    %51 = tpu.matmul %48, %50, %cst_42 {dimension_numbers = #tpu.dot_dimension_numbers<[1], [0], [0], [1], [0, 0, 1, 1], [], []>} : vector<64x4xf32>, vector<4x128xf32>, vector<64x128xf32> -> vector<64x128xf32>
    %52 = arith.addf %47, %51 : vector<64x128xf32>
    %53 = vector.shape_cast %16 : vector<8x8x4xf32> to vector<64x4xf32>
    %c3 = arith.constant 3 : index
    %c0_43 = arith.constant 0 : index
    %c0_44 = arith.constant 0 : index
    %54 = vector.load %arg7[%c3, %c0_43, %c0_44] : memref<9x4x128xf32, #tpu.memory_space<vmem>>, vector<1x4x128xf32>
    %55 = vector.shape_cast %54 : vector<1x4x128xf32> to vector<4x128xf32>
    %cst_45 = arith.constant dense<0.000000e+00> : vector<64x128xf32>
    %56 = tpu.matmul %53, %55, %cst_45 {dimension_numbers = #tpu.dot_dimension_numbers<[1], [0], [0], [1], [0, 0, 1, 1], [], []>} : vector<64x4xf32>, vector<4x128xf32>, vector<64x128xf32> -> vector<64x128xf32>
    %57 = arith.addf %52, %56 : vector<64x128xf32>
    %58 = vector.shape_cast %20 : vector<8x8x4xf32> to vector<64x4xf32>
    %c4 = arith.constant 4 : index
    %c0_46 = arith.constant 0 : index
    %c0_47 = arith.constant 0 : index
    %59 = vector.load %arg7[%c4, %c0_46, %c0_47] : memref<9x4x128xf32, #tpu.memory_space<vmem>>, vector<1x4x128xf32>
    %60 = vector.shape_cast %59 : vector<1x4x128xf32> to vector<4x128xf32>
    %cst_48 = arith.constant dense<0.000000e+00> : vector<64x128xf32>
    %61 = tpu.matmul %58, %60, %cst_48 {dimension_numbers = #tpu.dot_dimension_numbers<[1], [0], [0], [1], [0, 0, 1, 1], [], []>} : vector<64x4xf32>, vector<4x128xf32>, vector<64x128xf32> -> vector<64x128xf32>
    %62 = arith.addf %57, %61 : vector<64x128xf32>
    %63 = vector.shape_cast %24 : vector<8x8x4xf32> to vector<64x4xf32>
    %c5 = arith.constant 5 : index
    %c0_49 = arith.constant 0 : index
    %c0_50 = arith.constant 0 : index
    %64 = vector.load %arg7[%c5, %c0_49, %c0_50] : memref<9x4x128xf32, #tpu.memory_space<vmem>>, vector<1x4x128xf32>
    %65 = vector.shape_cast %64 : vector<1x4x128xf32> to vector<4x128xf32>
    %cst_51 = arith.constant dense<0.000000e+00> : vector<64x128xf32>
    %66 = tpu.matmul %63, %65, %cst_51 {dimension_numbers = #tpu.dot_dimension_numbers<[1], [0], [0], [1], [0, 0, 1, 1], [], []>} : vector<64x4xf32>, vector<4x128xf32>, vector<64x128xf32> -> vector<64x128xf32>
    %67 = arith.addf %62, %66 : vector<64x128xf32>
    %68 = vector.shape_cast %28 : vector<8x8x4xf32> to vector<64x4xf32>
    %c6 = arith.constant 6 : index
    %c0_52 = arith.constant 0 : index
    %c0_53 = arith.constant 0 : index
    %69 = vector.load %arg7[%c6, %c0_52, %c0_53] : memref<9x4x128xf32, #tpu.memory_space<vmem>>, vector<1x4x128xf32>
    %70 = vector.shape_cast %69 : vector<1x4x128xf32> to vector<4x128xf32>
    %cst_54 = arith.constant dense<0.000000e+00> : vector<64x128xf32>
    %71 = tpu.matmul %68, %70, %cst_54 {dimension_numbers = #tpu.dot_dimension_numbers<[1], [0], [0], [1], [0, 0, 1, 1], [], []>} : vector<64x4xf32>, vector<4x128xf32>, vector<64x128xf32> -> vector<64x128xf32>
    %72 = arith.addf %67, %71 : vector<64x128xf32>
    %73 = vector.shape_cast %32 : vector<8x8x4xf32> to vector<64x4xf32>
    %c7 = arith.constant 7 : index
    %c0_55 = arith.constant 0 : index
    %c0_56 = arith.constant 0 : index
    %74 = vector.load %arg7[%c7, %c0_55, %c0_56] : memref<9x4x128xf32, #tpu.memory_space<vmem>>, vector<1x4x128xf32>
    %75 = vector.shape_cast %74 : vector<1x4x128xf32> to vector<4x128xf32>
    %cst_57 = arith.constant dense<0.000000e+00> : vector<64x128xf32>
    %76 = tpu.matmul %73, %75, %cst_57 {dimension_numbers = #tpu.dot_dimension_numbers<[1], [0], [0], [1], [0, 0, 1, 1], [], []>} : vector<64x4xf32>, vector<4x128xf32>, vector<64x128xf32> -> vector<64x128xf32>
    %77 = arith.addf %72, %76 : vector<64x128xf32>
    %78 = vector.shape_cast %36 : vector<8x8x4xf32> to vector<64x4xf32>
    %c8 = arith.constant 8 : index
    %c0_58 = arith.constant 0 : index
    %c0_59 = arith.constant 0 : index
    %79 = vector.load %arg7[%c8, %c0_58, %c0_59] : memref<9x4x128xf32, #tpu.memory_space<vmem>>, vector<1x4x128xf32>
    %80 = vector.shape_cast %79 : vector<1x4x128xf32> to vector<4x128xf32>
    %cst_60 = arith.constant dense<0.000000e+00> : vector<64x128xf32>
    %81 = tpu.matmul %78, %80, %cst_60 {dimension_numbers = #tpu.dot_dimension_numbers<[1], [0], [0], [1], [0, 0, 1, 1], [], []>} : vector<64x4xf32>, vector<4x128xf32>, vector<64x128xf32> -> vector<64x128xf32>
    %82 = arith.addf %77, %81 : vector<64x128xf32>
    %c0_61 = arith.constant 0 : index
    %c0_62 = arith.constant 0 : index
    %83 = vector.load %arg8[%c0_61, %c0_62] : memref<1x128xf32, #tpu.memory_space<vmem>>, vector<1x128xf32>
    %84 = vector.broadcast %83 : vector<1x128xf32> to vector<64x128xf32>
    %85 = arith.addf %82, %84 : vector<64x128xf32>
    %c0_63 = arith.constant 0 : index
    %c0_64 = arith.constant 0 : index
    %c0_65 = arith.constant 0 : index
    %86 = vector.load %arg9[%c0_63, %c0_64, %c0_65] : memref<1x64x128xf32, #tpu.memory_space<vmem>>, vector<1x64x128xf32>
    %87 = vector.shape_cast %86 : vector<1x64x128xf32> to vector<64x128xf32>
    %88 = vector.shape_cast %85 : vector<64x128xf32> to vector<1x64x128xf32>
    tpu.vector_store %arg9[%c0_63, %c0_64, %c0_65], %88 {strides = array<i32>} : memref<1x64x128xf32, #tpu.memory_space<vmem>>, vector<1x64x128xf32>,
    return
  }
  func.func @transform_0(%arg0: i32, %arg1: i32, %arg2: i32) -> (i32, i32, i32, i32) {
    %c0_i32 = arith.constant 0 : i32
    %c0_i32_0 = arith.constant 0 : i32
    %c0_i32_1 = arith.constant 0 : i32
    %c0_i32_2 = arith.constant 0 : i32
    return %arg0, %c0_i32, %c0_i32_0, %c0_i32_1 : i32, i32, i32, i32
  }
  func.func @transform_1(%arg0: i32, %arg1: i32, %arg2: i32) -> (i32, i32, i32, i32) {
    %c0_i32 = arith.constant 0 : i32
    %c0_i32_0 = arith.constant 0 : i32
    %c0_i32_1 = arith.constant 0 : i32
    %c0_i32_2 = arith.constant 0 : i32
    return %arg0, %c0_i32, %c0_i32_0, %c0_i32_1 : i32, i32, i32, i32
  }
  func.func @transform_2(%arg0: i32, %arg1: i32, %arg2: i32) -> (i32, i32, i32, i32) {
    %c0_i32 = arith.constant 0 : i32
    %c0_i32_0 = arith.constant 0 : i32
    %c0_i32_1 = arith.constant 0 : i32
    %c0_i32_2 = arith.constant 0 : i32
    return %arg0, %c0_i32, %c0_i32_0, %c0_i32_1 : i32, i32, i32, i32
  }
  func.func @transform_3(%arg0: i32, %arg1: i32, %arg2: i32) -> (i32, i32, i32, i32) {
    %c0_i32 = arith.constant 0 : i32
    %c0_i32_0 = arith.constant 0 : i32
    %c0_i32_1 = arith.constant 0 : i32
    %c0_i32_2 = arith.constant 0 : i32
    return %arg0, %c0_i32, %c0_i32_0, %c0_i32_1 : i32, i32, i32, i32
  }
  func.func @transform_4(%arg0: i32, %arg1: i32, %arg2: i32) -> (i32, i32, i32) {
    %c0_i32 = arith.constant 0 : i32
    %c0_i32_0 = arith.constant 0 : i32
    %c0_i32_1 = arith.constant 0 : i32
    return %c0_i32, %c0_i32_0, %arg2 : i32, i32, i32
  }
  func.func @transform_5(%arg0: i32, %arg1: i32, %arg2: i32) -> (i32, i32) {
    %c0_i32 = arith.constant 0 : i32
    %c0_i32_0 = arith.constant 0 : i32
    return %c0_i32, %arg2 : i32, i32
  }
  func.func @transform_6(%arg0: i32, %arg1: i32, %arg2: i32) -> (i32, i32, i32) {
    %c0_i32 = arith.constant 0 : i32
    return %arg0, %arg1, %arg2 : i32, i32, i32
  }
}

</mosaic_0001>

<llo_original>
// kernel: tpu_custom_call.1
$region0: #{tpu_custom_call.1}
  #allocation0 [shape = 'u32[]', space=smem, size = 0x4, offset = 0x4, fixed_abs, tag = 'smem constant byte address 0x4 - core index']
  #allocation1 [shape = 'u32[144,128]{1,0:T(1,128)}', space=vmem, size = 0x12000, scoped, tag = 'internal scratch']
  %s0 = inlined_call_operand.vmem [shape: f32[2,9,9,4], index: 0, kind: input, shape index: {}]
  %s1 = inlined_call_operand.vmem [shape: f32[2,9,9,4], index: 1, kind: input, shape index: {}]
  %s2 = inlined_call_operand.vmem [shape: f32[2,9,9,4], index: 2, kind: input, shape index: {}]
  %s3 = inlined_call_operand.vmem [shape: f32[2,9,9,4], index: 3, kind: input, shape index: {}]
  %s4 = inlined_call_operand.vmem [shape: f32[36,128], index: 4, kind: input, shape index: {}]
  %s5 = inlined_call_operand.vmem [shape: f32[1,128], index: 5, kind: input, shape index: {}]
  %s6 = inlined_call_operand.hbm [shape: f32[2,64,128], index: 6, kind: output, shape index: {}]
  %s7 = sld [smem:[#allocation0]]
  $region57: #{tpu_custom_call.1} parent=0
    _
  %s9 = ssub.s32 1, %s7
  %s10 = scalar_select 0, %s9, %s7
  $region1: #{tpu_custom_call.1} parent=0
    #allocation2 [shape = 'u8[65536]{0}', space=vmem, size = 0x10000, scoped, tag = 'output window, operand 0']
    #allocation3 [shape = 's32[2]{0}', space=sflag, size = 0x8, scoped, tag = 'scoped memory for tpu_custom_call.1']
    %11 = vsyncpa [#allocation3], 0
    %s12 = scalar_lea.sflag [#allocation3], 1
    %13 = vsyncpa %s12, 0
    loop: start=0, step=1, limit=4
    $region2: #{tpu_custom_call.1} parent=1 // loop_pre_header
      _
    $region3: #{tpu_custom_call.1} parent=1 // loop_header
      %s15 = sphi 0, %s19
      %p16 = scmp.ge.s32.totalorder %s15, 4
      %s22 = sphi 0, %s41
      %s23 = sphi 0, %s37
      %s24 = sphi 0, %s33
      %s25 = sphi 0, %s22
      %s26 = sphi 0, %s23
      %s27 = sphi 0, %s24
      %s28 = sphi 0, %s25
      %s29 = sphi 0, %s26
      %s30 = sphi 0, %s27
      %s44 = sphi 0, %s46
      %s47 = sphi 0, %s44
      %s48 = sphi 0, %s47
      %s64 = sphi 0, %s48
      %s70 = sphi 0, %s72
      %s73 = sphi 0, %s70
      %s74 = sphi 0, %s73
      %s90 = sphi 0, %s74
      %s96 = sphi 0, %s98
      %s99 = sphi 0, %s96
      %s100 = sphi 0, %s99
      %s116 = sphi 0, %s100
      %s122 = sphi 0, %s124
      %s125 = sphi 0, %s122
      %s126 = sphi 0, %s125
      %s142 = sphi 0, %s126
      %s148 = sphi 0, %s150
      %s151 = sphi 0, %s148
      %s152 = sphi 0, %s151
      %s168 = sphi 0, %s152
      %s174 = sphi 0, %s176
      %s177 = sphi 0, %s174
      %s178 = sphi 0, %s177
      %s194 = sphi 0, %s178
      %s204 = sphi 0, %s206
      %s207 = sphi 0, %s204
      %s208 = sphi 0, %s207
      %s224 = sphi 0, %s208
    $region4: #{tpu_custom_call.1} parent=1 // loop_header_branch
      %18 = sbr.rel (%p16) target = $region8
    $region5: #{tpu_custom_call.1} parent=1 // loop_body
      %s20 = ssub.s32 %s15, 1
      %s21 = ssub.s32 %s15, 2
      %s31 = sadd.s32 1, %s24
      %p32 = scmp.ge.s32.totalorder %s31, 1
      %s33 = scalar_select %p32, 0, %s31
      %s34 = sadd.s32 1, %s23
      %s35 = scalar_select %p32, %s34, %s23
      %p36 = scmp.ge.s32.totalorder %s35, 1
      %s37 = scalar_select %p36, 0, %s35
      %s38 = sadd.s32 1, %s22
      %s39 = scalar_select %p36, %s38, %s22
      %p40 = scmp.ge.s32.totalorder %s39, 2
      %s41 = scalar_select %p40, 0, %s39
      %s42 = ssub.s32 %s22, %s41
      %p43 = scmp.eq.s32.totalorder %s42, 0
      %s45 = sadd.s32 %s44, 1
      %s46 = scalar_select %p43, %s44, %s45
      %p49 = pneg %p43
      %p50 = scmp.eq.s32.totalorder %s15, 1
      %p51 = por %p49, %p50
      %p52 = scmp.ne.s32.totalorder %s44, %s47
      %p53 = scmp.eq.s32.totalorder %s15, 0
      %p54 = por %p52, %p53
      %p55 = scmp.ne.s32.totalorder %s44, %s47
      %p56 = scmp.eq.s32.totalorder %s20, 1
      %p57 = por %p55, %p56
      %p58 = scmp.ne.s32.totalorder %s47, %s48
      %p59 = scmp.eq.s32.totalorder %s20, 0
      %p60 = por %p58, %p59
      %p61 = scmp.ne.s32.totalorder %s47, %s48
      %p62 = scmp.eq.s32.totalorder %s21, 1
      %p63 = por %p61, %p62
      %p65 = scmp.ne.s32.totalorder %s48, %s64
      %p66 = scmp.eq.s32.totalorder %s21, 0
      %p67 = por %p65, %p66
      %s68 = ssub.s32 %s22, %s41
      %p69 = scmp.eq.s32.totalorder %s68, 0
      %s71 = sadd.s32 %s70, 1
      %s72 = scalar_select %p69, %s70, %s71
      %p75 = pneg %p69
      %p76 = scmp.eq.s32.totalorder %s15, 1
      %p77 = por %p75, %p76
      %p78 = scmp.ne.s32.totalorder %s70, %s73
      %p79 = scmp.eq.s32.totalorder %s15, 0
      %p80 = por %p78, %p79
      %p81 = scmp.ne.s32.totalorder %s70, %s73
      %p82 = scmp.eq.s32.totalorder %s20, 1
      %p83 = por %p81, %p82
      %p84 = scmp.ne.s32.totalorder %s73, %s74
      %p85 = scmp.eq.s32.totalorder %s20, 0
      %p86 = por %p84, %p85
      %p87 = scmp.ne.s32.totalorder %s73, %s74
      %p88 = scmp.eq.s32.totalorder %s21, 1
      %p89 = por %p87, %p88
      %p91 = scmp.ne.s32.totalorder %s74, %s90
      %p92 = scmp.eq.s32.totalorder %s21, 0
      %p93 = por %p91, %p92
      %s94 = ssub.s32 %s22, %s41
      %p95 = scmp.eq.s32.totalorder %s94, 0
      %s97 = sadd.s32 %s96, 1
      %s98 = scalar_select %p95, %s96, %s97
      %p101 = pneg %p95
      %p102 = scmp.eq.s32.totalorder %s15, 1
      %p103 = por %p101, %p102
      %p104 = scmp.ne.s32.totalorder %s96, %s99
      %p105 = scmp.eq.s32.totalorder %s15, 0
      %p106 = por %p104, %p105
      %p107 = scmp.ne.s32.totalorder %s96, %s99
      %p108 = scmp.eq.s32.totalorder %s20, 1
      %p109 = por %p107, %p108
      %p110 = scmp.ne.s32.totalorder %s99, %s100
      %p111 = scmp.eq.s32.totalorder %s20, 0
      %p112 = por %p110, %p111
      %p113 = scmp.ne.s32.totalorder %s99, %s100
      %p114 = scmp.eq.s32.totalorder %s21, 1
      %p115 = por %p113, %p114
      %p117 = scmp.ne.s32.totalorder %s100, %s116
      %p118 = scmp.eq.s32.totalorder %s21, 0
      %p119 = por %p117, %p118
      %s120 = ssub.s32 %s22, %s41
      %p121 = scmp.eq.s32.totalorder %s120, 0
      %s123 = sadd.s32 %s122, 1
      %s124 = scalar_select %p121, %s122, %s123
      %p127 = pneg %p121
      %p128 = scmp.eq.s32.totalorder %s15, 1
      %p129 = por %p127, %p128
      %p130 = scmp.ne.s32.totalorder %s122, %s125
      %p131 = scmp.eq.s32.totalorder %s15, 0
      %p132 = por %p130, %p131
      %p133 = scmp.ne.s32.totalorder %s122, %s125
      %p134 = scmp.eq.s32.totalorder %s20, 1
      %p135 = por %p133, %p134
      %p136 = scmp.ne.s32.totalorder %s125, %s126
      %p137 = scmp.eq.s32.totalorder %s20, 0
      %p138 = por %p136, %p137
      %p139 = scmp.ne.s32.totalorder %s125, %s126
      %p140 = scmp.eq.s32.totalorder %s21, 1
      %p141 = por %p139, %p140
      %p143 = scmp.ne.s32.totalorder %s126, %s142
      %p144 = scmp.eq.s32.totalorder %s21, 0
      %p145 = por %p143, %p144
      %s146 = ssub.s32 %s24, %s33
      %p147 = scmp.eq.s32.totalorder %s146, 0
      %s149 = sadd.s32 %s148, 1
      %s150 = scalar_select %p147, %s148, %s149
      %p153 = pneg %p147
      %p154 = scmp.eq.s32.totalorder %s15, 1
      %p155 = por %p153, %p154
      %p156 = scmp.ne.s32.totalorder %s148, %s151
      %p157 = scmp.eq.s32.totalorder %s15, 0
      %p158 = por %p156, %p157
      %p159 = scmp.ne.s32.totalorder %s148, %s151
      %p160 = scmp.eq.s32.totalorder %s20, 1
      %p161 = por %p159, %p160
      %p162 = scmp.ne.s32.totalorder %s151, %s152
      %p163 = scmp.eq.s32.totalorder %s20, 0
      %p164 = por %p162, %p163
      %p165 = scmp.ne.s32.totalorder %s151, %s152
      %p166 = scmp.eq.s32.totalorder %s21, 1
      %p167 = por %p165, %p166
      %p169 = scmp.ne.s32.totalorder %s152, %s168
      %p170 = scmp.eq.s32.totalorder %s21, 0
      %p171 = por %p169, %p170
      %s172 = ssub.s32 %s24, %s33
      %p173 = scmp.eq.s32.totalorder %s172, 0
      %s175 = sadd.s32 %s174, 1
      %s176 = scalar_select %p173, %s174, %s175
      %p179 = pneg %p173
      %p180 = scmp.eq.s32.totalorder %s15, 1
      %p181 = por %p179, %p180
      %p182 = scmp.ne.s32.totalorder %s174, %s177
      %p183 = scmp.eq.s32.totalorder %s15, 0
      %p184 = por %p182, %p183
      %p185 = scmp.ne.s32.totalorder %s174, %s177
      %p186 = scmp.eq.s32.totalorder %s20, 1
      %p187 = por %p185, %p186
      %p188 = scmp.ne.s32.totalorder %s177, %s178
      %p189 = scmp.eq.s32.totalorder %s20, 0
      %p190 = por %p188, %p189
      %p191 = scmp.ne.s32.totalorder %s177, %s178
      %p192 = scmp.eq.s32.totalorder %s21, 1
      %p193 = por %p191, %p192
      %p195 = scmp.ne.s32.totalorder %s178, %s194
      %p196 = scmp.eq.s32.totalorder %s21, 0
      %p197 = por %p195, %p196
      %s198 = ssub.s32 %s22, %s41
      %s199 = ssub.s32 %s23, %s37
      %s200 = sor.u32 %s198, %s199
      %s201 = ssub.s32 %s24, %s33
      %s202 = sor.u32 %s200, %s201
      %p203 = scmp.eq.s32.totalorder %s202, 0
      %s205 = sadd.s32 %s204, 1
      %s206 = scalar_select %p203, %s204, %s205
      %p209 = pneg %p203
      %p210 = scmp.eq.s32.totalorder %s15, 1
      %p211 = por %p209, %p210
      %p212 = scmp.ne.s32.totalorder %s204, %s207
      %p213 = scmp.eq.s32.totalorder %s15, 0
      %p214 = por %p212, %p213
      %p215 = scmp.ne.s32.totalorder %s204, %s207
      %p216 = scmp.eq.s32.totalorder %s20, 1
      %p217 = por %p215, %p216
      %p218 = scmp.ne.s32.totalorder %s207, %s208
      %p219 = scmp.eq.s32.totalorder %s20, 0
      %p220 = por %p218, %p219
      %p221 = scmp.ne.s32.totalorder %s207, %s208
      %p222 = scmp.eq.s32.totalorder %s21, 1
      %p223 = por %p221, %p222
      %p225 = scmp.ne.s32.totalorder %s208, %s224
      %p226 = scmp.eq.s32.totalorder %s21, 0
      %p227 = por %p225, %p226
      %p228 = scmp.le.s32.totalorder 1, %s15
      %p229 = scmp.lt.s32.totalorder %s15, 3
      %p230 = pnand %p228, %p229
      %p231 = pneg %p230
      // Predicated region
      $region9: #{tpu_custom_call.1} parent=5 // pred_check
        _
      $region10: #{tpu_custom_call.1} parent=5 // pred_check_branch
        %233 = sbr.rel (%p230) target = $region12
      $region11: #{tpu_custom_call.1} parent=5 // pred_region
        %s234 = ssub.s32 %s15, 1
        // Predicated region
        $region13: #{tpu_custom_call.1} parent=11 // pred_check
          %p235 = pneg %p164
        $region14: #{tpu_custom_call.1} parent=11 // pred_check_branch
          %237 = sbr.rel (%p235) target = $region16
        $region15: #{tpu_custom_call.1} parent=11 // pred_region
          %p238 = scmp.lt.s32.totalorder %s27, 0
          %s239 = scalar_select %p238, %s27, 0
          %s240 = smul.addr %s239, 8
          %s241 = scalar_lea.vmem %s4, %s240
        $region16: #{tpu_custom_call.1} parent=11 // pred_fallthru
          _
        // Predicated region
        $region17: #{tpu_custom_call.1} parent=11 // pred_check
          %p242 = pneg %p190
        $region18: #{tpu_custom_call.1} parent=11 // pred_check_branch
          %244 = sbr.rel (%p242) target = $region20
        $region19: #{tpu_custom_call.1} parent=11 // pred_region
          %p245 = scmp.lt.s32.totalorder %s27, 0
          %s246 = scalar_select %p245, %s27, 0
          %s247 = scalar_lea.vmem %s5, %s246
        $region20: #{tpu_custom_call.1} parent=11 // pred_fallthru
          _
      $region12: #{tpu_custom_call.1} parent=5 // pred_fallthru
        _
      %p248 = scmp.lt.s32.totalorder %s15, 2
      // Predicated region
      $region21: #{tpu_custom_call.1} parent=5 // pred_check
        %p249 = pneg %p248
      $region22: #{tpu_custom_call.1} parent=5 // pred_check_branch
        %251 = sbr.rel (%p249) target = $region24
      $region23: #{tpu_custom_call.1} parent=5 // pred_region
        // Predicated region
        $region25: #{tpu_custom_call.1} parent=23 // pred_check
          %p252 = pneg %p54
        $region26: #{tpu_custom_call.1} parent=23 // pred_check_branch
          %254 = sbr.rel (%p252) target = $region28
        $region27: #{tpu_custom_call.1} parent=23 // pred_region
          %p255 = scmp.lt.s32.totalorder %s22, 1
          %s256 = scalar_select %p255, %s22, 1
          %s257 = smul.addr %s256, 18
          %s258 = smul.addr %s257, 8
          %s259 = scalar_lea.vmem %s0, %s258
        $region28: #{tpu_custom_call.1} parent=23 // pred_fallthru
          _
        // Predicated region
        $region29: #{tpu_custom_call.1} parent=23 // pred_check
          %p260 = pneg %p80
        $region30: #{tpu_custom_call.1} parent=23 // pred_check_branch
          %262 = sbr.rel (%p260) target = $region32
        $region31: #{tpu_custom_call.1} parent=23 // pred_region
          %p263 = scmp.lt.s32.totalorder %s22, 1
          %s264 = scalar_select %p263, %s22, 1
          %s265 = smul.addr %s264, 18
          %s266 = smul.addr %s265, 8
          %s267 = scalar_lea.vmem %s1, %s266
        $region32: #{tpu_custom_call.1} parent=23 // pred_fallthru
          _
        // Predicated region
        $region33: #{tpu_custom_call.1} parent=23 // pred_check
          %p268 = pneg %p106
        $region34: #{tpu_custom_call.1} parent=23 // pred_check_branch
          %270 = sbr.rel (%p268) target = $region36
        $region35: #{tpu_custom_call.1} parent=23 // pred_region
          %p271 = scmp.lt.s32.totalorder %s22, 1
          %s272 = scalar_select %p271, %s22, 1
          %s273 = smul.addr %s272, 18
          %s274 = smul.addr %s273, 8
          %s275 = scalar_lea.vmem %s2, %s274
        $region36: #{tpu_custom_call.1} parent=23 // pred_fallthru
          _
        // Predicated region
        $region37: #{tpu_custom_call.1} parent=23 // pred_check
          %p276 = pneg %p132
        $region38: #{tpu_custom_call.1} parent=23 // pred_check_branch
          %278 = sbr.rel (%p276) target = $region40
        $region39: #{tpu_custom_call.1} parent=23 // pred_region
          %p279 = scmp.lt.s32.totalorder %s22, 1
          %s280 = scalar_select %p279, %s22, 1
          %s281 = smul.addr %s280, 18
          %s282 = smul.addr %s281, 8
          %s283 = scalar_lea.vmem %s3, %s282
        $region40: #{tpu_custom_call.1} parent=23 // pred_fallthru
          _
      $region24: #{tpu_custom_call.1} parent=5 // pred_fallthru
        _
      %p284 = scmp.le.s32.totalorder 1, %s15
      %p285 = scmp.lt.s32.totalorder %s15, 3
      %p286 = pnand %p284, %p285
      %p287 = pneg %p286
      // Predicated region
      $region41: #{tpu_custom_call.1} parent=5 // pred_check
        _
      $region42: #{tpu_custom_call.1} parent=5 // pred_check_branch
        %289 = sbr.rel (%p286) target = $region44
      $region43: #{tpu_custom_call.1} parent=5 // pred_region
        %s290 = ssub.s32 %s15, 1
        %p291 = scmp.lt.s32.totalorder %s25, 1
        %s292 = scalar_select %p291, %s25, 1
        %s293 = smul.addr %s292, 18
        %s294 = smul.addr %s293, 8
        %s295 = scalar_lea.vmem %s0, %s294
        %p296 = pneg %p60
        %p297 = pneg %p57
        %p298 = scmp.lt.s32.totalorder %s25, 1
        %s299 = scalar_select %p298, %s25, 1
        %s300 = smul.addr %s299, 18
        %s301 = smul.addr %s300, 8
        %s302 = scalar_lea.vmem %s1, %s301
        %p303 = pneg %p86
        %p304 = pneg %p83
        %p305 = scmp.lt.s32.totalorder %s25, 1
        %s306 = scalar_select %p305, %s25, 1
        %s307 = smul.addr %s306, 18
        %s308 = smul.addr %s307, 8
        %s309 = scalar_lea.vmem %s2, %s308
        %p310 = pneg %p112
        %p311 = pneg %p109
        %p312 = scmp.lt.s32.totalorder %s25, 1
        %s313 = scalar_select %p312, %s25, 1
        %s314 = smul.addr %s313, 18
        %s315 = smul.addr %s314, 8
        %s316 = scalar_lea.vmem %s3, %s315
        %p317 = pneg %p138
        %p318 = pneg %p135
        %p319 = scmp.lt.s32.totalorder %s27, 0
        %s320 = scalar_select %p319, %s27, 0
        %s321 = smul.addr %s320, 8
        %s322 = scalar_lea.vmem %s4, %s321
        %p323 = pneg %p164
        %p324 = pneg %p161
        %p325 = scmp.lt.s32.totalorder %s27, 0
        %s326 = scalar_select %p325, %s27, 0
        %s327 = scalar_lea.vmem %s5, %s326
        %p328 = pneg %p190
        %p329 = pneg %p187
        %p330 = pneg %p220
        %p331 = pneg %p217
        %s332 = sand.u32 %s207, 1
        %s333 = scalar_lea.sflag [#allocation3], %s332
        %s334 = sand.u32 %s207, 1
        %s335 = smul.addr %s334, 64
        %s336 = scalar_lea.vmem [#allocation2], %s335
        %p337 = scmp.lt.s32.totalorder %s25, 1
        %s338 = scalar_select %p337, %s25, 1
        %s339 = smul.addr %s338, 18
        %s340 = smul.addr %s339, 8
        %s341 = scalar_lea.vmem %s0, %s340
        %p342 = scmp.lt.s32.totalorder %s25, 1
        %s343 = scalar_select %p342, %s25, 1
        %s344 = smul.addr %s343, 18
        %s345 = smul.addr %s344, 8
        %s346 = scalar_lea.vmem %s1, %s345
        %p347 = scmp.lt.s32.totalorder %s25, 1
        %s348 = scalar_select %p347, %s25, 1
        %s349 = smul.addr %s348, 18
        %s350 = smul.addr %s349, 8
        %s351 = scalar_lea.vmem %s2, %s350
        %p352 = scmp.lt.s32.totalorder %s25, 1
        %s353 = scalar_select %p352, %s25, 1
        %s354 = smul.addr %s353, 18
        %s355 = smul.addr %s354, 8
        %s356 = scalar_lea.vmem %s3, %s355
        %p357 = scmp.lt.s32.totalorder %s27, 0
        %s358 = scalar_select %p357, %s27, 0
        %s359 = smul.addr %s358, 8
        %s360 = scalar_lea.vmem %s4, %s359
        %p361 = scmp.lt.s32.totalorder %s27, 0
        %s362 = scalar_select %p361, %s27, 0
        %s363 = scalar_lea.vmem %s5, %s362
        %s364 = smul.u32 8, %s26
        %s365 = smul.u32 %s26, 8
        %s366 = smul.u32 %s365, 16
        %s367 = scalar_lea.vmem %s341, %s366
        %v368 = vld [vmem:[%s367] sm:$0xff]
        %v369 = vld [vmem:[%s367 + $0x10] sm:$0xff]
        %v370 = vld [vmem:[%s367 + $0x20] sm:$0xff]
        %v371 = vld [vmem:[%s367 + $0x30] sm:$0xff]
        %v372 = vld [vmem:[%s367 + $0x40] sm:$0xff]
        %v373 = vld [vmem:[%s367 + $0x50] sm:$0xff]
        %v374 = vld [vmem:[%s367 + $0x60] sm:$0xff]
        %v375 = vld [vmem:[%s367 + $0x70] sm:$0xff]
        %s376 = scalar_lea.vmem %s346, %s366
        %v377 = vld [vmem:[%s376] sm:$0xff]
        %v378 = vld [vmem:[%s376 + $0x10] sm:$0xff]
        %v379 = vld [vmem:[%s376 + $0x20] sm:$0xff]
        %v380 = vld [vmem:[%s376 + $0x30] sm:$0xff]
        %v381 = vld [vmem:[%s376 + $0x40] sm:$0xff]
        %v382 = vld [vmem:[%s376 + $0x50] sm:$0xff]
        %v383 = vld [vmem:[%s376 + $0x60] sm:$0xff]
        %v384 = vld [vmem:[%s376 + $0x70] sm:$0xff]
        %v385 = vld [vmem:[%s367 + $0x1] sm:$0xff]
        %v386 = vld [vmem:[%s367 + $0x11] sm:$0xff]
        %v387 = vld [vmem:[%s367 + $0x21] sm:$0xff]
        %v388 = vld [vmem:[%s367 + $0x31] sm:$0xff]
        %v389 = vld [vmem:[%s367 + $0x41] sm:$0xff]
        %v390 = vld [vmem:[%s367 + $0x51] sm:$0xff]
        %v391 = vld [vmem:[%s367 + $0x61] sm:$0xff]
        %v392 = vld [vmem:[%s367 + $0x71] sm:$0xff]
        %s393 = scalar_lea.vmem %s351, %s366
        %v394 = vld [vmem:[%s393] sm:$0xff]
        %v395 = vld [vmem:[%s393 + $0x10] sm:$0xff]
        %v396 = vld [vmem:[%s393 + $0x20] sm:$0xff]
        %v397 = vld [vmem:[%s393 + $0x30] sm:$0xff]
        %v398 = vld [vmem:[%s393 + $0x40] sm:$0xff]
        %v399 = vld [vmem:[%s393 + $0x50] sm:$0xff]
        %v400 = vld [vmem:[%s393 + $0x60] sm:$0xff]
        %v401 = vld [vmem:[%s393 + $0x70] sm:$0xff]
        %s402 = scalar_lea.vmem %s356, %s366
        %v403 = vld [vmem:[%s402] sm:$0xff]
        %v404 = vld [vmem:[%s402 + $0x10] sm:$0xff]
        %v405 = vld [vmem:[%s402 + $0x20] sm:$0xff]
        %v406 = vld [vmem:[%s402 + $0x30] sm:$0xff]
        %v407 = vld [vmem:[%s402 + $0x40] sm:$0xff]
        %v408 = vld [vmem:[%s402 + $0x50] sm:$0xff]
        %v409 = vld [vmem:[%s402 + $0x60] sm:$0xff]
        %v410 = vld [vmem:[%s402 + $0x70] sm:$0xff]
        %v411 = vld [vmem:[%s393 + $0x1] sm:$0xff]
        %v412 = vld [vmem:[%s393 + $0x11] sm:$0xff]
        %v413 = vld [vmem:[%s393 + $0x21] sm:$0xff]
        %v414 = vld [vmem:[%s393 + $0x31] sm:$0xff]
        %v415 = vld [vmem:[%s393 + $0x41] sm:$0xff]
        %v416 = vld [vmem:[%s393 + $0x51] sm:$0xff]
        %v417 = vld [vmem:[%s393 + $0x61] sm:$0xff]
        %v418 = vld [vmem:[%s393 + $0x71] sm:$0xff]
        %s419 = sadd.s32 %s365, 1
        %s420 = smul.u32 %s419, 16
        %s421 = scalar_lea.vmem %s341, %s420
        %v422 = vld [vmem:[%s421] sm:$0xff]
        %v423 = vld [vmem:[%s421 + $0x10] sm:$0xff]
        %v424 = vld [vmem:[%s421 + $0x20] sm:$0xff]
        %v425 = vld [vmem:[%s421 + $0x30] sm:$0xff]
        %v426 = vld [vmem:[%s421 + $0x40] sm:$0xff]
        %v427 = vld [vmem:[%s421 + $0x50] sm:$0xff]
        %v428 = vld [vmem:[%s421 + $0x60] sm:$0xff]
        %v429 = vld [vmem:[%s421 + $0x70] sm:$0xff]
        %s430 = scalar_lea.vmem %s346, %s420
        %v431 = vld [vmem:[%s430] sm:$0xff]
        %v432 = vld [vmem:[%s430 + $0x10] sm:$0xff]
        %v433 = vld [vmem:[%s430 + $0x20] sm:$0xff]
        %v434 = vld [vmem:[%s430 + $0x30] sm:$0xff]
        %v435 = vld [vmem:[%s430 + $0x40] sm:$0xff]
        %v436 = vld [vmem:[%s430 + $0x50] sm:$0xff]
        %v437 = vld [vmem:[%s430 + $0x60] sm:$0xff]
        %v438 = vld [vmem:[%s430 + $0x70] sm:$0xff]
        %v439 = vld [vmem:[%s421 + $0x1] sm:$0xff]
        %v440 = vld [vmem:[%s421 + $0x11] sm:$0xff]
        %v441 = vld [vmem:[%s421 + $0x21] sm:$0xff]
        %v442 = vld [vmem:[%s421 + $0x31] sm:$0xff]
        %v443 = vld [vmem:[%s421 + $0x41] sm:$0xff]
        %v444 = vld [vmem:[%s421 + $0x51] sm:$0xff]
        %v445 = vld [vmem:[%s421 + $0x61] sm:$0xff]
        %v446 = vld [vmem:[%s421 + $0x71] sm:$0xff]
        %455 = vrot.lane.b32.xlu0 %v377, 4
        %v456 = vpop.permute.xlu0 %455
        %457 = vrot.lane.b32.xlu0 %v378, 4
        %v458 = vpop.permute.xlu0 %457
        %459 = vrot.lane.b32.xlu0 %v379, 4
        %v460 = vpop.permute.xlu0 %459
        %461 = vrot.lane.b32.xlu0 %v380, 4
        %v462 = vpop.permute.xlu0 %461
        %463 = vrot.lane.b32.xlu0 %v381, 4
        %v464 = vpop.permute.xlu0 %463
        %465 = vrot.lane.b32.xlu0 %v382, 4
        %v466 = vpop.permute.xlu0 %465
        %467 = vrot.lane.b32.xlu0 %v383, 4
        %v468 = vpop.permute.xlu0 %467
        %469 = vrot.lane.b32.xlu0 %v384, 4
        %v470 = vpop.permute.xlu0 %469
        %487 = vrot.lane.b32.xlu0 %v385, 8
        %v488 = vpop.permute.xlu0 %487
        %489 = vrot.lane.b32.xlu0 %v386, 8
        %v490 = vpop.permute.xlu0 %489
        %491 = vrot.lane.b32.xlu0 %v387, 8
        %v492 = vpop.permute.xlu0 %491
        %493 = vrot.lane.b32.xlu0 %v388, 8
        %v494 = vpop.permute.xlu0 %493
        %495 = vrot.lane.b32.xlu0 %v389, 8
        %v496 = vpop.permute.xlu0 %495
        %497 = vrot.lane.b32.xlu0 %v390, 8
        %v498 = vpop.permute.xlu0 %497
        %499 = vrot.lane.b32.xlu0 %v391, 8
        %v500 = vpop.permute.xlu0 %499
        %501 = vrot.lane.b32.xlu0 %v392, 8
        %v502 = vpop.permute.xlu0 %501
        %519 = vrot.lane.b32.xlu0 %v394, 12
        %v520 = vpop.permute.xlu0 %519
        %521 = vrot.lane.b32.xlu0 %v395, 12
        %v522 = vpop.permute.xlu0 %521
        %523 = vrot.lane.b32.xlu0 %v396, 12
        %v524 = vpop.permute.xlu0 %523
        %525 = vrot.lane.b32.xlu0 %v397, 12
        %v526 = vpop.permute.xlu0 %525
        %527 = vrot.lane.b32.xlu0 %v398, 12
        %v528 = vpop.permute.xlu0 %527
        %529 = vrot.lane.b32.xlu0 %v399, 12
        %v530 = vpop.permute.xlu0 %529
        %531 = vrot.lane.b32.xlu0 %v400, 12
        %v532 = vpop.permute.xlu0 %531
        %533 = vrot.lane.b32.xlu0 %v401, 12
        %v534 = vpop.permute.xlu0 %533
        %551 = vrot.lane.b32.xlu0 %v403, 16
        %v552 = vpop.permute.xlu0 %551
        %553 = vrot.lane.b32.xlu0 %v404, 16
        %v554 = vpop.permute.xlu0 %553
        %555 = vrot.lane.b32.xlu0 %v405, 16
        %v556 = vpop.permute.xlu0 %555
        %557 = vrot.lane.b32.xlu0 %v406, 16
        %v558 = vpop.permute.xlu0 %557
        %559 = vrot.lane.b32.xlu0 %v407, 16
        %v560 = vpop.permute.xlu0 %559
        %561 = vrot.lane.b32.xlu0 %v408, 16
        %v562 = vpop.permute.xlu0 %561
        %563 = vrot.lane.b32.xlu0 %v409, 16
        %v564 = vpop.permute.xlu0 %563
        %565 = vrot.lane.b32.xlu0 %v410, 16
        %v566 = vpop.permute.xlu0 %565
        %583 = vrot.lane.b32.xlu0 %v411, 20
        %v584 = vpop.permute.xlu0 %583
        %585 = vrot.lane.b32.xlu0 %v412, 20
        %v586 = vpop.permute.xlu0 %585
        %587 = vrot.lane.b32.xlu0 %v413, 20
        %v588 = vpop.permute.xlu0 %587
        %589 = vrot.lane.b32.xlu0 %v414, 20
        %v590 = vpop.permute.xlu0 %589
        %591 = vrot.lane.b32.xlu0 %v415, 20
        %v592 = vpop.permute.xlu0 %591
        %593 = vrot.lane.b32.xlu0 %v416, 20
        %v594 = vpop.permute.xlu0 %593
        %595 = vrot.lane.b32.xlu0 %v417, 20
        %v596 = vpop.permute.xlu0 %595
        %597 = vrot.lane.b32.xlu0 %v418, 20
        %v598 = vpop.permute.xlu0 %597
        %615 = vrot.lane.b32.xlu0 %v422, 24
        %v616 = vpop.permute.xlu0 %615
        %617 = vrot.lane.b32.xlu0 %v423, 24
        %v618 = vpop.permute.xlu0 %617
        %619 = vrot.lane.b32.xlu0 %v424, 24
        %v620 = vpop.permute.xlu0 %619
        %621 = vrot.lane.b32.xlu0 %v425, 24
        %v622 = vpop.permute.xlu0 %621
        %623 = vrot.lane.b32.xlu0 %v426, 24
        %v624 = vpop.permute.xlu0 %623
        %625 = vrot.lane.b32.xlu0 %v427, 24
        %v626 = vpop.permute.xlu0 %625
        %627 = vrot.lane.b32.xlu0 %v428, 24
        %v628 = vpop.permute.xlu0 %627
        %629 = vrot.lane.b32.xlu0 %v429, 24
        %v630 = vpop.permute.xlu0 %629
        %647 = vrot.lane.b32.xlu0 %v431, 28
        %v648 = vpop.permute.xlu0 %647
        %649 = vrot.lane.b32.xlu0 %v432, 28
        %v650 = vpop.permute.xlu0 %649
        %651 = vrot.lane.b32.xlu0 %v433, 28
        %v652 = vpop.permute.xlu0 %651
        %653 = vrot.lane.b32.xlu0 %v434, 28
        %v654 = vpop.permute.xlu0 %653
        %655 = vrot.lane.b32.xlu0 %v435, 28
        %v656 = vpop.permute.xlu0 %655
        %657 = vrot.lane.b32.xlu0 %v436, 28
        %v658 = vpop.permute.xlu0 %657
        %659 = vrot.lane.b32.xlu0 %v437, 28
        %v660 = vpop.permute.xlu0 %659
        %661 = vrot.lane.b32.xlu0 %v438, 28
        %v662 = vpop.permute.xlu0 %661
        %679 = vrot.lane.b32.xlu0 %v439, 32
        %v680 = vpop.permute.xlu0 %679
        %681 = vrot.lane.b32.xlu0 %v440, 32
        %v682 = vpop.permute.xlu0 %681
        %683 = vrot.lane.b32.xlu0 %v441, 32
        %v684 = vpop.permute.xlu0 %683
        %685 = vrot.lane.b32.xlu0 %v442, 32
        %v686 = vpop.permute.xlu0 %685
        %687 = vrot.lane.b32.xlu0 %v443, 32
        %v688 = vpop.permute.xlu0 %687
        %689 = vrot.lane.b32.xlu0 %v444, 32
        %v690 = vpop.permute.xlu0 %689
        %691 = vrot.lane.b32.xlu0 %v445, 32
        %v692 = vpop.permute.xlu0 %691
        %693 = vrot.lane.b32.xlu0 %v446, 32
        %v694 = vpop.permute.xlu0 %693
        %vm703 = vcmask 31744
        %v704 = vsel %vm703, %v368, %v456
        %v705 = vsel %vm703, %v369, %v458
        %v706 = vsel %vm703, %v370, %v460
        %v707 = vsel %vm703, %v371, %v462
        %v708 = vsel %vm703, %v372, %v464
        %v709 = vsel %vm703, %v373, %v466
        %v710 = vsel %vm703, %v374, %v468
        %v711 = vsel %vm703, %v375, %v470
        %vm712 = vcmask 64512
        %v713 = vsel %vm712, %v704, %v488
        %v714 = vsel %vm712, %v705, %v490
        %v715 = vsel %vm712, %v706, %v492
        %v716 = vsel %vm712, %v707, %v494
        %v717 = vsel %vm712, %v708, %v496
        %v718 = vsel %vm712, %v709, %v498
        %v719 = vsel %vm712, %v710, %v500
        %v720 = vsel %vm712, %v711, %v502
        %vm721 = vcmask 97280
        %v722 = vsel %vm721, %v713, %v520
        %v723 = vsel %vm721, %v714, %v522
        %v724 = vsel %vm721, %v715, %v524
        %v725 = vsel %vm721, %v716, %v526
        %v726 = vsel %vm721, %v717, %v528
        %v727 = vsel %vm721, %v718, %v530
        %v728 = vsel %vm721, %v719, %v532
        %v729 = vsel %vm721, %v720, %v534
        %vm730 = vcmask 130048
        %v731 = vsel %vm730, %v722, %v552
        %v732 = vsel %vm730, %v723, %v554
        %v733 = vsel %vm730, %v724, %v556
        %v734 = vsel %vm730, %v725, %v558
        %v735 = vsel %vm730, %v726, %v560
        %v736 = vsel %vm730, %v727, %v562
        %v737 = vsel %vm730, %v728, %v564
        %v738 = vsel %vm730, %v729, %v566
        %vm739 = vcmask 162816
        %v740 = vsel %vm739, %v731, %v584
        %v741 = vsel %vm739, %v732, %v586
        %v742 = vsel %vm739, %v733, %v588
        %v743 = vsel %vm739, %v734, %v590
        %v744 = vsel %vm739, %v735, %v592
        %v745 = vsel %vm739, %v736, %v594
        %v746 = vsel %vm739, %v737, %v596
        %v747 = vsel %vm739, %v738, %v598
        %vm748 = vcmask 195584
        %v749 = vsel %vm748, %v740, %v616
        %v750 = vsel %vm748, %v741, %v618
        %v751 = vsel %vm748, %v742, %v620
        %v752 = vsel %vm748, %v743, %v622
        %v753 = vsel %vm748, %v744, %v624
        %v754 = vsel %vm748, %v745, %v626
        %v755 = vsel %vm748, %v746, %v628
        %v756 = vsel %vm748, %v747, %v630
        %vm757 = vcmask 228352
        %v758 = vsel %vm757, %v749, %v648
        %v759 = vsel %vm757, %v750, %v650
        %v760 = vsel %vm757, %v751, %v652
        %v761 = vsel %vm757, %v752, %v654
        %v762 = vsel %vm757, %v753, %v656
        %v763 = vsel %vm757, %v754, %v658
        %v764 = vsel %vm757, %v755, %v660
        %v765 = vsel %vm757, %v756, %v662
        %vm766 = vcmask 261120
        %v767 = vsel %vm766, %v758, %v680
        %v768 = vsel %vm766, %v759, %v682
        %v769 = vsel %vm766, %v760, %v684
        %v770 = vsel %vm766, %v761, %v686
        %v771 = vsel %vm766, %v762, %v688
        %v772 = vsel %vm766, %v763, %v690
        %v773 = vsel %vm766, %v764, %v692
        %v774 = vsel %vm766, %v765, %v694
        %v775 = vld [vmem:[%s360] sm:$0xff]
        %v776 = vld [vmem:[%s360 + $0x8] sm:$0xff]
        %v777 = vld [vmem:[%s360 + $0x10] sm:$0xff]
        %v778 = vld [vmem:[%s360 + $0x18] sm:$0xff]
        %v779 = vld [vmem:[%s360 + $0x20] sm:$0xf]
        %v780 = vld [vmem:[%s363] sm:$0x1]
        %v782 = vlaneseq
        %v783 = vshrl.u32 %v782, 7
        %v784 = vsub.s32 0, %v783
        %v785 = vrot.slane %v780, %v784
        %vm787 = vcmask 293888
        %v789 = vsel %vm787, %v767, 0
        %v792 = vsel %vm787, %v768, 0
        %v795 = vsel %vm787, %v769, 0
        %v798 = vsel %vm787, %v770, 0
        %v801 = vsel %vm787, %v771, 0
        %v804 = vsel %vm787, %v772, 0
        %v807 = vsel %vm787, %v773, 0
        %v810 = vsel %vm787, %v774, 0
        %vm812 = vcmask 1043456
        %v814 = vsel %vm812, %v779, 0
        %816 = vmatprep.subr.mxu0 0.0
        %817 = vmatpush1.msra.mxu0 0.0
        %818 = vmatprep.subr.mxu0 0.0
        %819 = vmatpush1.msra.mxu0 0.0
        %820 = vmatprep.subr.mxu0 0.0
        %821 = vmatpush1.msra.mxu0 0.0
        %822 = vmatprep.subr.mxu0 0.0
        %823 = vmatpush1.msra.mxu0 0.0
        %824 = vmatprep.subr.mxu0 0.0
        %825 = vmatpush1.msra.mxu0 0.0
        %826 = vmatprep.subr.mxu0 0.0
        %827 = vmatpush1.msra.mxu0 0.0
        %828 = vmatprep.subr.mxu0 0.0
        %829 = vmatpush1.msra.mxu0 0.0
        %830 = vmatprep.subr.mxu0 0.0
        %831 = vmatpush1.msra.mxu0 0.0
        %832 = vmatprep.subr.mxu0 0.0
        %833 = vmatpush1.msra.mxu0 0.0
        %834 = vmatprep.subr.mxu0 0.0
        %835 = vmatpush1.msra.mxu0 0.0
        %836 = vmatprep.subr.mxu0 0.0
        %837 = vmatpush1.msra.mxu0 0.0
        %838 = vmatprep.subr.mxu0 0.0
        %839 = vmatpush1.msra.mxu0 %v814
        %840 = vmatprep.subr.mxu0 0.0
        %841 = vmatpush1.msra.mxu0 %v778
        %842 = vmatprep.subr.mxu0 0.0
        %843 = vmatpush1.msra.mxu0 %v777
        %844 = vmatprep.subr.mxu0 0.0
        %845 = vmatpush1.msra.mxu0 %v776
        %846 = vmatprep.subr.mxu0 0.0
        %847 = vmatpush1.msra.mxu0 %v775
        %848 = vmatprep.subr.mxu0 0.0
        %849 = vmatpush2.msra.mxu0 0.0
        %850 = vmatprep.subr.mxu0 0.0
        %851 = vmatpush2.msra.mxu0 0.0
        %852 = vmatprep.subr.mxu0 0.0
        %853 = vmatpush2.msra.mxu0 0.0
        %854 = vmatprep.subr.mxu0 0.0
        %855 = vmatpush2.msra.mxu0 0.0
        %856 = vmatprep.subr.mxu0 0.0
        %857 = vmatpush2.msra.mxu0 0.0
        %858 = vmatprep.subr.mxu0 0.0
        %859 = vmatpush2.msra.mxu0 0.0
        %860 = vmatprep.subr.mxu0 0.0
        %861 = vmatpush2.msra.mxu0 0.0
        %862 = vmatprep.subr.mxu0 0.0
        %863 = vmatpush2.msra.mxu0 0.0
        %864 = vmatprep.subr.mxu0 0.0
        %865 = vmatpush2.msra.mxu0 0.0
        %866 = vmatprep.subr.mxu0 0.0
        %867 = vmatpush2.msra.mxu0 0.0
        %868 = vmatprep.subr.mxu0 0.0
        %869 = vmatpush2.msra.mxu0 0.0
        %870 = vmatprep.subr.mxu0 0.0
        %871 = vmatpush2.msra.mxu0 0.0
        %872 = vmatprep.subr.mxu0 0.0
        %873 = vmatpush2.msra.mxu0 0.0
        %874 = vmatprep.subr.mxu0 0.0
        %875 = vmatpush2.msra.mxu0 0.0
        %876 = vmatprep.subr.mxu0 0.0
        %877 = vmatpush2.msra.mxu0 0.0
        %878 = vmatprep.subr.mxu0 0.0
        %879 = vmatpush2.msra.mxu0 0.0
        %880 = vmatprep.mubr.f32.mxu0 0.0
        %881 = vmatmul.mubr.f32.gmra.mxu0 %v789
        %v882 = vpop.f32.mrf.mxu0
        %v883 = vadd.f32 %v785, %v882
        %v884 = vpop.f32.mrf.mxu0
        %885 = vmatprep.mubr.f32.mxu0 0.0
        %886 = vmatmul.mubr.f32.gmra.mxu0 %v792
        %v887 = vpop.f32.mrf.mxu0
        %v888 = vadd.f32 %v785, %v887
        %v889 = vpop.f32.mrf.mxu0
        %890 = vmatprep.mubr.f32.mxu0 0.0
        %891 = vmatmul.mubr.f32.gmra.mxu0 %v795
        %v892 = vpop.f32.mrf.mxu0
        %v893 = vadd.f32 %v785, %v892
        %v894 = vpop.f32.mrf.mxu0
        %895 = vmatprep.mubr.f32.mxu0 0.0
        %896 = vmatmul.mubr.f32.gmra.mxu0 %v798
        %v897 = vpop.f32.mrf.mxu0
        %v898 = vadd.f32 %v785, %v897
        %v899 = vpop.f32.mrf.mxu0
        %900 = vmatprep.mubr.f32.mxu0 0.0
        %901 = vmatmul.mubr.f32.gmra.mxu0 %v801
        %v902 = vpop.f32.mrf.mxu0
        %v903 = vadd.f32 %v785, %v902
        %v904 = vpop.f32.mrf.mxu0
        %905 = vmatprep.mubr.f32.mxu0 0.0
        %906 = vmatmul.mubr.f32.gmra.mxu0 %v804
        %v907 = vpop.f32.mrf.mxu0
        %v908 = vadd.f32 %v785, %v907
        %v909 = vpop.f32.mrf.mxu0
        %910 = vmatprep.mubr.f32.mxu0 0.0
        %911 = vmatmul.mubr.f32.gmra.mxu0 %v807
        %v912 = vpop.f32.mrf.mxu0
        %v913 = vadd.f32 %v785, %v912
        %v914 = vpop.f32.mrf.mxu0
        %915 = vmatprep.mubr.f32.mxu0 0.0
        %916 = vmatmul.mubr.f32.gmra.mxu0 %v810
        %v917 = vpop.f32.mrf.mxu0
        %v918 = vadd.f32 %v785, %v917
        %v919 = vpop.f32.mrf.mxu0
        %920 = vdwg.mxu0
        %921 = vst [vmem:[%s336] sm:$0xff] %v883
        %922 = vst [vmem:[%s336 + $0x8] sm:$0xff] %v888
        %923 = vst [vmem:[%s336 + $0x10] sm:$0xff] %v893
        %924 = vst [vmem:[%s336 + $0x18] sm:$0xff] %v898
        %925 = vst [vmem:[%s336 + $0x20] sm:$0xff] %v903
        %926 = vst [vmem:[%s336 + $0x28] sm:$0xff] %v908
        %927 = vst [vmem:[%s336 + $0x30] sm:$0xff] %v913
        %928 = vst [vmem:[%s336 + $0x38] sm:$0xff] %v918
        %s929 = sand.u32 %s207, 1
        %s930 = scalar_lea.sflag [#allocation3], %s929
        %s931 = sand.u32 %s207, 1
        %s932 = smul.addr %s931, 64
        %s933 = scalar_lea.vmem [#allocation2], %s932
        // Predicated region
        $region45: #{tpu_custom_call.1} parent=43 // pred_check
          %p934 = pneg %p217
        $region46: #{tpu_custom_call.1} parent=43 // pred_check_branch
          %936 = sbr.rel (%p934) target = $region48
        $region47: #{tpu_custom_call.1} parent=43 // pred_region
          %s937 = smul.u32 8, %s26
          %s939 = ssub.s32 1024, 1024
          %940 = vsyncadd %s930, %s939
          %s941 = sadd.s32 %s27, %s937
          %s942 = smul.addr %s25, 8
          %s943 = sadd.s32 %s941, %s942
          %s944 = smul.addr %s943, 128
          %s945 = scalar_lea.hbm %s6, %s944
          %s946 = sshll.u32 %s933, 4
          %s947 = int_to_ptr.vmem [resolvable:$true] %s946
          %952 = dma.vmem_to_hbm [thread:$0]  %s947, 1024, %s945, %s930, 128, 128, 8
        $region48: #{tpu_custom_call.1} parent=43 // pred_fallthru
          _
      $region44: #{tpu_custom_call.1} parent=5 // pred_fallthru
        _
      %p953 = scmp.le.s32.totalorder 2, %s15
      // Predicated region
      $region49: #{tpu_custom_call.1} parent=5 // pred_check
        %p954 = pneg %p953
      $region50: #{tpu_custom_call.1} parent=5 // pred_check_branch
        %956 = sbr.rel (%p954) target = $region52
      $region51: #{tpu_custom_call.1} parent=5 // pred_region
        %s957 = ssub.s32 %s15, 2
        // Predicated region
        $region53: #{tpu_custom_call.1} parent=51 // pred_check
          %p958 = pneg %p223
        $region54: #{tpu_custom_call.1} parent=51 // pred_check_branch
          %960 = sbr.rel (%p958) target = $region56
        $region55: #{tpu_custom_call.1} parent=51 // pred_region
          %s961 = sand.u32 %s208, 1
          %s962 = scalar_lea.sflag [#allocation3], %s961
          %s963 = sand.u32 %s208, 1
          %s964 = smul.addr %s963, 64
          %s965 = scalar_lea.vmem [#allocation2], %s964
          %966 = dma.done %s962, 1024
        $region56: #{tpu_custom_call.1} parent=51 // pred_fallthru
          _
      $region52: #{tpu_custom_call.1} parent=5 // pred_fallthru
        _
    $region6: #{tpu_custom_call.1} parent=1 // loop_footer
      %s19 = sadd.s32 1, %s15
    $region7: #{tpu_custom_call.1} parent=1 // loop_footer_branch
      %14 = sbr.rel target = $region3
    $region8: #{tpu_custom_call.1} parent=1 // loop_exit
      _
    %967 = vsyncpa [#allocation3], 1
    %s968 = scalar_lea.sflag [#allocation3], 1
    %969 = vsyncpa %s968, 1

// kernel: tpu_custom_call.1
$region0: #{tpu_custom_call.1}
  #allocation0 [shape = 'u32[]', space=smem, size = 0x4, offset = 0x4, fixed_abs, tag = 'smem constant byte address 0x4 - core index']
  #allocation1 [shape = 'u32[144,128]{1,0:T(1,128)}', space=vmem, size = 0x12000, scoped, tag = 'internal scratch']
  %s0 = inlined_call_operand.vmem [shape: f32[2,9,9,4], index: 0, kind: input, shape index: {}]
  %s1 = inlined_call_operand.vmem [shape: f32[2,9,9,4], index: 1, kind: input, shape index: {}]
  %s2 = inlined_call_operand.vmem [shape: f32[2,9,9,4], index: 2, kind: input, shape index: {}]
  %s3 = inlined_call_operand.vmem [shape: f32[2,9,9,4], index: 3, kind: input, shape index: {}]
  %s4 = inlined_call_operand.vmem [shape: f32[36,128], index: 4, kind: input, shape index: {}]
  %s5 = inlined_call_operand.vmem [shape: f32[1,128], index: 5, kind: input, shape index: {}]
  %s6 = inlined_call_operand.hbm [shape: f32[2,64,128], index: 6, kind: output, shape index: {}]
  %s7 = sld [smem:[#allocation0]]
  $region57: #{tpu_custom_call.1} parent=0
    _
  %s9 = ssub.s32 1, %s7
  %s10 = scalar_select 0, %s9, %s7
  $region1: #{tpu_custom_call.1} parent=0
    #allocation2 [shape = 'u8[65536]{0}', space=vmem, size = 0x10000, scoped, tag = 'output window, operand 0']
    #allocation3 [shape = 's32[2]{0}', space=sflag, size = 0x8, scoped, tag = 'scoped memory for tpu_custom_call.1']
    %11 = vsyncpa [#allocation3], 0
    %s12 = scalar_lea.sflag [#allocation3], 1
    %13 = vsyncpa %s12, 0
    loop: start=0, step=1, limit=4
    $region2: #{tpu_custom_call.1} parent=1 // loop_pre_header
      _
    $region3: #{tpu_custom_call.1} parent=1 // loop_header
      %s15 = sphi 0, %s19
      %p16 = scmp.ge.s32.totalorder %s15, 4
      %s22 = sphi 0, %s41
      %s23 = sphi 0, %s37
      %s24 = sphi 0, %s33
      %s25 = sphi 0, %s22
      %s26 = sphi 0, %s23
      %s27 = sphi 0, %s24
      %s28 = sphi 0, %s25
      %s29 = sphi 0, %s26
      %s30 = sphi 0, %s27
      %s44 = sphi 0, %s46
      %s47 = sphi 0, %s44
      %s48 = sphi 0, %s47
      %s64 = sphi 0, %s48
      %s70 = sphi 0, %s72
      %s73 = sphi 0, %s70
      %s74 = sphi 0, %s73
      %s90 = sphi 0, %s74
      %s96 = sphi 0, %s98
      %s99 = sphi 0, %s96
      %s100 = sphi 0, %s99
      %s116 = sphi 0, %s100
      %s122 = sphi 0, %s124
      %s125 = sphi 0, %s122
      %s126 = sphi 0, %s125
      %s142 = sphi 0, %s126
      %s148 = sphi 0, %s150
      %s151 = sphi 0, %s148
      %s152 = sphi 0, %s151
      %s168 = sphi 0, %s152
      %s174 = sphi 0, %s176
      %s177 = sphi 0, %s174
      %s178 = sphi 0, %s177
      %s194 = sphi 0, %s178
      %s204 = sphi 0, %s206
      %s207 = sphi 0, %s204
      %s208 = sphi 0, %s207
      %s224 = sphi 0, %s208
    $region4: #{tpu_custom_call.1} parent=1 // loop_header_branch
      %18 = sbr.rel (%p16) target = $region8
    $region5: #{tpu_custom_call.1} parent=1 // loop_body
      %s20 = ssub.s32 %s15, 1
      %s21 = ssub.s32 %s15, 2
      %s31 = sadd.s32 1, %s24
      %p32 = scmp.ge.s32.totalorder %s31, 1
      %s33 = scalar_select %p32, 0, %s31
      %s34 = sadd.s32 1, %s23
      %s35 = scalar_select %p32, %s34, %s23
      %p36 = scmp.ge.s32.totalorder %s35, 1
      %s37 = scalar_select %p36, 0, %s35
      %s38 = sadd.s32 1, %s22
      %s39 = scalar_select %p36, %s38, %s22
      %p40 = scmp.ge.s32.totalorder %s39, 2
      %s41 = scalar_select %p40, 0, %s39
      %s42 = ssub.s32 %s22, %s41
      %p43 = scmp.eq.s32.totalorder %s42, 0
      %s45 = sadd.s32 %s44, 1
      %s46 = scalar_select %p43, %s44, %s45
      %p49 = pneg %p43
      %p50 = scmp.eq.s32.totalorder %s15, 1
      %p51 = por %p49, %p50
      %p52 = scmp.ne.s32.totalorder %s44, %s47
      %p53 = scmp.eq.s32.totalorder %s15, 0
      %p54 = por %p52, %p53
      %p55 = scmp.ne.s32.totalorder %s44, %s47
      %p56 = scmp.eq.s32.totalorder %s20, 1
      %p57 = por %p55, %p56
      %p58 = scmp.ne.s32.totalorder %s47, %s48
      %p59 = scmp.eq.s32.totalorder %s20, 0
      %p60 = por %p58, %p59
      %p61 = scmp.ne.s32.totalorder %s47, %s48
      %p62 = scmp.eq.s32.totalorder %s21, 1
      %p63 = por %p61, %p62
      %p65 = scmp.ne.s32.totalorder %s48, %s64
      %p66 = scmp.eq.s32.totalorder %s21, 0
      %p67 = por %p65, %p66
      %s68 = ssub.s32 %s22, %s41
      %p69 = scmp.eq.s32.totalorder %s68, 0
      %s71 = sadd.s32 %s70, 1
      %s72 = scalar_select %p69, %s70, %s71
      %p75 = pneg %p69
      %p76 = scmp.eq.s32.totalorder %s15, 1
      %p77 = por %p75, %p76
      %p78 = scmp.ne.s32.totalorder %s70, %s73
      %p79 = scmp.eq.s32.totalorder %s15, 0
      %p80 = por %p78, %p79
      %p81 = scmp.ne.s32.totalorder %s70, %s73
      %p82 = scmp.eq.s32.totalorder %s20, 1
      %p83 = por %p81, %p82
      %p84 = scmp.ne.s32.totalorder %s73, %s74
      %p85 = scmp.eq.s32.totalorder %s20, 0
      %p86 = por %p84, %p85
      %p87 = scmp.ne.s32.totalorder %s73, %s74
      %p88 = scmp.eq.s32.totalorder %s21, 1
      %p89 = por %p87, %p88
      %p91 = scmp.ne.s32.totalorder %s74, %s90
      %p92 = scmp.eq.s32.totalorder %s21, 0
      %p93 = por %p91, %p92
      %s94 = ssub.s32 %s22, %s41
      %p95 = scmp.eq.s32.totalorder %s94, 0
      %s97 = sadd.s32 %s96, 1
      %s98 = scalar_select %p95, %s96, %s97
      %p101 = pneg %p95
      %p102 = scmp.eq.s32.totalorder %s15, 1
      %p103 = por %p101, %p102
      %p104 = scmp.ne.s32.totalorder %s96, %s99
      %p105 = scmp.eq.s32.totalorder %s15, 0
      %p106 = por %p104, %p105
      %p107 = scmp.ne.s32.totalorder %s96, %s99
      %p108 = scmp.eq.s32.totalorder %s20, 1
      %p109 = por %p107, %p108
      %p110 = scmp.ne.s32.totalorder %s99, %s100
      %p111 = scmp.eq.s32.totalorder %s20, 0
      %p112 = por %p110, %p111
      %p113 = scmp.ne.s32.totalorder %s99, %s100
      %p114 = scmp.eq.s32.totalorder %s21, 1
      %p115 = por %p113, %p114
      %p117 = scmp.ne.s32.totalorder %s100, %s116
      %p118 = scmp.eq.s32.totalorder %s21, 0
      %p119 = por %p117, %p118
      %s120 = ssub.s32 %s22, %s41
      %p121 = scmp.eq.s32.totalorder %s120, 0
      %s123 = sadd.s32 %s122, 1
      %s124 = scalar_select %p121, %s122, %s123
      %p127 = pneg %p121
      %p128 = scmp.eq.s32.totalorder %s15, 1
      %p129 = por %p127, %p128
      %p130 = scmp.ne.s32.totalorder %s122, %s125
      %p131 = scmp.eq.s32.totalorder %s15, 0
      %p132 = por %p130, %p131
      %p133 = scmp.ne.s32.totalorder %s122, %s125
      %p134 = scmp.eq.s32.totalorder %s20, 1
      %p135 = por %p133, %p134
      %p136 = scmp.ne.s32.totalorder %s125, %s126
      %p137 = scmp.eq.s32.totalorder %s20, 0
      %p138 = por %p136, %p137
      %p139 = scmp.ne.s32.totalorder %s125, %s126
      %p140 = scmp.eq.s32.totalorder %s21, 1
      %p141 = por %p139, %p140
      %p143 = scmp.ne.s32.totalorder %s126, %s142
      %p144 = scmp.eq.s32.totalorder %s21, 0
      %p145 = por %p143, %p144
      %s146 = ssub.s32 %s24, %s33
      %p147 = scmp.eq.s32.totalorder %s146, 0
      %s149 = sadd.s32 %s148, 1
      %s150 = scalar_select %p147, %s148, %s149
      %p153 = pneg %p147
      %p154 = scmp.eq.s32.totalorder %s15, 1
      %p155 = por %p153, %p154
      %p156 = scmp.ne.s32.totalorder %s148, %s151
      %p157 = scmp.eq.s32.totalorder %s15, 0
      %p158 = por %p156, %p157
      %p159 = scmp.ne.s32.totalorder %s148, %s151
      %p160 = scmp.eq.s32.totalorder %s20, 1
      %p161 = por %p159, %p160
      %p162 = scmp.ne.s32.totalorder %s151, %s152
      %p163 = scmp.eq.s32.totalorder %s20, 0
      %p164 = por %p162, %p163
      %p165 = scmp.ne.s32.totalorder %s151, %s152
      %p166 = scmp.eq.s32.totalorder %s21, 1
      %p167 = por %p165, %p166
      %p169 = scmp.ne.s32.totalorder %s152, %s168
      %p170 = scmp.eq.s32.totalorder %s21, 0
      %p171 = por %p169, %p170
      %s172 = ssub.s32 %s24, %s33
      %p173 = scmp.eq.s32.totalorder %s172, 0
      %s175 = sadd.s32 %s174, 1
      %s176 = scalar_select %p173, %s174, %s175
      %p179 = pneg %p173
      %p180 = scmp.eq.s32.totalorder %s15, 1
      %p181 = por %p179, %p180
      %p182 = scmp.ne.s32.totalorder %s174, %s177
      %p183 = scmp.eq.s32.totalorder %s15, 0
      %p184 = por %p182, %p183
      %p185 = scmp.ne.s32.totalorder %s174, %s177
      %p186 = scmp.eq.s32.totalorder %s20, 1
      %p187 = por %p185, %p186
      %p188 = scmp.ne.s32.totalorder %s177, %s178
      %p189 = scmp.eq.s32.totalorder %s20, 0
      %p190 = por %p188, %p189
      %p191 = scmp.ne.s32.totalorder %s177, %s178
      %p192 = scmp.eq.s32.totalorder %s21, 1
      %p193 = por %p191, %p192
      %p195 = scmp.ne.s32.totalorder %s178, %s194
      %p196 = scmp.eq.s32.totalorder %s21, 0
      %p197 = por %p195, %p196
      %s198 = ssub.s32 %s22, %s41
      %s199 = ssub.s32 %s23, %s37
      %s200 = sor.u32 %s198, %s199
      %s201 = ssub.s32 %s24, %s33
      %s202 = sor.u32 %s200, %s201
      %p203 = scmp.eq.s32.totalorder %s202, 0
      %s205 = sadd.s32 %s204, 1
      %s206 = scalar_select %p203, %s204, %s205
      %p209 = pneg %p203
      %p210 = scmp.eq.s32.totalorder %s15, 1
      %p211 = por %p209, %p210
      %p212 = scmp.ne.s32.totalorder %s204, %s207
      %p213 = scmp.eq.s32.totalorder %s15, 0
      %p214 = por %p212, %p213
      %p215 = scmp.ne.s32.totalorder %s204, %s207
      %p216 = scmp.eq.s32.totalorder %s20, 1
      %p217 = por %p215, %p216
      %p218 = scmp.ne.s32.totalorder %s207, %s208
      %p219 = scmp.eq.s32.totalorder %s20, 0
      %p220 = por %p218, %p219
      %p221 = scmp.ne.s32.totalorder %s207, %s208
      %p222 = scmp.eq.s32.totalorder %s21, 1
      %p223 = por %p221, %p222
      %p225 = scmp.ne.s32.totalorder %s208, %s224
      %p226 = scmp.eq.s32.totalorder %s21, 0
      %p227 = por %p225, %p226
      %p228 = scmp.le.s32.totalorder 1, %s15
      %p229 = scmp.lt.s32.totalorder %s15, 3
      %p230 = pnand %p228, %p229
      %p231 = pneg %p230
      // Predicated region
      $region9: #{tpu_custom_call.1} parent=5 // pred_check
        _
      $region10: #{tpu_custom_call.1} parent=5 // pred_check_branch
        %233 = sbr.rel (%p230) target = $region12
      $region11: #{tpu_custom_call.1} parent=5 // pred_region
        %s234 = ssub.s32 %s15, 1
        // Predicated region
        $region13: #{tpu_custom_call.1} parent=11 // pred_check
          %p235 = pneg %p164
        $region14: #{tpu_custom_call.1} parent=11 // pred_check_branch
          %237 = sbr.rel (%p235) target = $region16
        $region15: #{tpu_custom_call.1} parent=11 // pred_region
          %p238 = scmp.lt.s32.totalorder %s27, 0
          %s239 = scalar_select %p238, %s27, 0
          %s240 = smul.addr %s239, 8
          %s241 = scalar_lea.vmem %s4, %s240
        $region16: #{tpu_custom_call.1} parent=11 // pred_fallthru
          _
        // Predicated region
        $region17: #{tpu_custom_call.1} parent=11 // pred_check
          %p242 = pneg %p190
        $region18: #{tpu_custom_call.1} parent=11 // pred_check_branch
          %244 = sbr.rel (%p242) target = $region20
        $region19: #{tpu_custom_call.1} parent=11 // pred_region
          %p245 = scmp.lt.s32.totalorder %s27, 0
          %s246 = scalar_select %p245, %s27, 0
          %s247 = scalar_lea.vmem %s5, %s246
        $region20: #{tpu_custom_call.1} parent=11 // pred_fallthru
          _
      $region12: #{tpu_custom_call.1} parent=5 // pred_fallthru
        _
      %p248 = scmp.lt.s32.totalorder %s15, 2
      // Predicated region
      $region21: #{tpu_custom_call.1} parent=5 // pred_check
        %p249 = pneg %p248
      $region22: #{tpu_custom_call.1} parent=5 // pred_check_branch
        %251 = sbr.rel (%p249) target = $region24
      $region23: #{tpu_custom_call.1} parent=5 // pred_region
        // Predicated region
        $region25: #{tpu_custom_call.1} parent=23 // pred_check
          %p252 = pneg %p54
        $region26: #{tpu_custom_call.1} parent=23 // pred_check_branch
          %254 = sbr.rel (%p252) target = $region28
        $region27: #{tpu_custom_call.1} parent=23 // pred_region
          %p255 = scmp.lt.s32.totalorder %s22, 1
          %s256 = scalar_select %p255, %s22, 1
          %s257 = smul.addr %s256, 18
          %s258 = smul.addr %s257, 8
          %s259 = scalar_lea.vmem %s0, %s258
        $region28: #{tpu_custom_call.1} parent=23 // pred_fallthru
          _
        // Predicated region
        $region29: #{tpu_custom_call.1} parent=23 // pred_check
          %p260 = pneg %p80
        $region30: #{tpu_custom_call.1} parent=23 // pred_check_branch
          %262 = sbr.rel (%p260) target = $region32
        $region31: #{tpu_custom_call.1} parent=23 // pred_region
          %p263 = scmp.lt.s32.totalorder %s22, 1
          %s264 = scalar_select %p263, %s22, 1
          %s265 = smul.addr %s264, 18
          %s266 = smul.addr %s265, 8
          %s267 = scalar_lea.vmem %s1, %s266
        $region32: #{tpu_custom_call.1} parent=23 // pred_fallthru
          _
        // Predicated region
        $region33: #{tpu_custom_call.1} parent=23 // pred_check
          %p268 = pneg %p106
        $region34: #{tpu_custom_call.1} parent=23 // pred_check_branch
          %270 = sbr.rel (%p268) target = $region36
        $region35: #{tpu_custom_call.1} parent=23 // pred_region
          %p271 = scmp.lt.s32.totalorder %s22, 1
          %s272 = scalar_select %p271, %s22, 1
          %s273 = smul.addr %s272, 18
          %s274 = smul.addr %s273, 8
          %s275 = scalar_lea.vmem %s2, %s274
        $region36: #{tpu_custom_call.1} parent=23 // pred_fallthru
          _
        // Predicated region
        $region37: #{tpu_custom_call.1} parent=23 // pred_check
          %p276 = pneg %p132
        $region38: #{tpu_custom_call.1} parent=23 // pred_check_branch
          %278 = sbr.rel (%p276) target = $region40
        $region39: #{tpu_custom_call.1} parent=23 // pred_region
          %p279 = scmp.lt.s32.totalorder %s22, 1
          %s280 = scalar_select %p279, %s22, 1
          %s281 = smul.addr %s280, 18
          %s282 = smul.addr %s281, 8
          %s283 = scalar_lea.vmem %s3, %s282
        $region40: #{tpu_custom_call.1} parent=23 // pred_fallthru
          _
      $region24: #{tpu_custom_call.1} parent=5 // pred_fallthru
        _
      %p284 = scmp.le.s32.totalorder 1, %s15
      %p285 = scmp.lt.s32.totalorder %s15, 3
      %p286 = pnand %p284, %p285
      %p287 = pneg %p286
      // Predicated region
      $region41: #{tpu_custom_call.1} parent=5 // pred_check
        _
      $region42: #{tpu_custom_call.1} parent=5 // pred_check_branch
        %289 = sbr.rel (%p286) target = $region44
      $region43: #{tpu_custom_call.1} parent=5 // pred_region
        %s290 = ssub.s32 %s15, 1
        %p291 = scmp.lt.s32.totalorder %s25, 1
        %s292 = scalar_select %p291, %s25, 1
        %s293 = smul.addr %s292, 18
        %s294 = smul.addr %s293, 8
        %s295 = scalar_lea.vmem %s0, %s294
        %p296 = pneg %p60
        %p297 = pneg %p57
        %p298 = scmp.lt.s32.totalorder %s25, 1
        %s299 = scalar_select %p298, %s25, 1
        %s300 = smul.addr %s299, 18
        %s301 = smul.addr %s300, 8
        %s302 = scalar_lea.vmem %s1, %s301
        %p303 = pneg %p86
        %p304 = pneg %p83
        %p305 = scmp.lt.s32.totalorder %s25, 1
        %s306 = scalar_select %p305, %s25, 1
        %s307 = smul.addr %s306, 18
        %s308 = smul.addr %s307, 8
        %s309 = scalar_lea.vmem %s2, %s308
        %p310 = pneg %p112
        %p311 = pneg %p109
        %p312 = scmp.lt.s32.totalorder %s25, 1
        %s313 = scalar_select %p312, %s25, 1
        %s314 = smul.addr %s313, 18
        %s315 = smul.addr %s314, 8
        %s316 = scalar_lea.vmem %s3, %s315
        %p317 = pneg %p138
        %p318 = pneg %p135
        %p319 = scmp.lt.s32.totalorder %s27, 0
        %s320 = scalar_select %p319, %s27, 0
        %s321 = smul.addr %s320, 8
        %s322 = scalar_lea.vmem %s4, %s321
        %p323 = pneg %p164
        %p324 = pneg %p161
        %p325 = scmp.lt.s32.totalorder %s27, 0
        %s326 = scalar_select %p325, %s27, 0
        %s327 = scalar_lea.vmem %s5, %s326
        %p328 = pneg %p190
        %p329 = pneg %p187
        %p330 = pneg %p220
        %p331 = pneg %p217
        %s332 = sand.u32 %s207, 1
        %s333 = scalar_lea.sflag [#allocation3], %s332
        %s334 = sand.u32 %s207, 1
        %s335 = smul.addr %s334, 64
        %s336 = scalar_lea.vmem [#allocation2], %s335
        %p337 = scmp.lt.s32.totalorder %s25, 1
        %s338 = scalar_select %p337, %s25, 1
        %s339 = smul.addr %s338, 18
        %s340 = smul.addr %s339, 8
        %s341 = scalar_lea.vmem %s0, %s340
        %p342 = scmp.lt.s32.totalorder %s25, 1
        %s343 = scalar_select %p342, %s25, 1
        %s344 = smul.addr %s343, 18
        %s345 = smul.addr %s344, 8
        %s346 = scalar_lea.vmem %s1, %s345
        %p347 = scmp.lt.s32.totalorder %s25, 1
        %s348 = scalar_select %p347, %s25, 1
        %s349 = smul.addr %s348, 18
        %s350 = smul.addr %s349, 8
        %s351 = scalar_lea.vmem %s2, %s350
        %p352 = scmp.lt.s32.totalorder %s25, 1
        %s353 = scalar_select %p352, %s25, 1
        %s354 = smul.addr %s353, 18
        %s355 = smul.addr %s354, 8
        %s356 = scalar_lea.vmem %s3, %s355
        %p357 = scmp.lt.s32.totalorder %s27, 0
        %s358 = scalar_select %p357, %s27, 0
        %s359 = smul.addr %s358, 8
        %s360 = scalar_lea.vmem %s4, %s359
        %p361 = scmp.lt.s32.totalorder %s27, 0
        %s362 = scalar_select %p361, %s27, 0
        %s363 = scalar_lea.vmem %s5, %s362
        %s364 = smul.u32 8, %s26
        %s365 = smul.u32 %s26, 8
        %s366 = smul.u32 %s365, 16
        %s367 = scalar_lea.vmem %s341, %s366
        %v368 = vld [vmem:[%s367] sm:$0xff]
        %v369 = vld [vmem:[%s367 + $0x10] sm:$0xff]
        %v370 = vld [vmem:[%s367 + $0x20] sm:$0xff]
        %v371 = vld [vmem:[%s367 + $0x30] sm:$0xff]
        %v372 = vld [vmem:[%s367 + $0x40] sm:$0xff]
        %v373 = vld [vmem:[%s367 + $0x50] sm:$0xff]
        %v374 = vld [vmem:[%s367 + $0x60] sm:$0xff]
        %v375 = vld [vmem:[%s367 + $0x70] sm:$0xff]
        %s376 = scalar_lea.vmem %s346, %s366
        %v377 = vld [vmem:[%s376] sm:$0xff]
        %v378 = vld [vmem:[%s376 + $0x10] sm:$0xff]
        %v379 = vld [vmem:[%s376 + $0x20] sm:$0xff]
        %v380 = vld [vmem:[%s376 + $0x30] sm:$0xff]
        %v381 = vld [vmem:[%s376 + $0x40] sm:$0xff]
        %v382 = vld [vmem:[%s376 + $0x50] sm:$0xff]
        %v383 = vld [vmem:[%s376 + $0x60] sm:$0xff]
        %v384 = vld [vmem:[%s376 + $0x70] sm:$0xff]
        %v385 = vld [vmem:[%s367 + $0x1] sm:$0xff]
        %v386 = vld [vmem:[%s367 + $0x11] sm:$0xff]
        %v387 = vld [vmem:[%s367 + $0x21] sm:$0xff]
        %v388 = vld [vmem:[%s367 + $0x31] sm:$0xff]
        %v389 = vld [vmem:[%s367 + $0x41] sm:$0xff]
        %v390 = vld [vmem:[%s367 + $0x51] sm:$0xff]
        %v391 = vld [vmem:[%s367 + $0x61] sm:$0xff]
        %v392 = vld [vmem:[%s367 + $0x71] sm:$0xff]
        %s393 = scalar_lea.vmem %s351, %s366
        %v394 = vld [vmem:[%s393] sm:$0xff]
        %v395 = vld [vmem:[%s393 + $0x10] sm:$0xff]
        %v396 = vld [vmem:[%s393 + $0x20] sm:$0xff]
        %v397 = vld [vmem:[%s393 + $0x30] sm:$0xff]
        %v398 = vld [vmem:[%s393 + $0x40] sm:$0xff]
        %v399 = vld [vmem:[%s393 + $0x50] sm:$0xff]
        %v400 = vld [vmem:[%s393 + $0x60] sm:$0xff]
        %v401 = vld [vmem:[%s393 + $0x70] sm:$0xff]
        %s402 = scalar_lea.vmem %s356, %s366
        %v403 = vld [vmem:[%s402] sm:$0xff]
        %v404 = vld [vmem:[%s402 + $0x10] sm:$0xff]
        %v405 = vld [vmem:[%s402 + $0x20] sm:$0xff]
        %v406 = vld [vmem:[%s402 + $0x30] sm:$0xff]
        %v407 = vld [vmem:[%s402 + $0x40] sm:$0xff]
        %v408 = vld [vmem:[%s402 + $0x50] sm:$0xff]
        %v409 = vld [vmem:[%s402 + $0x60] sm:$0xff]
        %v410 = vld [vmem:[%s402 + $0x70] sm:$0xff]
        %v411 = vld [vmem:[%s393 + $0x1] sm:$0xff]
        %v412 = vld [vmem:[%s393 + $0x11] sm:$0xff]
        %v413 = vld [vmem:[%s393 + $0x21] sm:$0xff]
        %v414 = vld [vmem:[%s393 + $0x31] sm:$0xff]
        %v415 = vld [vmem:[%s393 + $0x41] sm:$0xff]
        %v416 = vld [vmem:[%s393 + $0x51] sm:$0xff]
        %v417 = vld [vmem:[%s393 + $0x61] sm:$0xff]
        %v418 = vld [vmem:[%s393 + $0x71] sm:$0xff]
        %s419 = sadd.s32 %s365, 1
        %s420 = smul.u32 %s419, 16
        %s421 = scalar_lea.vmem %s341, %s420
        %v422 = vld [vmem:[%s421] sm:$0xff]
        %v423 = vld [vmem:[%s421 + $0x10] sm:$0xff]
        %v424 = vld [vmem:[%s421 + $0x20] sm:$0xff]
        %v425 = vld [vmem:[%s421 + $0x30] sm:$0xff]
        %v426 = vld [vmem:[%s421 + $0x40] sm:$0xff]
        %v427 = vld [vmem:[%s421 + $0x50] sm:$0xff]
        %v428 = vld [vmem:[%s421 + $0x60] sm:$0xff]
        %v429 = vld [vmem:[%s421 + $0x70] sm:$0xff]
        %s430 = scalar_lea.vmem %s346, %s420
        %v431 = vld [vmem:[%s430] sm:$0xff]
        %v432 = vld [vmem:[%s430 + $0x10] sm:$0xff]
        %v433 = vld [vmem:[%s430 + $0x20] sm:$0xff]
        %v434 = vld [vmem:[%s430 + $0x30] sm:$0xff]
        %v435 = vld [vmem:[%s430 + $0x40] sm:$0xff]
        %v436 = vld [vmem:[%s430 + $0x50] sm:$0xff]
        %v437 = vld [vmem:[%s430 + $0x60] sm:$0xff]
        %v438 = vld [vmem:[%s430 + $0x70] sm:$0xff]
        %v439 = vld [vmem:[%s421 + $0x1] sm:$0xff]
        %v440 = vld [vmem:[%s421 + $0x11] sm:$0xff]
        %v441 = vld [vmem:[%s421 + $0x21] sm:$0xff]
        %v442 = vld [vmem:[%s421 + $0x31] sm:$0xff]
        %v443 = vld [vmem:[%s421 + $0x41] sm:$0xff]
        %v444 = vld [vmem:[%s421 + $0x51] sm:$0xff]
        %v445 = vld [vmem:[%s421 + $0x61] sm:$0xff]
        %v446 = vld [vmem:[%s421 + $0x71] sm:$0xff]
        %455 = vrot.lane.b32.xlu0 %v377, 4
        %v456 = vpop.permute.xlu0 %455
        %457 = vrot.lane.b32.xlu0 %v378, 4
        %v458 = vpop.permute.xlu0 %457
        %459 = vrot.lane.b32.xlu0 %v379, 4
        %v460 = vpop.permute.xlu0 %459
        %461 = vrot.lane.b32.xlu0 %v380, 4
        %v462 = vpop.permute.xlu0 %461
        %463 = vrot.lane.b32.xlu0 %v381, 4
        %v464 = vpop.permute.xlu0 %463
        %465 = vrot.lane.b32.xlu0 %v382, 4
        %v466 = vpop.permute.xlu0 %465
        %467 = vrot.lane.b32.xlu0 %v383, 4
        %v468 = vpop.permute.xlu0 %467
        %469 = vrot.lane.b32.xlu0 %v384, 4
        %v470 = vpop.permute.xlu0 %469
        %487 = vrot.lane.b32.xlu0 %v385, 8
        %v488 = vpop.permute.xlu0 %487
        %489 = vrot.lane.b32.xlu0 %v386, 8
        %v490 = vpop.permute.xlu0 %489
        %491 = vrot.lane.b32.xlu0 %v387, 8
        %v492 = vpop.permute.xlu0 %491
        %493 = vrot.lane.b32.xlu0 %v388, 8
        %v494 = vpop.permute.xlu0 %493
        %495 = vrot.lane.b32.xlu0 %v389, 8
        %v496 = vpop.permute.xlu0 %495
        %497 = vrot.lane.b32.xlu0 %v390, 8
        %v498 = vpop.permute.xlu0 %497
        %499 = vrot.lane.b32.xlu0 %v391, 8
        %v500 = vpop.permute.xlu0 %499
        %501 = vrot.lane.b32.xlu0 %v392, 8
        %v502 = vpop.permute.xlu0 %501
        %519 = vrot.lane.b32.xlu0 %v394, 12
        %v520 = vpop.permute.xlu0 %519
        %521 = vrot.lane.b32.xlu0 %v395, 12
        %v522 = vpop.permute.xlu0 %521
        %523 = vrot.lane.b32.xlu0 %v396, 12
        %v524 = vpop.permute.xlu0 %523
        %525 = vrot.lane.b32.xlu0 %v397, 12
        %v526 = vpop.permute.xlu0 %525
        %527 = vrot.lane.b32.xlu0 %v398, 12
        %v528 = vpop.permute.xlu0 %527
        %529 = vrot.lane.b32.xlu0 %v399, 12
        %v530 = vpop.permute.xlu0 %529
        %531 = vrot.lane.b32.xlu0 %v400, 12
        %v532 = vpop.permute.xlu0 %531
        %533 = vrot.lane.b32.xlu0 %v401, 12
        %v534 = vpop.permute.xlu0 %533
        %551 = vrot.lane.b32.xlu0 %v403, 16
        %v552 = vpop.permute.xlu0 %551
        %553 = vrot.lane.b32.xlu0 %v404, 16
        %v554 = vpop.permute.xlu0 %553
        %555 = vrot.lane.b32.xlu0 %v405, 16
        %v556 = vpop.permute.xlu0 %555
        %557 = vrot.lane.b32.xlu0 %v406, 16
        %v558 = vpop.permute.xlu0 %557
        %559 = vrot.lane.b32.xlu0 %v407, 16
        %v560 = vpop.permute.xlu0 %559
        %561 = vrot.lane.b32.xlu0 %v408, 16
        %v562 = vpop.permute.xlu0 %561
        %563 = vrot.lane.b32.xlu0 %v409, 16
        %v564 = vpop.permute.xlu0 %563
        %565 = vrot.lane.b32.xlu0 %v410, 16
        %v566 = vpop.permute.xlu0 %565
        %583 = vrot.lane.b32.xlu0 %v411, 20
        %v584 = vpop.permute.xlu0 %583
        %585 = vrot.lane.b32.xlu0 %v412, 20
        %v586 = vpop.permute.xlu0 %585
        %587 = vrot.lane.b32.xlu0 %v413, 20
        %v588 = vpop.permute.xlu0 %587
        %589 = vrot.lane.b32.xlu0 %v414, 20
        %v590 = vpop.permute.xlu0 %589
        %591 = vrot.lane.b32.xlu0 %v415, 20
        %v592 = vpop.permute.xlu0 %591
        %593 = vrot.lane.b32.xlu0 %v416, 20
        %v594 = vpop.permute.xlu0 %593
        %595 = vrot.lane.b32.xlu0 %v417, 20
        %v596 = vpop.permute.xlu0 %595
        %597 = vrot.lane.b32.xlu0 %v418, 20
        %v598 = vpop.permute.xlu0 %597
        %615 = vrot.lane.b32.xlu0 %v422, 24
        %v616 = vpop.permute.xlu0 %615
        %617 = vrot.lane.b32.xlu0 %v423, 24
        %v618 = vpop.permute.xlu0 %617
        %619 = vrot.lane.b32.xlu0 %v424, 24
        %v620 = vpop.permute.xlu0 %619
        %621 = vrot.lane.b32.xlu0 %v425, 24
        %v622 = vpop.permute.xlu0 %621
        %623 = vrot.lane.b32.xlu0 %v426, 24
        %v624 = vpop.permute.xlu0 %623
        %625 = vrot.lane.b32.xlu0 %v427, 24
        %v626 = vpop.permute.xlu0 %625
        %627 = vrot.lane.b32.xlu0 %v428, 24
        %v628 = vpop.permute.xlu0 %627
        %629 = vrot.lane.b32.xlu0 %v429, 24
        %v630 = vpop.permute.xlu0 %629
        %647 = vrot.lane.b32.xlu0 %v431, 28
        %v648 = vpop.permute.xlu0 %647
        %649 = vrot.lane.b32.xlu0 %v432, 28
        %v650 = vpop.permute.xlu0 %649
        %651 = vrot.lane.b32.xlu0 %v433, 28
        %v652 = vpop.permute.xlu0 %651
        %653 = vrot.lane.b32.xlu0 %v434, 28
        %v654 = vpop.permute.xlu0 %653
        %655 = vrot.lane.b32.xlu0 %v435, 28
        %v656 = vpop.permute.xlu0 %655
        %657 = vrot.lane.b32.xlu0 %v436, 28
        %v658 = vpop.permute.xlu0 %657
        %659 = vrot.lane.b32.xlu0 %v437, 28
        %v660 = vpop.permute.xlu0 %659
        %661 = vrot.lane.b32.xlu0 %v438, 28
        %v662 = vpop.permute.xlu0 %661
        %679 = vrot.lane.b32.xlu0 %v439, 32
        %v680 = vpop.permute.xlu0 %679
        %681 = vrot.lane.b32.xlu0 %v440, 32
        %v682 = vpop.permute.xlu0 %681
        %683 = vrot.lane.b32.xlu0 %v441, 32
        %v684 = vpop.permute.xlu0 %683
        %685 = vrot.lane.b32.xlu0 %v442, 32
        %v686 = vpop.permute.xlu0 %685
        %687 = vrot.lane.b32.xlu0 %v443, 32
        %v688 = vpop.permute.xlu0 %687
        %689 = vrot.lane.b32.xlu0 %v444, 32
        %v690 = vpop.permute.xlu0 %689
        %691 = vrot.lane.b32.xlu0 %v445, 32
        %v692 = vpop.permute.xlu0 %691
        %693 = vrot.lane.b32.xlu0 %v446, 32
        %v694 = vpop.permute.xlu0 %693
        %vm703 = vcmask 31744
        %v704 = vsel %vm703, %v368, %v456
        %v705 = vsel %vm703, %v369, %v458
        %v706 = vsel %vm703, %v370, %v460
        %v707 = vsel %vm703, %v371, %v462
        %v708 = vsel %vm703, %v372, %v464
        %v709 = vsel %vm703, %v373, %v466
        %v710 = vsel %vm703, %v374, %v468
        %v711 = vsel %vm703, %v375, %v470
        %vm712 = vcmask 64512
        %v713 = vsel %vm712, %v704, %v488
        %v714 = vsel %vm712, %v705, %v490
        %v715 = vsel %vm712, %v706, %v492
        %v716 = vsel %vm712, %v707, %v494
        %v717 = vsel %vm712, %v708, %v496
        %v718 = vsel %vm712, %v709, %v498
        %v719 = vsel %vm712, %v710, %v500
        %v720 = vsel %vm712, %v711, %v502
        %vm721 = vcmask 97280
        %v722 = vsel %vm721, %v713, %v520
        %v723 = vsel %vm721, %v714, %v522
        %v724 = vsel %vm721, %v715, %v524
        %v725 = vsel %vm721, %v716, %v526
        %v726 = vsel %vm721, %v717, %v528
        %v727 = vsel %vm721, %v718, %v530
        %v728 = vsel %vm721, %v719, %v532
        %v729 = vsel %vm721, %v720, %v534
        %vm730 = vcmask 130048
        %v731 = vsel %vm730, %v722, %v552
        %v732 = vsel %vm730, %v723, %v554
        %v733 = vsel %vm730, %v724, %v556
        %v734 = vsel %vm730, %v725, %v558
        %v735 = vsel %vm730, %v726, %v560
        %v736 = vsel %vm730, %v727, %v562
        %v737 = vsel %vm730, %v728, %v564
        %v738 = vsel %vm730, %v729, %v566
        %vm739 = vcmask 162816
        %v740 = vsel %vm739, %v731, %v584
        %v741 = vsel %vm739, %v732, %v586
        %v742 = vsel %vm739, %v733, %v588
        %v743 = vsel %vm739, %v734, %v590
        %v744 = vsel %vm739, %v735, %v592
        %v745 = vsel %vm739, %v736, %v594
        %v746 = vsel %vm739, %v737, %v596
        %v747 = vsel %vm739, %v738, %v598
        %vm748 = vcmask 195584
        %v749 = vsel %vm748, %v740, %v616
        %v750 = vsel %vm748, %v741, %v618
        %v751 = vsel %vm748, %v742, %v620
        %v752 = vsel %vm748, %v743, %v622
        %v753 = vsel %vm748, %v744, %v624
        %v754 = vsel %vm748, %v745, %v626
        %v755 = vsel %vm748, %v746, %v628
        %v756 = vsel %vm748, %v747, %v630
        %vm757 = vcmask 228352
        %v758 = vsel %vm757, %v749, %v648
        %v759 = vsel %vm757, %v750, %v650
        %v760 = vsel %vm757, %v751, %v652
        %v761 = vsel %vm757, %v752, %v654
        %v762 = vsel %vm757, %v753, %v656
        %v763 = vsel %vm757, %v754, %v658
        %v764 = vsel %vm757, %v755, %v660
        %v765 = vsel %vm757, %v756, %v662
        %vm766 = vcmask 261120
        %v767 = vsel %vm766, %v758, %v680
        %v768 = vsel %vm766, %v759, %v682
        %v769 = vsel %vm766, %v760, %v684
        %v770 = vsel %vm766, %v761, %v686
        %v771 = vsel %vm766, %v762, %v688
        %v772 = vsel %vm766, %v763, %v690
        %v773 = vsel %vm766, %v764, %v692
        %v774 = vsel %vm766, %v765, %v694
        %v775 = vld [vmem:[%s360] sm:$0xff]
        %v776 = vld [vmem:[%s360 + $0x8] sm:$0xff]
        %v777 = vld [vmem:[%s360 + $0x10] sm:$0xff]
        %v778 = vld [vmem:[%s360 + $0x18] sm:$0xff]
        %v779 = vld [vmem:[%s360 + $0x20] sm:$0xf]
        %v780 = vld [vmem:[%s363] sm:$0x1]
        %v782 = vlaneseq
        %v783 = vshrl.u32 %v782, 7
        %v784 = vsub.s32 0, %v783
        %v785 = vrot.slane %v780, %v784
        %vm787 = vcmask 293888
        %v789 = vsel %vm787, %v767, 0
        %v792 = vsel %vm787, %v768, 0
        %v795 = vsel %vm787, %v769, 0
        %v798 = vsel %vm787, %v770, 0
        %v801 = vsel %vm787, %v771, 0
        %v804 = vsel %vm787, %v772, 0
        %v807 = vsel %vm787, %v773, 0
        %v810 = vsel %vm787, %v774, 0
        %vm812 = vcmask 1043456
        %v814 = vsel %vm812, %v779, 0
        %816 = vmatprep.subr.mxu0 0.0
        %817 = vmatpush1.msra.mxu0 0.0
        %818 = vmatprep.subr.mxu0 0.0
        %819 = vmatpush1.msra.mxu0 0.0
        %820 = vmatprep.subr.mxu0 0.0
        %821 = vmatpush1.msra.mxu0 0.0
        %822 = vmatprep.subr.mxu0 0.0
        %823 = vmatpush1.msra.mxu0 0.0
        %824 = vmatprep.subr.mxu0 0.0
        %825 = vmatpush1.msra.mxu0 0.0
        %826 = vmatprep.subr.mxu0 0.0
        %827 = vmatpush1.msra.mxu0 0.0
        %828 = vmatprep.subr.mxu0 0.0
        %829 = vmatpush1.msra.mxu0 0.0
        %830 = vmatprep.subr.mxu0 0.0
        %831 = vmatpush1.msra.mxu0 0.0
        %832 = vmatprep.subr.mxu0 0.0
        %833 = vmatpush1.msra.mxu0 0.0
        %834 = vmatprep.subr.mxu0 0.0
        %835 = vmatpush1.msra.mxu0 0.0
        %836 = vmatprep.subr.mxu0 0.0
        %837 = vmatpush1.msra.mxu0 0.0
        %838 = vmatprep.subr.mxu0 0.0
        %839 = vmatpush1.msra.mxu0 %v814
        %840 = vmatprep.subr.mxu0 0.0
        %841 = vmatpush1.msra.mxu0 %v778
        %842 = vmatprep.subr.mxu0 0.0
        %843 = vmatpush1.msra.mxu0 %v777
        %844 = vmatprep.subr.mxu0 0.0
        %845 = vmatpush1.msra.mxu0 %v776
        %846 = vmatprep.subr.mxu0 0.0
        %847 = vmatpush1.msra.mxu0 %v775
        %848 = vmatprep.subr.mxu0 0.0
        %849 = vmatpush2.msra.mxu0 0.0
        %850 = vmatprep.subr.mxu0 0.0
        %851 = vmatpush2.msra.mxu0 0.0
        %852 = vmatprep.subr.mxu0 0.0
        %853 = vmatpush2.msra.mxu0 0.0
        %854 = vmatprep.subr.mxu0 0.0
        %855 = vmatpush2.msra.mxu0 0.0
        %856 = vmatprep.subr.mxu0 0.0
        %857 = vmatpush2.msra.mxu0 0.0
        %858 = vmatprep.subr.mxu0 0.0
        %859 = vmatpush2.msra.mxu0 0.0
        %860 = vmatprep.subr.mxu0 0.0
        %861 = vmatpush2.msra.mxu0 0.0
        %862 = vmatprep.subr.mxu0 0.0
        %863 = vmatpush2.msra.mxu0 0.0
        %864 = vmatprep.subr.mxu0 0.0
        %865 = vmatpush2.msra.mxu0 0.0
        %866 = vmatprep.subr.mxu0 0.0
        %867 = vmatpush2.msra.mxu0 0.0
        %868 = vmatprep.subr.mxu0 0.0
        %869 = vmatpush2.msra.mxu0 0.0
        %870 = vmatprep.subr.mxu0 0.0
        %871 = vmatpush2.msra.mxu0 0.0
        %872 = vmatprep.subr.mxu0 0.0
        %873 = vmatpush2.msra.mxu0 0.0
        %874 = vmatprep.subr.mxu0 0.0
        %875 = vmatpush2.msra.mxu0 0.0
        %876 = vmatprep.subr.mxu0 0.0
        %877 = vmatpush2.msra.mxu0 0.0
        %878 = vmatprep.subr.mxu0 0.0
        %879 = vmatpush2.msra.mxu0 0.0
        %880 = vmatprep.mubr.f32.mxu0 0.0
        %881 = vmatmul.mubr.f32.gmra.mxu0 %v789
        %v882 = vpop.f32.mrf.mxu0
        %v883 = vadd.f32 %v785, %v882
        %v884 = vpop.f32.mrf.mxu0
        %885 = vmatprep.mubr.f32.mxu0 0.0
        %886 = vmatmul.mubr.f32.gmra.mxu0 %v792
        %v887 = vpop.f32.mrf.mxu0
        %v888 = vadd.f32 %v785, %v887
        %v889 = vpop.f32.mrf.mxu0
        %890 = vmatprep.mubr.f32.mxu0 0.0
        %891 = vmatmul.mubr.f32.gmra.mxu0 %v795
        %v892 = vpop.f32.mrf.mxu0
        %v893 = vadd.f32 %v785, %v892
        %v894 = vpop.f32.mrf.mxu0
        %895 = vmatprep.mubr.f32.mxu0 0.0
        %896 = vmatmul.mubr.f32.gmra.mxu0 %v798
        %v897 = vpop.f32.mrf.mxu0
        %v898 = vadd.f32 %v785, %v897
        %v899 = vpop.f32.mrf.mxu0
        %900 = vmatprep.mubr.f32.mxu0 0.0
        %901 = vmatmul.mubr.f32.gmra.mxu0 %v801
        %v902 = vpop.f32.mrf.mxu0
        %v903 = vadd.f32 %v785, %v902
        %v904 = vpop.f32.mrf.mxu0
        %905 = vmatprep.mubr.f32.mxu0 0.0
        %906 = vmatmul.mubr.f32.gmra.mxu0 %v804
        %v907 = vpop.f32.mrf.mxu0
        %v908 = vadd.f32 %v785, %v907
        %v909 = vpop.f32.mrf.mxu0
        %910 = vmatprep.mubr.f32.mxu0 0.0
        %911 = vmatmul.mubr.f32.gmra.mxu0 %v807
        %v912 = vpop.f32.mrf.mxu0
        %v913 = vadd.f32 %v785, %v912
        %v914 = vpop.f32.mrf.mxu0
        %915 = vmatprep.mubr.f32.mxu0 0.0
        %916 = vmatmul.mubr.f32.gmra.mxu0 %v810
        %v917 = vpop.f32.mrf.mxu0
        %v918 = vadd.f32 %v785, %v917
        %v919 = vpop.f32.mrf.mxu0
        %920 = vdwg.mxu0
        %921 = vst [vmem:[%s336] sm:$0xff] %v883
        %922 = vst [vmem:[%s336 + $0x8] sm:$0xff] %v888
        %923 = vst [vmem:[%s336 + $0x10] sm:$0xff] %v893
        %924 = vst [vmem:[%s336 + $0x18] sm:$0xff] %v898
        %925 = vst [vmem:[%s336 + $0x20] sm:$0xff] %v903
        %926 = vst [vmem:[%s336 + $0x28] sm:$0xff] %v908
        %927 = vst [vmem:[%s336 + $0x30] sm:$0xff] %v913
        %928 = vst [vmem:[%s336 + $0x38] sm:$0xff] %v918
        %s929 = sand.u32 %s207, 1
        %s930 = scalar_lea.sflag [#allocation3], %s929
        %s931 = sand.u32 %s207, 1
        %s932 = smul.addr %s931, 64
        %s933 = scalar_lea.vmem [#allocation2], %s932
        // Predicated region
        $region45: #{tpu_custom_call.1} parent=43 // pred_check
          %p934 = pneg %p217
        $region46: #{tpu_custom_call.1} parent=43 // pred_check_branch
          %936 = sbr.rel (%p934) target = $region48
        $region47: #{tpu_custom_call.1} parent=43 // pred_region
          %s937 = smul.u32 8, %s26
          %s939 = ssub.s32 1024, 1024
          %940 = vsyncadd %s930, %s939
          %s941 = sadd.s32 %s27, %s937
          %s942 = smul.addr %s25, 8
          %s943 = sadd.s32 %s941, %s942
          %s944 = smul.addr %s943, 128
          %s945 = scalar_lea.hbm %s6, %s944
          %s946 = sshll.u32 %s933, 4
          %s947 = int_to_ptr.vmem [resolvable:$true] %s946
          %952 = dma.vmem_to_hbm [thread:$0]  %s947, 1024, %s945, %s930, 128, 128, 8
        $region48: #{tpu_custom_call.1} parent=43 // pred_fallthru
          _
      $region44: #{tpu_custom_call.1} parent=5 // pred_fallthru
        _
      %p953 = scmp.le.s32.totalorder 2, %s15
      // Predicated region
      $region49: #{tpu_custom_call.1} parent=5 // pred_check
        %p954 = pneg %p953
      $region50: #{tpu_custom_call.1} parent=5 // pred_check_branch
        %956 = sbr.rel (%p954) target = $region52
      $region51: #{tpu_custom_call.1} parent=5 // pred_region
        %s957 = ssub.s32 %s15, 2
        // Predicated region
        $region53: #{tpu_custom_call.1} parent=51 // pred_check
          %p958 = pneg %p223
        $region54: #{tpu_custom_call.1} parent=51 // pred_check_branch
          %960 = sbr.rel (%p958) target = $region56
        $region55: #{tpu_custom_call.1} parent=51 // pred_region
          %s961 = sand.u32 %s208, 1
          %s962 = scalar_lea.sflag [#allocation3], %s961
          %s963 = sand.u32 %s208, 1
          %s964 = smul.addr %s963, 64
          %s965 = scalar_lea.vmem [#allocation2], %s964
          %966 = dma.done %s962, 1024
        $region56: #{tpu_custom_call.1} parent=51 // pred_fallthru
          _
      $region52: #{tpu_custom_call.1} parent=5 // pred_fallthru
        _
    $region6: #{tpu_custom_call.1} parent=1 // loop_footer
      %s19 = sadd.s32 1, %s15
    $region7: #{tpu_custom_call.1} parent=1 // loop_footer_branch
      %14 = sbr.rel target = $region3
    $region8: #{tpu_custom_call.1} parent=1 // loop_exit
      _
    %967 = vsyncpa [#allocation3], 1
    %s968 = scalar_lea.sflag [#allocation3], 1
    %969 = vsyncpa %s968, 1

// kernel: tpu_custom_call.1
$region0: #{tpu_custom_call.1}
  #allocation0 [shape = 'u32[]', space=smem, size = 0x4, offset = 0x4, fixed_abs, tag = 'smem constant byte address 0x4 - core index']
  #allocation1 [shape = 'u32[144,128]{1,0:T(1,128)}', space=vmem, size = 0x12000, scoped, tag = 'internal scratch']
  %s0 = inlined_call_operand.vmem [shape: f32[2,9,9,4], index: 0, kind: input, shape index: {}]
  %s1 = inlined_call_operand.vmem [shape: f32[2,9,9,4], index: 1, kind: input, shape index: {}]
  %s2 = inlined_call_operand.vmem [shape: f32[2,9,9,4], index: 2, kind: input, shape index: {}]
  %s3 = inlined_call_operand.vmem [shape: f32[2,9,9,4], index: 3, kind: input, shape index: {}]
  %s4 = inlined_call_operand.vmem [shape: f32[9,4,128], index: 4, kind: input, shape index: {}]
  %s5 = inlined_call_operand.vmem [shape: f32[1,128], index: 5, kind: input, shape index: {}]
  %s6 = inlined_call_operand.hbm [shape: f32[2,64,128], index: 6, kind: output, shape index: {}]
  %s7 = sld [smem:[#allocation0]]
  $region57: #{tpu_custom_call.1} parent=0
    _
  %s9 = ssub.s32 1, %s7
  %s10 = scalar_select 0, %s9, %s7
  $region1: #{tpu_custom_call.1} parent=0
    #allocation2 [shape = 'u8[65536]{0}', space=vmem, size = 0x10000, scoped, tag = 'output window, operand 0']
    #allocation3 [shape = 's32[2]{0}', space=sflag, size = 0x8, scoped, tag = 'scoped memory for tpu_custom_call.1']
    %11 = vsyncpa [#allocation3], 0
    %s12 = scalar_lea.sflag [#allocation3], 1
    %13 = vsyncpa %s12, 0
    loop: start=0, step=1, limit=4
    $region2: #{tpu_custom_call.1} parent=1 // loop_pre_header
      _
    $region3: #{tpu_custom_call.1} parent=1 // loop_header
      %s15 = sphi 0, %s19
      %p16 = scmp.ge.s32.totalorder %s15, 4
      %s22 = sphi 0, %s41
      %s23 = sphi 0, %s37
      %s24 = sphi 0, %s33
      %s25 = sphi 0, %s22
      %s26 = sphi 0, %s23
      %s27 = sphi 0, %s24
      %s28 = sphi 0, %s25
      %s29 = sphi 0, %s26
      %s30 = sphi 0, %s27
      %s44 = sphi 0, %s46
      %s47 = sphi 0, %s44
      %s48 = sphi 0, %s47
      %s64 = sphi 0, %s48
      %s70 = sphi 0, %s72
      %s73 = sphi 0, %s70
      %s74 = sphi 0, %s73
      %s90 = sphi 0, %s74
      %s96 = sphi 0, %s98
      %s99 = sphi 0, %s96
      %s100 = sphi 0, %s99
      %s116 = sphi 0, %s100
      %s122 = sphi 0, %s124
      %s125 = sphi 0, %s122
      %s126 = sphi 0, %s125
      %s142 = sphi 0, %s126
      %s148 = sphi 0, %s150
      %s151 = sphi 0, %s148
      %s152 = sphi 0, %s151
      %s168 = sphi 0, %s152
      %s174 = sphi 0, %s176
      %s177 = sphi 0, %s174
      %s178 = sphi 0, %s177
      %s194 = sphi 0, %s178
      %s204 = sphi 0, %s206
      %s207 = sphi 0, %s204
      %s208 = sphi 0, %s207
      %s224 = sphi 0, %s208
    $region4: #{tpu_custom_call.1} parent=1 // loop_header_branch
      %18 = sbr.rel (%p16) target = $region8
    $region5: #{tpu_custom_call.1} parent=1 // loop_body
      %s20 = ssub.s32 %s15, 1
      %s21 = ssub.s32 %s15, 2
      %s31 = sadd.s32 1, %s24
      %p32 = scmp.ge.s32.totalorder %s31, 1
      %s33 = scalar_select %p32, 0, %s31
      %s34 = sadd.s32 1, %s23
      %s35 = scalar_select %p32, %s34, %s23
      %p36 = scmp.ge.s32.totalorder %s35, 1
      %s37 = scalar_select %p36, 0, %s35
      %s38 = sadd.s32 1, %s22
      %s39 = scalar_select %p36, %s38, %s22
      %p40 = scmp.ge.s32.totalorder %s39, 2
      %s41 = scalar_select %p40, 0, %s39
      %s42 = ssub.s32 %s22, %s41
      %p43 = scmp.eq.s32.totalorder %s42, 0
      %s45 = sadd.s32 %s44, 1
      %s46 = scalar_select %p43, %s44, %s45
      %p49 = pneg %p43
      %p50 = scmp.eq.s32.totalorder %s15, 1
      %p51 = por %p49, %p50
      %p52 = scmp.ne.s32.totalorder %s44, %s47
      %p53 = scmp.eq.s32.totalorder %s15, 0
      %p54 = por %p52, %p53
      %p55 = scmp.ne.s32.totalorder %s44, %s47
      %p56 = scmp.eq.s32.totalorder %s20, 1
      %p57 = por %p55, %p56
      %p58 = scmp.ne.s32.totalorder %s47, %s48
      %p59 = scmp.eq.s32.totalorder %s20, 0
      %p60 = por %p58, %p59
      %p61 = scmp.ne.s32.totalorder %s47, %s48
      %p62 = scmp.eq.s32.totalorder %s21, 1
      %p63 = por %p61, %p62
      %p65 = scmp.ne.s32.totalorder %s48, %s64
      %p66 = scmp.eq.s32.totalorder %s21, 0
      %p67 = por %p65, %p66
      %s68 = ssub.s32 %s22, %s41
      %p69 = scmp.eq.s32.totalorder %s68, 0
      %s71 = sadd.s32 %s70, 1
      %s72 = scalar_select %p69, %s70, %s71
      %p75 = pneg %p69
      %p76 = scmp.eq.s32.totalorder %s15, 1
      %p77 = por %p75, %p76
      %p78 = scmp.ne.s32.totalorder %s70, %s73
      %p79 = scmp.eq.s32.totalorder %s15, 0
      %p80 = por %p78, %p79
      %p81 = scmp.ne.s32.totalorder %s70, %s73
      %p82 = scmp.eq.s32.totalorder %s20, 1
      %p83 = por %p81, %p82
      %p84 = scmp.ne.s32.totalorder %s73, %s74
      %p85 = scmp.eq.s32.totalorder %s20, 0
      %p86 = por %p84, %p85
      %p87 = scmp.ne.s32.totalorder %s73, %s74
      %p88 = scmp.eq.s32.totalorder %s21, 1
      %p89 = por %p87, %p88
      %p91 = scmp.ne.s32.totalorder %s74, %s90
      %p92 = scmp.eq.s32.totalorder %s21, 0
      %p93 = por %p91, %p92
      %s94 = ssub.s32 %s22, %s41
      %p95 = scmp.eq.s32.totalorder %s94, 0
      %s97 = sadd.s32 %s96, 1
      %s98 = scalar_select %p95, %s96, %s97
      %p101 = pneg %p95
      %p102 = scmp.eq.s32.totalorder %s15, 1
      %p103 = por %p101, %p102
      %p104 = scmp.ne.s32.totalorder %s96, %s99
      %p105 = scmp.eq.s32.totalorder %s15, 0
      %p106 = por %p104, %p105
      %p107 = scmp.ne.s32.totalorder %s96, %s99
      %p108 = scmp.eq.s32.totalorder %s20, 1
      %p109 = por %p107, %p108
      %p110 = scmp.ne.s32.totalorder %s99, %s100
      %p111 = scmp.eq.s32.totalorder %s20, 0
      %p112 = por %p110, %p111
      %p113 = scmp.ne.s32.totalorder %s99, %s100
      %p114 = scmp.eq.s32.totalorder %s21, 1
      %p115 = por %p113, %p114
      %p117 = scmp.ne.s32.totalorder %s100, %s116
      %p118 = scmp.eq.s32.totalorder %s21, 0
      %p119 = por %p117, %p118
      %s120 = ssub.s32 %s22, %s41
      %p121 = scmp.eq.s32.totalorder %s120, 0
      %s123 = sadd.s32 %s122, 1
      %s124 = scalar_select %p121, %s122, %s123
      %p127 = pneg %p121
      %p128 = scmp.eq.s32.totalorder %s15, 1
      %p129 = por %p127, %p128
      %p130 = scmp.ne.s32.totalorder %s122, %s125
      %p131 = scmp.eq.s32.totalorder %s15, 0
      %p132 = por %p130, %p131
      %p133 = scmp.ne.s32.totalorder %s122, %s125
      %p134 = scmp.eq.s32.totalorder %s20, 1
      %p135 = por %p133, %p134
      %p136 = scmp.ne.s32.totalorder %s125, %s126
      %p137 = scmp.eq.s32.totalorder %s20, 0
      %p138 = por %p136, %p137
      %p139 = scmp.ne.s32.totalorder %s125, %s126
      %p140 = scmp.eq.s32.totalorder %s21, 1
      %p141 = por %p139, %p140
      %p143 = scmp.ne.s32.totalorder %s126, %s142
      %p144 = scmp.eq.s32.totalorder %s21, 0
      %p145 = por %p143, %p144
      %s146 = ssub.s32 %s24, %s33
      %p147 = scmp.eq.s32.totalorder %s146, 0
      %s149 = sadd.s32 %s148, 1
      %s150 = scalar_select %p147, %s148, %s149
      %p153 = pneg %p147
      %p154 = scmp.eq.s32.totalorder %s15, 1
      %p155 = por %p153, %p154
      %p156 = scmp.ne.s32.totalorder %s148, %s151
      %p157 = scmp.eq.s32.totalorder %s15, 0
      %p158 = por %p156, %p157
      %p159 = scmp.ne.s32.totalorder %s148, %s151
      %p160 = scmp.eq.s32.totalorder %s20, 1
      %p161 = por %p159, %p160
      %p162 = scmp.ne.s32.totalorder %s151, %s152
      %p163 = scmp.eq.s32.totalorder %s20, 0
      %p164 = por %p162, %p163
      %p165 = scmp.ne.s32.totalorder %s151, %s152
      %p166 = scmp.eq.s32.totalorder %s21, 1
      %p167 = por %p165, %p166
      %p169 = scmp.ne.s32.totalorder %s152, %s168
      %p170 = scmp.eq.s32.totalorder %s21, 0
      %p171 = por %p169, %p170
      %s172 = ssub.s32 %s24, %s33
      %p173 = scmp.eq.s32.totalorder %s172, 0
      %s175 = sadd.s32 %s174, 1
      %s176 = scalar_select %p173, %s174, %s175
      %p179 = pneg %p173
      %p180 = scmp.eq.s32.totalorder %s15, 1
      %p181 = por %p179, %p180
      %p182 = scmp.ne.s32.totalorder %s174, %s177
      %p183 = scmp.eq.s32.totalorder %s15, 0
      %p184 = por %p182, %p183
      %p185 = scmp.ne.s32.totalorder %s174, %s177
      %p186 = scmp.eq.s32.totalorder %s20, 1
      %p187 = por %p185, %p186
      %p188 = scmp.ne.s32.totalorder %s177, %s178
      %p189 = scmp.eq.s32.totalorder %s20, 0
      %p190 = por %p188, %p189
      %p191 = scmp.ne.s32.totalorder %s177, %s178
      %p192 = scmp.eq.s32.totalorder %s21, 1
      %p193 = por %p191, %p192
      %p195 = scmp.ne.s32.totalorder %s178, %s194
      %p196 = scmp.eq.s32.totalorder %s21, 0
      %p197 = por %p195, %p196
      %s198 = ssub.s32 %s22, %s41
      %s199 = ssub.s32 %s23, %s37
      %s200 = sor.u32 %s198, %s199
      %s201 = ssub.s32 %s24, %s33
      %s202 = sor.u32 %s200, %s201
      %p203 = scmp.eq.s32.totalorder %s202, 0
      %s205 = sadd.s32 %s204, 1
      %s206 = scalar_select %p203, %s204, %s205
      %p209 = pneg %p203
      %p210 = scmp.eq.s32.totalorder %s15, 1
      %p211 = por %p209, %p210
      %p212 = scmp.ne.s32.totalorder %s204, %s207
      %p213 = scmp.eq.s32.totalorder %s15, 0
      %p214 = por %p212, %p213
      %p215 = scmp.ne.s32.totalorder %s204, %s207
      %p216 = scmp.eq.s32.totalorder %s20, 1
      %p217 = por %p215, %p216
      %p218 = scmp.ne.s32.totalorder %s207, %s208
      %p219 = scmp.eq.s32.totalorder %s20, 0
      %p220 = por %p218, %p219
      %p221 = scmp.ne.s32.totalorder %s207, %s208
      %p222 = scmp.eq.s32.totalorder %s21, 1
      %p223 = por %p221, %p222
      %p225 = scmp.ne.s32.totalorder %s208, %s224
      %p226 = scmp.eq.s32.totalorder %s21, 0
      %p227 = por %p225, %p226
      %p228 = scmp.le.s32.totalorder 1, %s15
      %p229 = scmp.lt.s32.totalorder %s15, 3
      %p230 = pnand %p228, %p229
      %p231 = pneg %p230
      // Predicated region
      $region9: #{tpu_custom_call.1} parent=5 // pred_check
        _
      $region10: #{tpu_custom_call.1} parent=5 // pred_check_branch
        %233 = sbr.rel (%p230) target = $region12
      $region11: #{tpu_custom_call.1} parent=5 // pred_region
        %s234 = ssub.s32 %s15, 1
        // Predicated region
        $region13: #{tpu_custom_call.1} parent=11 // pred_check
          %p235 = pneg %p164
        $region14: #{tpu_custom_call.1} parent=11 // pred_check_branch
          %237 = sbr.rel (%p235) target = $region16
        $region15: #{tpu_custom_call.1} parent=11 // pred_region
          %p238 = scmp.lt.s32.totalorder %s27, 0
          %s239 = scalar_select %p238, %s27, 0
          %s240 = smul.addr %s239, 4
          %s241 = scalar_lea.vmem %s4, %s240
        $region16: #{tpu_custom_call.1} parent=11 // pred_fallthru
          _
        // Predicated region
        $region17: #{tpu_custom_call.1} parent=11 // pred_check
          %p242 = pneg %p190
        $region18: #{tpu_custom_call.1} parent=11 // pred_check_branch
          %244 = sbr.rel (%p242) target = $region20
        $region19: #{tpu_custom_call.1} parent=11 // pred_region
          %p245 = scmp.lt.s32.totalorder %s27, 0
          %s246 = scalar_select %p245, %s27, 0
          %s247 = scalar_lea.vmem %s5, %s246
        $region20: #{tpu_custom_call.1} parent=11 // pred_fallthru
          _
      $region12: #{tpu_custom_call.1} parent=5 // pred_fallthru
        _
      %p248 = scmp.lt.s32.totalorder %s15, 2
      // Predicated region
      $region21: #{tpu_custom_call.1} parent=5 // pred_check
        %p249 = pneg %p248
      $region22: #{tpu_custom_call.1} parent=5 // pred_check_branch
        %251 = sbr.rel (%p249) target = $region24
      $region23: #{tpu_custom_call.1} parent=5 // pred_region
        // Predicated region
        $region25: #{tpu_custom_call.1} parent=23 // pred_check
          %p252 = pneg %p54
        $region26: #{tpu_custom_call.1} parent=23 // pred_check_branch
          %254 = sbr.rel (%p252) target = $region28
        $region27: #{tpu_custom_call.1} parent=23 // pred_region
          %p255 = scmp.lt.s32.totalorder %s22, 1
          %s256 = scalar_select %p255, %s22, 1
          %s257 = smul.addr %s256, 18
          %s258 = smul.addr %s257, 8
          %s259 = scalar_lea.vmem %s0, %s258
        $region28: #{tpu_custom_call.1} parent=23 // pred_fallthru
          _
        // Predicated region
        $region29: #{tpu_custom_call.1} parent=23 // pred_check
          %p260 = pneg %p80
        $region30: #{tpu_custom_call.1} parent=23 // pred_check_branch
          %262 = sbr.rel (%p260) target = $region32
        $region31: #{tpu_custom_call.1} parent=23 // pred_region
          %p263 = scmp.lt.s32.totalorder %s22, 1
          %s264 = scalar_select %p263, %s22, 1
          %s265 = smul.addr %s264, 18
          %s266 = smul.addr %s265, 8
          %s267 = scalar_lea.vmem %s1, %s266
        $region32: #{tpu_custom_call.1} parent=23 // pred_fallthru
          _
        // Predicated region
        $region33: #{tpu_custom_call.1} parent=23 // pred_check
          %p268 = pneg %p106
        $region34: #{tpu_custom_call.1} parent=23 // pred_check_branch
          %270 = sbr.rel (%p268) target = $region36
        $region35: #{tpu_custom_call.1} parent=23 // pred_region
          %p271 = scmp.lt.s32.totalorder %s22, 1
          %s272 = scalar_select %p271, %s22, 1
          %s273 = smul.addr %s272, 18
          %s274 = smul.addr %s273, 8
          %s275 = scalar_lea.vmem %s2, %s274
        $region36: #{tpu_custom_call.1} parent=23 // pred_fallthru
          _
        // Predicated region
        $region37: #{tpu_custom_call.1} parent=23 // pred_check
          %p276 = pneg %p132
        $region38: #{tpu_custom_call.1} parent=23 // pred_check_branch
          %278 = sbr.rel (%p276) target = $region40
        $region39: #{tpu_custom_call.1} parent=23 // pred_region
          %p279 = scmp.lt.s32.totalorder %s22, 1
          %s280 = scalar_select %p279, %s22, 1
          %s281 = smul.addr %s280, 18
          %s282 = smul.addr %s281, 8
          %s283 = scalar_lea.vmem %s3, %s282
        $region40: #{tpu_custom_call.1} parent=23 // pred_fallthru
          _
      $region24: #{tpu_custom_call.1} parent=5 // pred_fallthru
        _
      %p284 = scmp.le.s32.totalorder 1, %s15
      %p285 = scmp.lt.s32.totalorder %s15, 3
      %p286 = pnand %p284, %p285
      %p287 = pneg %p286
      // Predicated region
      $region41: #{tpu_custom_call.1} parent=5 // pred_check
        _
      $region42: #{tpu_custom_call.1} parent=5 // pred_check_branch
        %289 = sbr.rel (%p286) target = $region44
      $region43: #{tpu_custom_call.1} parent=5 // pred_region
        %s290 = ssub.s32 %s15, 1
        %p291 = scmp.lt.s32.totalorder %s25, 1
        %s292 = scalar_select %p291, %s25, 1
        %s293 = smul.addr %s292, 18
        %s294 = smul.addr %s293, 8
        %s295 = scalar_lea.vmem %s0, %s294
        %p296 = pneg %p60
        %p297 = pneg %p57
        %p298 = scmp.lt.s32.totalorder %s25, 1
        %s299 = scalar_select %p298, %s25, 1
        %s300 = smul.addr %s299, 18
        %s301 = smul.addr %s300, 8
        %s302 = scalar_lea.vmem %s1, %s301
        %p303 = pneg %p86
        %p304 = pneg %p83
        %p305 = scmp.lt.s32.totalorder %s25, 1
        %s306 = scalar_select %p305, %s25, 1
        %s307 = smul.addr %s306, 18
        %s308 = smul.addr %s307, 8
        %s309 = scalar_lea.vmem %s2, %s308
        %p310 = pneg %p112
        %p311 = pneg %p109
        %p312 = scmp.lt.s32.totalorder %s25, 1
        %s313 = scalar_select %p312, %s25, 1
        %s314 = smul.addr %s313, 18
        %s315 = smul.addr %s314, 8
        %s316 = scalar_lea.vmem %s3, %s315
        %p317 = pneg %p138
        %p318 = pneg %p135
        %p319 = scmp.lt.s32.totalorder %s27, 0
        %s320 = scalar_select %p319, %s27, 0
        %s321 = smul.addr %s320, 4
        %s322 = scalar_lea.vmem %s4, %s321
        %p323 = pneg %p164
        %p324 = pneg %p161
        %p325 = scmp.lt.s32.totalorder %s27, 0
        %s326 = scalar_select %p325, %s27, 0
        %s327 = scalar_lea.vmem %s5, %s326
        %p328 = pneg %p190
        %p329 = pneg %p187
        %p330 = pneg %p220
        %p331 = pneg %p217
        %s332 = sand.u32 %s207, 1
        %s333 = scalar_lea.sflag [#allocation3], %s332
        %s334 = sand.u32 %s207, 1
        %s335 = smul.addr %s334, 64
        %s336 = scalar_lea.vmem [#allocation2], %s335
        %p337 = scmp.lt.s32.totalorder %s25, 1
        %s338 = scalar_select %p337, %s25, 1
        %s339 = smul.addr %s338, 18
        %s340 = smul.addr %s339, 8
        %s341 = scalar_lea.vmem %s0, %s340
        %p342 = scmp.lt.s32.totalorder %s25, 1
        %s343 = scalar_select %p342, %s25, 1
        %s344 = smul.addr %s343, 18
        %s345 = smul.addr %s344, 8
        %s346 = scalar_lea.vmem %s1, %s345
        %p347 = scmp.lt.s32.totalorder %s25, 1
        %s348 = scalar_select %p347, %s25, 1
        %s349 = smul.addr %s348, 18
        %s350 = smul.addr %s349, 8
        %s351 = scalar_lea.vmem %s2, %s350
        %p352 = scmp.lt.s32.totalorder %s25, 1
        %s353 = scalar_select %p352, %s25, 1
        %s354 = smul.addr %s353, 18
        %s355 = smul.addr %s354, 8
        %s356 = scalar_lea.vmem %s3, %s355
        %p357 = scmp.lt.s32.totalorder %s27, 0
        %s358 = scalar_select %p357, %s27, 0
        %s359 = smul.addr %s358, 4
        %s360 = scalar_lea.vmem %s4, %s359
        %p361 = scmp.lt.s32.totalorder %s27, 0
        %s362 = scalar_select %p361, %s27, 0
        %s363 = scalar_lea.vmem %s5, %s362
        %s364 = smul.u32 8, %s26
        %s365 = smul.u32 %s26, 8
        %s366 = smul.u32 %s365, 16
        %s367 = scalar_lea.vmem %s341, %s366
        %v368 = vld [vmem:[%s367] sm:$0xff]
        %v369 = vld [vmem:[%s367 + $0x10] sm:$0xff]
        %v370 = vld [vmem:[%s367 + $0x20] sm:$0xff]
        %v371 = vld [vmem:[%s367 + $0x30] sm:$0xff]
        %v372 = vld [vmem:[%s367 + $0x40] sm:$0xff]
        %v373 = vld [vmem:[%s367 + $0x50] sm:$0xff]
        %v374 = vld [vmem:[%s367 + $0x60] sm:$0xff]
        %v375 = vld [vmem:[%s367 + $0x70] sm:$0xff]
        %s376 = scalar_lea.vmem %s346, %s366
        %v377 = vld [vmem:[%s376] sm:$0xff]
        %v378 = vld [vmem:[%s376 + $0x10] sm:$0xff]
        %v379 = vld [vmem:[%s376 + $0x20] sm:$0xff]
        %v380 = vld [vmem:[%s376 + $0x30] sm:$0xff]
        %v381 = vld [vmem:[%s376 + $0x40] sm:$0xff]
        %v382 = vld [vmem:[%s376 + $0x50] sm:$0xff]
        %v383 = vld [vmem:[%s376 + $0x60] sm:$0xff]
        %v384 = vld [vmem:[%s376 + $0x70] sm:$0xff]
        %v385 = vld [vmem:[%s367 + $0x1] sm:$0xff]
        %v386 = vld [vmem:[%s367 + $0x11] sm:$0xff]
        %v387 = vld [vmem:[%s367 + $0x21] sm:$0xff]
        %v388 = vld [vmem:[%s367 + $0x31] sm:$0xff]
        %v389 = vld [vmem:[%s367 + $0x41] sm:$0xff]
        %v390 = vld [vmem:[%s367 + $0x51] sm:$0xff]
        %v391 = vld [vmem:[%s367 + $0x61] sm:$0xff]
        %v392 = vld [vmem:[%s367 + $0x71] sm:$0xff]
        %s393 = scalar_lea.vmem %s351, %s366
        %v394 = vld [vmem:[%s393] sm:$0xff]
        %v395 = vld [vmem:[%s393 + $0x10] sm:$0xff]
        %v396 = vld [vmem:[%s393 + $0x20] sm:$0xff]
        %v397 = vld [vmem:[%s393 + $0x30] sm:$0xff]
        %v398 = vld [vmem:[%s393 + $0x40] sm:$0xff]
        %v399 = vld [vmem:[%s393 + $0x50] sm:$0xff]
        %v400 = vld [vmem:[%s393 + $0x60] sm:$0xff]
        %v401 = vld [vmem:[%s393 + $0x70] sm:$0xff]
        %s402 = scalar_lea.vmem %s356, %s366
        %v403 = vld [vmem:[%s402] sm:$0xff]
        %v404 = vld [vmem:[%s402 + $0x10] sm:$0xff]
        %v405 = vld [vmem:[%s402 + $0x20] sm:$0xff]
        %v406 = vld [vmem:[%s402 + $0x30] sm:$0xff]
        %v407 = vld [vmem:[%s402 + $0x40] sm:$0xff]
        %v408 = vld [vmem:[%s402 + $0x50] sm:$0xff]
        %v409 = vld [vmem:[%s402 + $0x60] sm:$0xff]
        %v410 = vld [vmem:[%s402 + $0x70] sm:$0xff]
        %v411 = vld [vmem:[%s393 + $0x1] sm:$0xff]
        %v412 = vld [vmem:[%s393 + $0x11] sm:$0xff]
        %v413 = vld [vmem:[%s393 + $0x21] sm:$0xff]
        %v414 = vld [vmem:[%s393 + $0x31] sm:$0xff]
        %v415 = vld [vmem:[%s393 + $0x41] sm:$0xff]
        %v416 = vld [vmem:[%s393 + $0x51] sm:$0xff]
        %v417 = vld [vmem:[%s393 + $0x61] sm:$0xff]
        %v418 = vld [vmem:[%s393 + $0x71] sm:$0xff]
        %s419 = sadd.s32 %s365, 1
        %s420 = smul.u32 %s419, 16
        %s421 = scalar_lea.vmem %s341, %s420
        %v422 = vld [vmem:[%s421] sm:$0xff]
        %v423 = vld [vmem:[%s421 + $0x10] sm:$0xff]
        %v424 = vld [vmem:[%s421 + $0x20] sm:$0xff]
        %v425 = vld [vmem:[%s421 + $0x30] sm:$0xff]
        %v426 = vld [vmem:[%s421 + $0x40] sm:$0xff]
        %v427 = vld [vmem:[%s421 + $0x50] sm:$0xff]
        %v428 = vld [vmem:[%s421 + $0x60] sm:$0xff]
        %v429 = vld [vmem:[%s421 + $0x70] sm:$0xff]
        %s430 = scalar_lea.vmem %s346, %s420
        %v431 = vld [vmem:[%s430] sm:$0xff]
        %v432 = vld [vmem:[%s430 + $0x10] sm:$0xff]
        %v433 = vld [vmem:[%s430 + $0x20] sm:$0xff]
        %v434 = vld [vmem:[%s430 + $0x30] sm:$0xff]
        %v435 = vld [vmem:[%s430 + $0x40] sm:$0xff]
        %v436 = vld [vmem:[%s430 + $0x50] sm:$0xff]
        %v437 = vld [vmem:[%s430 + $0x60] sm:$0xff]
        %v438 = vld [vmem:[%s430 + $0x70] sm:$0xff]
        %v439 = vld [vmem:[%s421 + $0x1] sm:$0xff]
        %v440 = vld [vmem:[%s421 + $0x11] sm:$0xff]
        %v441 = vld [vmem:[%s421 + $0x21] sm:$0xff]
        %v442 = vld [vmem:[%s421 + $0x31] sm:$0xff]
        %v443 = vld [vmem:[%s421 + $0x41] sm:$0xff]
        %v444 = vld [vmem:[%s421 + $0x51] sm:$0xff]
        %v445 = vld [vmem:[%s421 + $0x61] sm:$0xff]
        %v446 = vld [vmem:[%s421 + $0x71] sm:$0xff]
        %v447 = vld [vmem:[%s360] sm:$0xf]
        %s448 = scalar_lea.vmem %s360, 4
        %v449 = vld [vmem:[%s448] sm:$0xf]
        %vm450 = vcmask 31744
        %v452 = vsel %vm450, %v377, 0
        %v455 = vsel %vm450, %v378, 0
        %v458 = vsel %vm450, %v379, 0
        %v461 = vsel %vm450, %v380, 0
        %v464 = vsel %vm450, %v381, 0
        %v467 = vsel %vm450, %v382, 0
        %v470 = vsel %vm450, %v383, 0
        %v473 = vsel %vm450, %v384, 0
        %vm475 = vcmask 1043456
        %v477 = vsel %vm475, %v449, 0
        %479 = vmatprep.subr.mxu0 0.0
        %480 = vmatpush1.msra.mxu0 0.0
        %481 = vmatprep.subr.mxu0 0.0
        %482 = vmatpush1.msra.mxu0 0.0
        %483 = vmatprep.subr.mxu0 0.0
        %484 = vmatpush1.msra.mxu0 0.0
        %485 = vmatprep.subr.mxu0 0.0
        %486 = vmatpush1.msra.mxu0 0.0
        %487 = vmatprep.subr.mxu0 0.0
        %488 = vmatpush1.msra.mxu0 0.0
        %489 = vmatprep.subr.mxu0 0.0
        %490 = vmatpush1.msra.mxu0 0.0
        %491 = vmatprep.subr.mxu0 0.0
        %492 = vmatpush1.msra.mxu0 0.0
        %493 = vmatprep.subr.mxu0 0.0
        %494 = vmatpush1.msra.mxu0 0.0
        %495 = vmatprep.subr.mxu0 0.0
        %496 = vmatpush1.msra.mxu0 0.0
        %497 = vmatprep.subr.mxu0 0.0
        %498 = vmatpush1.msra.mxu0 0.0
        %499 = vmatprep.subr.mxu0 0.0
        %500 = vmatpush1.msra.mxu0 0.0
        %501 = vmatprep.subr.mxu0 0.0
        %502 = vmatpush1.msra.mxu0 0.0
        %503 = vmatprep.subr.mxu0 0.0
        %504 = vmatpush1.msra.mxu0 0.0
        %505 = vmatprep.subr.mxu0 0.0
        %506 = vmatpush1.msra.mxu0 0.0
        %507 = vmatprep.subr.mxu0 0.0
        %508 = vmatpush1.msra.mxu0 0.0
        %509 = vmatprep.subr.mxu0 0.0
        %510 = vmatpush1.msra.mxu0 %v477
        %511 = vmatprep.subr.mxu0 0.0
        %512 = vmatpush2.msra.mxu0 0.0
        %513 = vmatprep.subr.mxu0 0.0
        %514 = vmatpush2.msra.mxu0 0.0
        %515 = vmatprep.subr.mxu0 0.0
        %516 = vmatpush2.msra.mxu0 0.0
        %517 = vmatprep.subr.mxu0 0.0
        %518 = vmatpush2.msra.mxu0 0.0
        %519 = vmatprep.subr.mxu0 0.0
        %520 = vmatpush2.msra.mxu0 0.0
        %521 = vmatprep.subr.mxu0 0.0
        %522 = vmatpush2.msra.mxu0 0.0
        %523 = vmatprep.subr.mxu0 0.0
        %524 = vmatpush2.msra.mxu0 0.0
        %525 = vmatprep.subr.mxu0 0.0
        %526 = vmatpush2.msra.mxu0 0.0
        %527 = vmatprep.subr.mxu0 0.0
        %528 = vmatpush2.msra.mxu0 0.0
        %529 = vmatprep.subr.mxu0 0.0
        %530 = vmatpush2.msra.mxu0 0.0
        %531 = vmatprep.subr.mxu0 0.0
        %532 = vmatpush2.msra.mxu0 0.0
        %533 = vmatprep.subr.mxu0 0.0
        %534 = vmatpush2.msra.mxu0 0.0
        %535 = vmatprep.subr.mxu0 0.0
        %536 = vmatpush2.msra.mxu0 0.0
        %537 = vmatprep.subr.mxu0 0.0
        %538 = vmatpush2.msra.mxu0 0.0
        %539 = vmatprep.subr.mxu0 0.0
        %540 = vmatpush2.msra.mxu0 0.0
        %541 = vmatprep.subr.mxu0 0.0
        %542 = vmatpush2.msra.mxu0 0.0
        %543 = vmatprep.mubr.f32.mxu0 0.0
        %544 = vmatmul.mubr.f32.gmra.mxu0 %v452
        %v545 = vpop.f32.mrf.mxu0
        %v546 = vadd.f32 0.0, %v545
        %v547 = vpop.f32.mrf.mxu0
        %548 = vmatprep.mubr.f32.mxu0 0.0
        %549 = vmatmul.mubr.f32.gmra.mxu0 %v455
        %v550 = vpop.f32.mrf.mxu0
        %v551 = vadd.f32 0.0, %v550
        %v552 = vpop.f32.mrf.mxu0
        %553 = vmatprep.mubr.f32.mxu0 0.0
        %554 = vmatmul.mubr.f32.gmra.mxu0 %v458
        %v555 = vpop.f32.mrf.mxu0
        %v556 = vadd.f32 0.0, %v555
        %v557 = vpop.f32.mrf.mxu0
        %558 = vmatprep.mubr.f32.mxu0 0.0
        %559 = vmatmul.mubr.f32.gmra.mxu0 %v461
        %v560 = vpop.f32.mrf.mxu0
        %v561 = vadd.f32 0.0, %v560
        %v562 = vpop.f32.mrf.mxu0
        %563 = vmatprep.mubr.f32.mxu0 0.0
        %564 = vmatmul.mubr.f32.gmra.mxu0 %v464
        %v565 = vpop.f32.mrf.mxu0
        %v566 = vadd.f32 0.0, %v565
        %v567 = vpop.f32.mrf.mxu0
        %568 = vmatprep.mubr.f32.mxu0 0.0
        %569 = vmatmul.mubr.f32.gmra.mxu0 %v467
        %v570 = vpop.f32.mrf.mxu0
        %v571 = vadd.f32 0.0, %v570
        %v572 = vpop.f32.mrf.mxu0
        %573 = vmatprep.mubr.f32.mxu0 0.0
        %574 = vmatmul.mubr.f32.gmra.mxu0 %v470
        %v575 = vpop.f32.mrf.mxu0
        %v576 = vadd.f32 0.0, %v575
        %v577 = vpop.f32.mrf.mxu0
        %578 = vmatprep.mubr.f32.mxu0 0.0
        %579 = vmatmul.mubr.f32.gmra.mxu0 %v473
        %v580 = vpop.f32.mrf.mxu0
        %v581 = vadd.f32 0.0, %v580
        %v582 = vpop.f32.mrf.mxu0
        %583 = vdwg.mxu0
        %v585 = vsel %vm450, %v368, 0
        %v588 = vsel %vm450, %v369, 0
        %v591 = vsel %vm450, %v370, 0
        %v594 = vsel %vm450, %v371, 0
        %v597 = vsel %vm450, %v372, 0
        %v600 = vsel %vm450, %v373, 0
        %v603 = vsel %vm450, %v374, 0
        %v606 = vsel %vm450, %v375, 0
        %v609 = vsel %vm475, %v447, 0
        %611 = vmatprep.subr.mxu0 0.0
        %612 = vmatpush1.msra.mxu0 0.0
        %613 = vmatprep.subr.mxu0 0.0
        %614 = vmatpush1.msra.mxu0 0.0
        %615 = vmatprep.subr.mxu0 0.0
        %616 = vmatpush1.msra.mxu0 0.0
        %617 = vmatprep.subr.mxu0 0.0
        %618 = vmatpush1.msra.mxu0 0.0
        %619 = vmatprep.subr.mxu0 0.0
        %620 = vmatpush1.msra.mxu0 0.0
        %621 = vmatprep.subr.mxu0 0.0
        %622 = vmatpush1.msra.mxu0 0.0
        %623 = vmatprep.subr.mxu0 0.0
        %624 = vmatpush1.msra.mxu0 0.0
        %625 = vmatprep.subr.mxu0 0.0
        %626 = vmatpush1.msra.mxu0 0.0
        %627 = vmatprep.subr.mxu0 0.0
        %628 = vmatpush1.msra.mxu0 0.0
        %629 = vmatprep.subr.mxu0 0.0
        %630 = vmatpush1.msra.mxu0 0.0
        %631 = vmatprep.subr.mxu0 0.0
        %632 = vmatpush1.msra.mxu0 0.0
        %633 = vmatprep.subr.mxu0 0.0
        %634 = vmatpush1.msra.mxu0 0.0
        %635 = vmatprep.subr.mxu0 0.0
        %636 = vmatpush1.msra.mxu0 0.0
        %637 = vmatprep.subr.mxu0 0.0
        %638 = vmatpush1.msra.mxu0 0.0
        %639 = vmatprep.subr.mxu0 0.0
        %640 = vmatpush1.msra.mxu0 0.0
        %641 = vmatprep.subr.mxu0 0.0
        %642 = vmatpush1.msra.mxu0 %v609
        %643 = vmatprep.subr.mxu0 0.0
        %644 = vmatpush2.msra.mxu0 0.0
        %645 = vmatprep.subr.mxu0 0.0
        %646 = vmatpush2.msra.mxu0 0.0
        %647 = vmatprep.subr.mxu0 0.0
        %648 = vmatpush2.msra.mxu0 0.0
        %649 = vmatprep.subr.mxu0 0.0
        %650 = vmatpush2.msra.mxu0 0.0
        %651 = vmatprep.subr.mxu0 0.0
        %652 = vmatpush2.msra.mxu0 0.0
        %653 = vmatprep.subr.mxu0 0.0
        %654 = vmatpush2.msra.mxu0 0.0
        %655 = vmatprep.subr.mxu0 0.0
        %656 = vmatpush2.msra.mxu0 0.0
        %657 = vmatprep.subr.mxu0 0.0
        %658 = vmatpush2.msra.mxu0 0.0
        %659 = vmatprep.subr.mxu0 0.0
        %660 = vmatpush2.msra.mxu0 0.0
        %661 = vmatprep.subr.mxu0 0.0
        %662 = vmatpush2.msra.mxu0 0.0
        %663 = vmatprep.subr.mxu0 0.0
        %664 = vmatpush2.msra.mxu0 0.0
        %665 = vmatprep.subr.mxu0 0.0
        %666 = vmatpush2.msra.mxu0 0.0
        %667 = vmatprep.subr.mxu0 0.0
        %668 = vmatpush2.msra.mxu0 0.0
        %669 = vmatprep.subr.mxu0 0.0
        %670 = vmatpush2.msra.mxu0 0.0
        %671 = vmatprep.subr.mxu0 0.0
        %672 = vmatpush2.msra.mxu0 0.0
        %673 = vmatprep.subr.mxu0 0.0
        %674 = vmatpush2.msra.mxu0 0.0
        %675 = vmatprep.mubr.f32.mxu0 0.0
        %676 = vmatmul.mubr.f32.gmra.mxu0 %v585
        %v677 = vpop.f32.mrf.mxu0
        %v678 = vadd.f32 %v546, %v677
        %v679 = vpop.f32.mrf.mxu0
        %680 = vmatprep.mubr.f32.mxu0 0.0
        %681 = vmatmul.mubr.f32.gmra.mxu0 %v588
        %v682 = vpop.f32.mrf.mxu0
        %v683 = vadd.f32 %v551, %v682
        %v684 = vpop.f32.mrf.mxu0
        %685 = vmatprep.mubr.f32.mxu0 0.0
        %686 = vmatmul.mubr.f32.gmra.mxu0 %v591
        %v687 = vpop.f32.mrf.mxu0
        %v688 = vadd.f32 %v556, %v687
        %v689 = vpop.f32.mrf.mxu0
        %690 = vmatprep.mubr.f32.mxu0 0.0
        %691 = vmatmul.mubr.f32.gmra.mxu0 %v594
        %v692 = vpop.f32.mrf.mxu0
        %v693 = vadd.f32 %v561, %v692
        %v694 = vpop.f32.mrf.mxu0
        %695 = vmatprep.mubr.f32.mxu0 0.0
        %696 = vmatmul.mubr.f32.gmra.mxu0 %v597
        %v697 = vpop.f32.mrf.mxu0
        %v698 = vadd.f32 %v566, %v697
        %v699 = vpop.f32.mrf.mxu0
        %700 = vmatprep.mubr.f32.mxu0 0.0
        %701 = vmatmul.mubr.f32.gmra.mxu0 %v600
        %v702 = vpop.f32.mrf.mxu0
        %v703 = vadd.f32 %v571, %v702
        %v704 = vpop.f32.mrf.mxu0
        %705 = vmatprep.mubr.f32.mxu0 0.0
        %706 = vmatmul.mubr.f32.gmra.mxu0 %v603
        %v707 = vpop.f32.mrf.mxu0
        %v708 = vadd.f32 %v576, %v707
        %v709 = vpop.f32.mrf.mxu0
        %710 = vmatprep.mubr.f32.mxu0 0.0
        %711 = vmatmul.mubr.f32.gmra.mxu0 %v606
        %v712 = vpop.f32.mrf.mxu0
        %v713 = vadd.f32 %v581, %v712
        %v714 = vpop.f32.mrf.mxu0
        %715 = vdwg.mxu0
        %s716 = scalar_lea.vmem %s360, 8
        %v717 = vld [vmem:[%s716] sm:$0xf]
        %v719 = vsel %vm450, %v385, 0
        %v722 = vsel %vm450, %v386, 0
        %v725 = vsel %vm450, %v387, 0
        %v728 = vsel %vm450, %v388, 0
        %v731 = vsel %vm450, %v389, 0
        %v734 = vsel %vm450, %v390, 0
        %v737 = vsel %vm450, %v391, 0
        %v740 = vsel %vm450, %v392, 0
        %v743 = vsel %vm475, %v717, 0
        %745 = vmatprep.subr.mxu0 0.0
        %746 = vmatpush1.msra.mxu0 0.0
        %747 = vmatprep.subr.mxu0 0.0
        %748 = vmatpush1.msra.mxu0 0.0
        %749 = vmatprep.subr.mxu0 0.0
        %750 = vmatpush1.msra.mxu0 0.0
        %751 = vmatprep.subr.mxu0 0.0
        %752 = vmatpush1.msra.mxu0 0.0
        %753 = vmatprep.subr.mxu0 0.0
        %754 = vmatpush1.msra.mxu0 0.0
        %755 = vmatprep.subr.mxu0 0.0
        %756 = vmatpush1.msra.mxu0 0.0
        %757 = vmatprep.subr.mxu0 0.0
        %758 = vmatpush1.msra.mxu0 0.0
        %759 = vmatprep.subr.mxu0 0.0
        %760 = vmatpush1.msra.mxu0 0.0
        %761 = vmatprep.subr.mxu0 0.0
        %762 = vmatpush1.msra.mxu0 0.0
        %763 = vmatprep.subr.mxu0 0.0
        %764 = vmatpush1.msra.mxu0 0.0
        %765 = vmatprep.subr.mxu0 0.0
        %766 = vmatpush1.msra.mxu0 0.0
        %767 = vmatprep.subr.mxu0 0.0
        %768 = vmatpush1.msra.mxu0 0.0
        %769 = vmatprep.subr.mxu0 0.0
        %770 = vmatpush1.msra.mxu0 0.0
        %771 = vmatprep.subr.mxu0 0.0
        %772 = vmatpush1.msra.mxu0 0.0
        %773 = vmatprep.subr.mxu0 0.0
        %774 = vmatpush1.msra.mxu0 0.0
        %775 = vmatprep.subr.mxu0 0.0
        %776 = vmatpush1.msra.mxu0 %v743
        %777 = vmatprep.subr.mxu0 0.0
        %778 = vmatpush2.msra.mxu0 0.0
        %779 = vmatprep.subr.mxu0 0.0
        %780 = vmatpush2.msra.mxu0 0.0
        %781 = vmatprep.subr.mxu0 0.0
        %782 = vmatpush2.msra.mxu0 0.0
        %783 = vmatprep.subr.mxu0 0.0
        %784 = vmatpush2.msra.mxu0 0.0
        %785 = vmatprep.subr.mxu0 0.0
        %786 = vmatpush2.msra.mxu0 0.0
        %787 = vmatprep.subr.mxu0 0.0
        %788 = vmatpush2.msra.mxu0 0.0
        %789 = vmatprep.subr.mxu0 0.0
        %790 = vmatpush2.msra.mxu0 0.0
        %791 = vmatprep.subr.mxu0 0.0
        %792 = vmatpush2.msra.mxu0 0.0
        %793 = vmatprep.subr.mxu0 0.0
        %794 = vmatpush2.msra.mxu0 0.0
        %795 = vmatprep.subr.mxu0 0.0
        %796 = vmatpush2.msra.mxu0 0.0
        %797 = vmatprep.subr.mxu0 0.0
        %798 = vmatpush2.msra.mxu0 0.0
        %799 = vmatprep.subr.mxu0 0.0
        %800 = vmatpush2.msra.mxu0 0.0
        %801 = vmatprep.subr.mxu0 0.0
        %802 = vmatpush2.msra.mxu0 0.0
        %803 = vmatprep.subr.mxu0 0.0
        %804 = vmatpush2.msra.mxu0 0.0
        %805 = vmatprep.subr.mxu0 0.0
        %806 = vmatpush2.msra.mxu0 0.0
        %807 = vmatprep.subr.mxu0 0.0
        %808 = vmatpush2.msra.mxu0 0.0
        %809 = vmatprep.mubr.f32.mxu0 0.0
        %810 = vmatmul.mubr.f32.gmra.mxu0 %v719
        %v811 = vpop.f32.mrf.mxu0
        %v812 = vadd.f32 0.0, %v811
        %v813 = vpop.f32.mrf.mxu0
        %814 = vmatprep.mubr.f32.mxu0 0.0
        %815 = vmatmul.mubr.f32.gmra.mxu0 %v722
        %v816 = vpop.f32.mrf.mxu0
        %v817 = vadd.f32 0.0, %v816
        %v818 = vpop.f32.mrf.mxu0
        %819 = vmatprep.mubr.f32.mxu0 0.0
        %820 = vmatmul.mubr.f32.gmra.mxu0 %v725
        %v821 = vpop.f32.mrf.mxu0
        %v822 = vadd.f32 0.0, %v821
        %v823 = vpop.f32.mrf.mxu0
        %824 = vmatprep.mubr.f32.mxu0 0.0
        %825 = vmatmul.mubr.f32.gmra.mxu0 %v728
        %v826 = vpop.f32.mrf.mxu0
        %v827 = vadd.f32 0.0, %v826
        %v828 = vpop.f32.mrf.mxu0
        %829 = vmatprep.mubr.f32.mxu0 0.0
        %830 = vmatmul.mubr.f32.gmra.mxu0 %v731
        %v831 = vpop.f32.mrf.mxu0
        %v832 = vadd.f32 0.0, %v831
        %v833 = vpop.f32.mrf.mxu0
        %834 = vmatprep.mubr.f32.mxu0 0.0
        %835 = vmatmul.mubr.f32.gmra.mxu0 %v734
        %v836 = vpop.f32.mrf.mxu0
        %v837 = vadd.f32 0.0, %v836
        %v838 = vpop.f32.mrf.mxu0
        %839 = vmatprep.mubr.f32.mxu0 0.0
        %840 = vmatmul.mubr.f32.gmra.mxu0 %v737
        %v841 = vpop.f32.mrf.mxu0
        %v842 = vadd.f32 0.0, %v841
        %v843 = vpop.f32.mrf.mxu0
        %844 = vmatprep.mubr.f32.mxu0 0.0
        %845 = vmatmul.mubr.f32.gmra.mxu0 %v740
        %v846 = vpop.f32.mrf.mxu0
        %v847 = vadd.f32 0.0, %v846
        %v848 = vpop.f32.mrf.mxu0
        %849 = vdwg.mxu0
        %v850 = vadd.f32 %v678, %v812
        %v851 = vadd.f32 %v683, %v817
        %v852 = vadd.f32 %v688, %v822
        %v853 = vadd.f32 %v693, %v827
        %v854 = vadd.f32 %v698, %v832
        %v855 = vadd.f32 %v703, %v837
        %v856 = vadd.f32 %v708, %v842
        %v857 = vadd.f32 %v713, %v847
        %s858 = scalar_lea.vmem %s360, 12
        %v859 = vld [vmem:[%s858] sm:$0xf]
        %v861 = vsel %vm450, %v394, 0
        %v864 = vsel %vm450, %v395, 0
        %v867 = vsel %vm450, %v396, 0
        %v870 = vsel %vm450, %v397, 0
        %v873 = vsel %vm450, %v398, 0
        %v876 = vsel %vm450, %v399, 0
        %v879 = vsel %vm450, %v400, 0
        %v882 = vsel %vm450, %v401, 0
        %v885 = vsel %vm475, %v859, 0
        %887 = vmatprep.subr.mxu0 0.0
        %888 = vmatpush1.msra.mxu0 0.0
        %889 = vmatprep.subr.mxu0 0.0
        %890 = vmatpush1.msra.mxu0 0.0
        %891 = vmatprep.subr.mxu0 0.0
        %892 = vmatpush1.msra.mxu0 0.0
        %893 = vmatprep.subr.mxu0 0.0
        %894 = vmatpush1.msra.mxu0 0.0
        %895 = vmatprep.subr.mxu0 0.0
        %896 = vmatpush1.msra.mxu0 0.0
        %897 = vmatprep.subr.mxu0 0.0
        %898 = vmatpush1.msra.mxu0 0.0
        %899 = vmatprep.subr.mxu0 0.0
        %900 = vmatpush1.msra.mxu0 0.0
        %901 = vmatprep.subr.mxu0 0.0
        %902 = vmatpush1.msra.mxu0 0.0
        %903 = vmatprep.subr.mxu0 0.0
        %904 = vmatpush1.msra.mxu0 0.0
        %905 = vmatprep.subr.mxu0 0.0
        %906 = vmatpush1.msra.mxu0 0.0
        %907 = vmatprep.subr.mxu0 0.0
        %908 = vmatpush1.msra.mxu0 0.0
        %909 = vmatprep.subr.mxu0 0.0
        %910 = vmatpush1.msra.mxu0 0.0
        %911 = vmatprep.subr.mxu0 0.0
        %912 = vmatpush1.msra.mxu0 0.0
        %913 = vmatprep.subr.mxu0 0.0
        %914 = vmatpush1.msra.mxu0 0.0
        %915 = vmatprep.subr.mxu0 0.0
        %916 = vmatpush1.msra.mxu0 0.0
        %917 = vmatprep.subr.mxu0 0.0
        %918 = vmatpush1.msra.mxu0 %v885
        %919 = vmatprep.subr.mxu0 0.0
        %920 = vmatpush2.msra.mxu0 0.0
        %921 = vmatprep.subr.mxu0 0.0
        %922 = vmatpush2.msra.mxu0 0.0
        %923 = vmatprep.subr.mxu0 0.0
        %924 = vmatpush2.msra.mxu0 0.0
        %925 = vmatprep.subr.mxu0 0.0
        %926 = vmatpush2.msra.mxu0 0.0
        %927 = vmatprep.subr.mxu0 0.0
        %928 = vmatpush2.msra.mxu0 0.0
        %929 = vmatprep.subr.mxu0 0.0
        %930 = vmatpush2.msra.mxu0 0.0
        %931 = vmatprep.subr.mxu0 0.0
        %932 = vmatpush2.msra.mxu0 0.0
        %933 = vmatprep.subr.mxu0 0.0
        %934 = vmatpush2.msra.mxu0 0.0
        %935 = vmatprep.subr.mxu0 0.0
        %936 = vmatpush2.msra.mxu0 0.0
        %937 = vmatprep.subr.mxu0 0.0
        %938 = vmatpush2.msra.mxu0 0.0
        %939 = vmatprep.subr.mxu0 0.0
        %940 = vmatpush2.msra.mxu0 0.0
        %941 = vmatprep.subr.mxu0 0.0
        %942 = vmatpush2.msra.mxu0 0.0
        %943 = vmatprep.subr.mxu0 0.0
        %944 = vmatpush2.msra.mxu0 0.0
        %945 = vmatprep.subr.mxu0 0.0
        %946 = vmatpush2.msra.mxu0 0.0
        %947 = vmatprep.subr.mxu0 0.0
        %948 = vmatpush2.msra.mxu0 0.0
        %949 = vmatprep.subr.mxu0 0.0
        %950 = vmatpush2.msra.mxu0 0.0
        %951 = vmatprep.mubr.f32.mxu0 0.0
        %952 = vmatmul.mubr.f32.gmra.mxu0 %v861
        %v953 = vpop.f32.mrf.mxu0
        %v954 = vadd.f32 0.0, %v953
        %v955 = vpop.f32.mrf.mxu0
        %956 = vmatprep.mubr.f32.mxu0 0.0
        %957 = vmatmul.mubr.f32.gmra.mxu0 %v864
        %v958 = vpop.f32.mrf.mxu0
        %v959 = vadd.f32 0.0, %v958
        %v960 = vpop.f32.mrf.mxu0
        %961 = vmatprep.mubr.f32.mxu0 0.0
        %962 = vmatmul.mubr.f32.gmra.mxu0 %v867
        %v963 = vpop.f32.mrf.mxu0
        %v964 = vadd.f32 0.0, %v963
        %v965 = vpop.f32.mrf.mxu0
        %966 = vmatprep.mubr.f32.mxu0 0.0
        %967 = vmatmul.mubr.f32.gmra.mxu0 %v870
        %v968 = vpop.f32.mrf.mxu0
        %v969 = vadd.f32 0.0, %v968
        %v970 = vpop.f32.mrf.mxu0
        %971 = vmatprep.mubr.f32.mxu0 0.0
        %972 = vmatmul.mubr.f32.gmra.mxu0 %v873
        %v973 = vpop.f32.mrf.mxu0
        %v974 = vadd.f32 0.0, %v973
        %v975 = vpop.f32.mrf.mxu0
        %976 = vmatprep.mubr.f32.mxu0 0.0
        %977 = vmatmul.mubr.f32.gmra.mxu0 %v876
        %v978 = vpop.f32.mrf.mxu0
        %v979 = vadd.f32 0.0, %v978
        %v980 = vpop.f32.mrf.mxu0
        %981 = vmatprep.mubr.f32.mxu0 0.0
        %982 = vmatmul.mubr.f32.gmra.mxu0 %v879
        %v983 = vpop.f32.mrf.mxu0
        %v984 = vadd.f32 0.0, %v983
        %v985 = vpop.f32.mrf.mxu0
        %986 = vmatprep.mubr.f32.mxu0 0.0
        %987 = vmatmul.mubr.f32.gmra.mxu0 %v882
        %v988 = vpop.f32.mrf.mxu0
        %v989 = vadd.f32 0.0, %v988
        %v990 = vpop.f32.mrf.mxu0
        %991 = vdwg.mxu0
        %v992 = vadd.f32 %v850, %v954
        %v993 = vadd.f32 %v851, %v959
        %v994 = vadd.f32 %v852, %v964
        %v995 = vadd.f32 %v853, %v969
        %v996 = vadd.f32 %v854, %v974
        %v997 = vadd.f32 %v855, %v979
        %v998 = vadd.f32 %v856, %v984
        %v999 = vadd.f32 %v857, %v989
        %s1000 = scalar_lea.vmem %s360, 16
        %v1001 = vld [vmem:[%s1000] sm:$0xf]
        %v1003 = vsel %vm450, %v403, 0
        %v1006 = vsel %vm450, %v404, 0
        %v1009 = vsel %vm450, %v405, 0
        %v1012 = vsel %vm450, %v406, 0
        %v1015 = vsel %vm450, %v407, 0
        %v1018 = vsel %vm450, %v408, 0
        %v1021 = vsel %vm450, %v409, 0
        %v1024 = vsel %vm450, %v410, 0
        %v1027 = vsel %vm475, %v1001, 0
        %1029 = vmatprep.subr.mxu0 0.0
        %1030 = vmatpush1.msra.mxu0 0.0
        %1031 = vmatprep.subr.mxu0 0.0
        %1032 = vmatpush1.msra.mxu0 0.0
        %1033 = vmatprep.subr.mxu0 0.0
        %1034 = vmatpush1.msra.mxu0 0.0
        %1035 = vmatprep.subr.mxu0 0.0
        %1036 = vmatpush1.msra.mxu0 0.0
        %1037 = vmatprep.subr.mxu0 0.0
        %1038 = vmatpush1.msra.mxu0 0.0
        %1039 = vmatprep.subr.mxu0 0.0
        %1040 = vmatpush1.msra.mxu0 0.0
        %1041 = vmatprep.subr.mxu0 0.0
        %1042 = vmatpush1.msra.mxu0 0.0
        %1043 = vmatprep.subr.mxu0 0.0
        %1044 = vmatpush1.msra.mxu0 0.0
        %1045 = vmatprep.subr.mxu0 0.0
        %1046 = vmatpush1.msra.mxu0 0.0
        %1047 = vmatprep.subr.mxu0 0.0
        %1048 = vmatpush1.msra.mxu0 0.0
        %1049 = vmatprep.subr.mxu0 0.0
        %1050 = vmatpush1.msra.mxu0 0.0
        %1051 = vmatprep.subr.mxu0 0.0
        %1052 = vmatpush1.msra.mxu0 0.0
        %1053 = vmatprep.subr.mxu0 0.0
        %1054 = vmatpush1.msra.mxu0 0.0
        %1055 = vmatprep.subr.mxu0 0.0
        %1056 = vmatpush1.msra.mxu0 0.0
        %1057 = vmatprep.subr.mxu0 0.0
        %1058 = vmatpush1.msra.mxu0 0.0
        %1059 = vmatprep.subr.mxu0 0.0
        %1060 = vmatpush1.msra.mxu0 %v1027
        %1061 = vmatprep.subr.mxu0 0.0
        %1062 = vmatpush2.msra.mxu0 0.0
        %1063 = vmatprep.subr.mxu0 0.0
        %1064 = vmatpush2.msra.mxu0 0.0
        %1065 = vmatprep.subr.mxu0 0.0
        %1066 = vmatpush2.msra.mxu0 0.0
        %1067 = vmatprep.subr.mxu0 0.0
        %1068 = vmatpush2.msra.mxu0 0.0
        %1069 = vmatprep.subr.mxu0 0.0
        %1070 = vmatpush2.msra.mxu0 0.0
        %1071 = vmatprep.subr.mxu0 0.0
        %1072 = vmatpush2.msra.mxu0 0.0
        %1073 = vmatprep.subr.mxu0 0.0
        %1074 = vmatpush2.msra.mxu0 0.0
        %1075 = vmatprep.subr.mxu0 0.0
        %1076 = vmatpush2.msra.mxu0 0.0
        %1077 = vmatprep.subr.mxu0 0.0
        %1078 = vmatpush2.msra.mxu0 0.0
        %1079 = vmatprep.subr.mxu0 0.0
        %1080 = vmatpush2.msra.mxu0 0.0
        %1081 = vmatprep.subr.mxu0 0.0
        %1082 = vmatpush2.msra.mxu0 0.0
        %1083 = vmatprep.subr.mxu0 0.0
        %1084 = vmatpush2.msra.mxu0 0.0
        %1085 = vmatprep.subr.mxu0 0.0
        %1086 = vmatpush2.msra.mxu0 0.0
        %1087 = vmatprep.subr.mxu0 0.0
        %1088 = vmatpush2.msra.mxu0 0.0
        %1089 = vmatprep.subr.mxu0 0.0
        %1090 = vmatpush2.msra.mxu0 0.0
        %1091 = vmatprep.subr.mxu0 0.0
        %1092 = vmatpush2.msra.mxu0 0.0
        %1093 = vmatprep.mubr.f32.mxu0 0.0
        %1094 = vmatmul.mubr.f32.gmra.mxu0 %v1003
        %v1095 = vpop.f32.mrf.mxu0
        %v1096 = vadd.f32 0.0, %v1095
        %v1097 = vpop.f32.mrf.mxu0
        %1098 = vmatprep.mubr.f32.mxu0 0.0
        %1099 = vmatmul.mubr.f32.gmra.mxu0 %v1006
        %v1100 = vpop.f32.mrf.mxu0
        %v1101 = vadd.f32 0.0, %v1100
        %v1102 = vpop.f32.mrf.mxu0
        %1103 = vmatprep.mubr.f32.mxu0 0.0
        %1104 = vmatmul.mubr.f32.gmra.mxu0 %v1009
        %v1105 = vpop.f32.mrf.mxu0
        %v1106 = vadd.f32 0.0, %v1105
        %v1107 = vpop.f32.mrf.mxu0
        %1108 = vmatprep.mubr.f32.mxu0 0.0
        %1109 = vmatmul.mubr.f32.gmra.mxu0 %v1012
        %v1110 = vpop.f32.mrf.mxu0
        %v1111 = vadd.f32 0.0, %v1110
        %v1112 = vpop.f32.mrf.mxu0
        %1113 = vmatprep.mubr.f32.mxu0 0.0
        %1114 = vmatmul.mubr.f32.gmra.mxu0 %v1015
        %v1115 = vpop.f32.mrf.mxu0
        %v1116 = vadd.f32 0.0, %v1115
        %v1117 = vpop.f32.mrf.mxu0
        %1118 = vmatprep.mubr.f32.mxu0 0.0
        %1119 = vmatmul.mubr.f32.gmra.mxu0 %v1018
        %v1120 = vpop.f32.mrf.mxu0
        %v1121 = vadd.f32 0.0, %v1120
        %v1122 = vpop.f32.mrf.mxu0
        %1123 = vmatprep.mubr.f32.mxu0 0.0
        %1124 = vmatmul.mubr.f32.gmra.mxu0 %v1021
        %v1125 = vpop.f32.mrf.mxu0
        %v1126 = vadd.f32 0.0, %v1125
        %v1127 = vpop.f32.mrf.mxu0
        %1128 = vmatprep.mubr.f32.mxu0 0.0
        %1129 = vmatmul.mubr.f32.gmra.mxu0 %v1024
        %v1130 = vpop.f32.mrf.mxu0
        %v1131 = vadd.f32 0.0, %v1130
        %v1132 = vpop.f32.mrf.mxu0
        %1133 = vdwg.mxu0
        %v1134 = vadd.f32 %v992, %v1096
        %v1135 = vadd.f32 %v993, %v1101
        %v1136 = vadd.f32 %v994, %v1106
        %v1137 = vadd.f32 %v995, %v1111
        %v1138 = vadd.f32 %v996, %v1116
        %v1139 = vadd.f32 %v997, %v1121
        %v1140 = vadd.f32 %v998, %v1126
        %v1141 = vadd.f32 %v999, %v1131
        %s1142 = scalar_lea.vmem %s360, 20
        %v1143 = vld [vmem:[%s1142] sm:$0xf]
        %v1145 = vsel %vm450, %v411, 0
        %v1148 = vsel %vm450, %v412, 0
        %v1151 = vsel %vm450, %v413, 0
        %v1154 = vsel %vm450, %v414, 0
        %v1157 = vsel %vm450, %v415, 0
        %v1160 = vsel %vm450, %v416, 0
        %v1163 = vsel %vm450, %v417, 0
        %v1166 = vsel %vm450, %v418, 0
        %v1169 = vsel %vm475, %v1143, 0
        %1171 = vmatprep.subr.mxu0 0.0
        %1172 = vmatpush1.msra.mxu0 0.0
        %1173 = vmatprep.subr.mxu0 0.0
        %1174 = vmatpush1.msra.mxu0 0.0
        %1175 = vmatprep.subr.mxu0 0.0
        %1176 = vmatpush1.msra.mxu0 0.0
        %1177 = vmatprep.subr.mxu0 0.0
        %1178 = vmatpush1.msra.mxu0 0.0
        %1179 = vmatprep.subr.mxu0 0.0
        %1180 = vmatpush1.msra.mxu0 0.0
        %1181 = vmatprep.subr.mxu0 0.0
        %1182 = vmatpush1.msra.mxu0 0.0
        %1183 = vmatprep.subr.mxu0 0.0
        %1184 = vmatpush1.msra.mxu0 0.0
        %1185 = vmatprep.subr.mxu0 0.0
        %1186 = vmatpush1.msra.mxu0 0.0
        %1187 = vmatprep.subr.mxu0 0.0
        %1188 = vmatpush1.msra.mxu0 0.0
        %1189 = vmatprep.subr.mxu0 0.0
        %1190 = vmatpush1.msra.mxu0 0.0
        %1191 = vmatprep.subr.mxu0 0.0
        %1192 = vmatpush1.msra.mxu0 0.0
        %1193 = vmatprep.subr.mxu0 0.0
        %1194 = vmatpush1.msra.mxu0 0.0
        %1195 = vmatprep.subr.mxu0 0.0
        %1196 = vmatpush1.msra.mxu0 0.0
        %1197 = vmatprep.subr.mxu0 0.0
        %1198 = vmatpush1.msra.mxu0 0.0
        %1199 = vmatprep.subr.mxu0 0.0
        %1200 = vmatpush1.msra.mxu0 0.0
        %1201 = vmatprep.subr.mxu0 0.0
        %1202 = vmatpush1.msra.mxu0 %v1169
        %1203 = vmatprep.subr.mxu0 0.0
        %1204 = vmatpush2.msra.mxu0 0.0
        %1205 = vmatprep.subr.mxu0 0.0
        %1206 = vmatpush2.msra.mxu0 0.0
        %1207 = vmatprep.subr.mxu0 0.0
        %1208 = vmatpush2.msra.mxu0 0.0
        %1209 = vmatprep.subr.mxu0 0.0
        %1210 = vmatpush2.msra.mxu0 0.0
        %1211 = vmatprep.subr.mxu0 0.0
        %1212 = vmatpush2.msra.mxu0 0.0
        %1213 = vmatprep.subr.mxu0 0.0
        %1214 = vmatpush2.msra.mxu0 0.0
        %1215 = vmatprep.subr.mxu0 0.0
        %1216 = vmatpush2.msra.mxu0 0.0
        %1217 = vmatprep.subr.mxu0 0.0
        %1218 = vmatpush2.msra.mxu0 0.0
        %1219 = vmatprep.subr.mxu0 0.0
        %1220 = vmatpush2.msra.mxu0 0.0
        %1221 = vmatprep.subr.mxu0 0.0
        %1222 = vmatpush2.msra.mxu0 0.0
        %1223 = vmatprep.subr.mxu0 0.0
        %1224 = vmatpush2.msra.mxu0 0.0
        %1225 = vmatprep.subr.mxu0 0.0
        %1226 = vmatpush2.msra.mxu0 0.0
        %1227 = vmatprep.subr.mxu0 0.0
        %1228 = vmatpush2.msra.mxu0 0.0
        %1229 = vmatprep.subr.mxu0 0.0
        %1230 = vmatpush2.msra.mxu0 0.0
        %1231 = vmatprep.subr.mxu0 0.0
        %1232 = vmatpush2.msra.mxu0 0.0
        %1233 = vmatprep.subr.mxu0 0.0
        %1234 = vmatpush2.msra.mxu0 0.0
        %1235 = vmatprep.mubr.f32.mxu0 0.0
        %1236 = vmatmul.mubr.f32.gmra.mxu0 %v1145
        %v1237 = vpop.f32.mrf.mxu0
        %v1238 = vadd.f32 0.0, %v1237
        %v1239 = vpop.f32.mrf.mxu0
        %1240 = vmatprep.mubr.f32.mxu0 0.0
        %1241 = vmatmul.mubr.f32.gmra.mxu0 %v1148
        %v1242 = vpop.f32.mrf.mxu0
        %v1243 = vadd.f32 0.0, %v1242
        %v1244 = vpop.f32.mrf.mxu0
        %1245 = vmatprep.mubr.f32.mxu0 0.0
        %1246 = vmatmul.mubr.f32.gmra.mxu0 %v1151
        %v1247 = vpop.f32.mrf.mxu0
        %v1248 = vadd.f32 0.0, %v1247
        %v1249 = vpop.f32.mrf.mxu0
        %1250 = vmatprep.mubr.f32.mxu0 0.0
        %1251 = vmatmul.mubr.f32.gmra.mxu0 %v1154
        %v1252 = vpop.f32.mrf.mxu0
        %v1253 = vadd.f32 0.0, %v1252
        %v1254 = vpop.f32.mrf.mxu0
        %1255 = vmatprep.mubr.f32.mxu0 0.0
        %1256 = vmatmul.mubr.f32.gmra.mxu0 %v1157
        %v1257 = vpop.f32.mrf.mxu0
        %v1258 = vadd.f32 0.0, %v1257
        %v1259 = vpop.f32.mrf.mxu0
        %1260 = vmatprep.mubr.f32.mxu0 0.0
        %1261 = vmatmul.mubr.f32.gmra.mxu0 %v1160
        %v1262 = vpop.f32.mrf.mxu0
        %v1263 = vadd.f32 0.0, %v1262
        %v1264 = vpop.f32.mrf.mxu0
        %1265 = vmatprep.mubr.f32.mxu0 0.0
        %1266 = vmatmul.mubr.f32.gmra.mxu0 %v1163
        %v1267 = vpop.f32.mrf.mxu0
        %v1268 = vadd.f32 0.0, %v1267
        %v1269 = vpop.f32.mrf.mxu0
        %1270 = vmatprep.mubr.f32.mxu0 0.0
        %1271 = vmatmul.mubr.f32.gmra.mxu0 %v1166
        %v1272 = vpop.f32.mrf.mxu0
        %v1273 = vadd.f32 0.0, %v1272
        %v1274 = vpop.f32.mrf.mxu0
        %1275 = vdwg.mxu0
        %v1276 = vadd.f32 %v1134, %v1238
        %v1277 = vadd.f32 %v1135, %v1243
        %v1278 = vadd.f32 %v1136, %v1248
        %v1279 = vadd.f32 %v1137, %v1253
        %v1280 = vadd.f32 %v1138, %v1258
        %v1281 = vadd.f32 %v1139, %v1263
        %v1282 = vadd.f32 %v1140, %v1268
        %v1283 = vadd.f32 %v1141, %v1273
        %s1284 = scalar_lea.vmem %s360, 24
        %v1285 = vld [vmem:[%s1284] sm:$0xf]
        %v1287 = vsel %vm450, %v422, 0
        %v1290 = vsel %vm450, %v423, 0
        %v1293 = vsel %vm450, %v424, 0
        %v1296 = vsel %vm450, %v425, 0
        %v1299 = vsel %vm450, %v426, 0
        %v1302 = vsel %vm450, %v427, 0
        %v1305 = vsel %vm450, %v428, 0
        %v1308 = vsel %vm450, %v429, 0
        %v1311 = vsel %vm475, %v1285, 0
        %1313 = vmatprep.subr.mxu0 0.0
        %1314 = vmatpush1.msra.mxu0 0.0
        %1315 = vmatprep.subr.mxu0 0.0
        %1316 = vmatpush1.msra.mxu0 0.0
        %1317 = vmatprep.subr.mxu0 0.0
        %1318 = vmatpush1.msra.mxu0 0.0
        %1319 = vmatprep.subr.mxu0 0.0
        %1320 = vmatpush1.msra.mxu0 0.0
        %1321 = vmatprep.subr.mxu0 0.0
        %1322 = vmatpush1.msra.mxu0 0.0
        %1323 = vmatprep.subr.mxu0 0.0
        %1324 = vmatpush1.msra.mxu0 0.0
        %1325 = vmatprep.subr.mxu0 0.0
        %1326 = vmatpush1.msra.mxu0 0.0
        %1327 = vmatprep.subr.mxu0 0.0
        %1328 = vmatpush1.msra.mxu0 0.0
        %1329 = vmatprep.subr.mxu0 0.0
        %1330 = vmatpush1.msra.mxu0 0.0
        %1331 = vmatprep.subr.mxu0 0.0
        %1332 = vmatpush1.msra.mxu0 0.0
        %1333 = vmatprep.subr.mxu0 0.0
        %1334 = vmatpush1.msra.mxu0 0.0
        %1335 = vmatprep.subr.mxu0 0.0
        %1336 = vmatpush1.msra.mxu0 0.0
        %1337 = vmatprep.subr.mxu0 0.0
        %1338 = vmatpush1.msra.mxu0 0.0
        %1339 = vmatprep.subr.mxu0 0.0
        %1340 = vmatpush1.msra.mxu0 0.0
        %1341 = vmatprep.subr.mxu0 0.0
        %1342 = vmatpush1.msra.mxu0 0.0
        %1343 = vmatprep.subr.mxu0 0.0
        %1344 = vmatpush1.msra.mxu0 %v1311
        %1345 = vmatprep.subr.mxu0 0.0
        %1346 = vmatpush2.msra.mxu0 0.0
        %1347 = vmatprep.subr.mxu0 0.0
        %1348 = vmatpush2.msra.mxu0 0.0
        %1349 = vmatprep.subr.mxu0 0.0
        %1350 = vmatpush2.msra.mxu0 0.0
        %1351 = vmatprep.subr.mxu0 0.0
        %1352 = vmatpush2.msra.mxu0 0.0
        %1353 = vmatprep.subr.mxu0 0.0
        %1354 = vmatpush2.msra.mxu0 0.0
        %1355 = vmatprep.subr.mxu0 0.0
        %1356 = vmatpush2.msra.mxu0 0.0
        %1357 = vmatprep.subr.mxu0 0.0
        %1358 = vmatpush2.msra.mxu0 0.0
        %1359 = vmatprep.subr.mxu0 0.0
        %1360 = vmatpush2.msra.mxu0 0.0
        %1361 = vmatprep.subr.mxu0 0.0
        %1362 = vmatpush2.msra.mxu0 0.0
        %1363 = vmatprep.subr.mxu0 0.0
        %1364 = vmatpush2.msra.mxu0 0.0
        %1365 = vmatprep.subr.mxu0 0.0
        %1366 = vmatpush2.msra.mxu0 0.0
        %1367 = vmatprep.subr.mxu0 0.0
        %1368 = vmatpush2.msra.mxu0 0.0
        %1369 = vmatprep.subr.mxu0 0.0
        %1370 = vmatpush2.msra.mxu0 0.0
        %1371 = vmatprep.subr.mxu0 0.0
        %1372 = vmatpush2.msra.mxu0 0.0
        %1373 = vmatprep.subr.mxu0 0.0
        %1374 = vmatpush2.msra.mxu0 0.0
        %1375 = vmatprep.subr.mxu0 0.0
        %1376 = vmatpush2.msra.mxu0 0.0
        %1377 = vmatprep.mubr.f32.mxu0 0.0
        %1378 = vmatmul.mubr.f32.gmra.mxu0 %v1287
        %v1379 = vpop.f32.mrf.mxu0
        %v1380 = vadd.f32 0.0, %v1379
        %v1381 = vpop.f32.mrf.mxu0
        %1382 = vmatprep.mubr.f32.mxu0 0.0
        %1383 = vmatmul.mubr.f32.gmra.mxu0 %v1290
        %v1384 = vpop.f32.mrf.mxu0
        %v1385 = vadd.f32 0.0, %v1384
        %v1386 = vpop.f32.mrf.mxu0
        %1387 = vmatprep.mubr.f32.mxu0 0.0
        %1388 = vmatmul.mubr.f32.gmra.mxu0 %v1293
        %v1389 = vpop.f32.mrf.mxu0
        %v1390 = vadd.f32 0.0, %v1389
        %v1391 = vpop.f32.mrf.mxu0
        %1392 = vmatprep.mubr.f32.mxu0 0.0
        %1393 = vmatmul.mubr.f32.gmra.mxu0 %v1296
        %v1394 = vpop.f32.mrf.mxu0
        %v1395 = vadd.f32 0.0, %v1394
        %v1396 = vpop.f32.mrf.mxu0
        %1397 = vmatprep.mubr.f32.mxu0 0.0
        %1398 = vmatmul.mubr.f32.gmra.mxu0 %v1299
        %v1399 = vpop.f32.mrf.mxu0
        %v1400 = vadd.f32 0.0, %v1399
        %v1401 = vpop.f32.mrf.mxu0
        %1402 = vmatprep.mubr.f32.mxu0 0.0
        %1403 = vmatmul.mubr.f32.gmra.mxu0 %v1302
        %v1404 = vpop.f32.mrf.mxu0
        %v1405 = vadd.f32 0.0, %v1404
        %v1406 = vpop.f32.mrf.mxu0
        %1407 = vmatprep.mubr.f32.mxu0 0.0
        %1408 = vmatmul.mubr.f32.gmra.mxu0 %v1305
        %v1409 = vpop.f32.mrf.mxu0
        %v1410 = vadd.f32 0.0, %v1409
        %v1411 = vpop.f32.mrf.mxu0
        %1412 = vmatprep.mubr.f32.mxu0 0.0
        %1413 = vmatmul.mubr.f32.gmra.mxu0 %v1308
        %v1414 = vpop.f32.mrf.mxu0
        %v1415 = vadd.f32 0.0, %v1414
        %v1416 = vpop.f32.mrf.mxu0
        %1417 = vdwg.mxu0
        %v1418 = vadd.f32 %v1276, %v1380
        %v1419 = vadd.f32 %v1277, %v1385
        %v1420 = vadd.f32 %v1278, %v1390
        %v1421 = vadd.f32 %v1279, %v1395
        %v1422 = vadd.f32 %v1280, %v1400
        %v1423 = vadd.f32 %v1281, %v1405
        %v1424 = vadd.f32 %v1282, %v1410
        %v1425 = vadd.f32 %v1283, %v1415
        %s1426 = scalar_lea.vmem %s360, 28
        %v1427 = vld [vmem:[%s1426] sm:$0xf]
        %v1429 = vsel %vm450, %v431, 0
        %v1432 = vsel %vm450, %v432, 0
        %v1435 = vsel %vm450, %v433, 0
        %v1438 = vsel %vm450, %v434, 0
        %v1441 = vsel %vm450, %v435, 0
        %v1444 = vsel %vm450, %v436, 0
        %v1447 = vsel %vm450, %v437, 0
        %v1450 = vsel %vm450, %v438, 0
        %v1453 = vsel %vm475, %v1427, 0
        %1455 = vmatprep.subr.mxu0 0.0
        %1456 = vmatpush1.msra.mxu0 0.0
        %1457 = vmatprep.subr.mxu0 0.0
        %1458 = vmatpush1.msra.mxu0 0.0
        %1459 = vmatprep.subr.mxu0 0.0
        %1460 = vmatpush1.msra.mxu0 0.0
        %1461 = vmatprep.subr.mxu0 0.0
        %1462 = vmatpush1.msra.mxu0 0.0
        %1463 = vmatprep.subr.mxu0 0.0
        %1464 = vmatpush1.msra.mxu0 0.0
        %1465 = vmatprep.subr.mxu0 0.0
        %1466 = vmatpush1.msra.mxu0 0.0
        %1467 = vmatprep.subr.mxu0 0.0
        %1468 = vmatpush1.msra.mxu0 0.0
        %1469 = vmatprep.subr.mxu0 0.0
        %1470 = vmatpush1.msra.mxu0 0.0
        %1471 = vmatprep.subr.mxu0 0.0
        %1472 = vmatpush1.msra.mxu0 0.0
        %1473 = vmatprep.subr.mxu0 0.0
        %1474 = vmatpush1.msra.mxu0 0.0
        %1475 = vmatprep.subr.mxu0 0.0
        %1476 = vmatpush1.msra.mxu0 0.0
        %1477 = vmatprep.subr.mxu0 0.0
        %1478 = vmatpush1.msra.mxu0 0.0
        %1479 = vmatprep.subr.mxu0 0.0
        %1480 = vmatpush1.msra.mxu0 0.0
        %1481 = vmatprep.subr.mxu0 0.0
        %1482 = vmatpush1.msra.mxu0 0.0
        %1483 = vmatprep.subr.mxu0 0.0
        %1484 = vmatpush1.msra.mxu0 0.0
        %1485 = vmatprep.subr.mxu0 0.0
        %1486 = vmatpush1.msra.mxu0 %v1453
        %1487 = vmatprep.subr.mxu0 0.0
        %1488 = vmatpush2.msra.mxu0 0.0
        %1489 = vmatprep.subr.mxu0 0.0
        %1490 = vmatpush2.msra.mxu0 0.0
        %1491 = vmatprep.subr.mxu0 0.0
        %1492 = vmatpush2.msra.mxu0 0.0
        %1493 = vmatprep.subr.mxu0 0.0
        %1494 = vmatpush2.msra.mxu0 0.0
        %1495 = vmatprep.subr.mxu0 0.0
        %1496 = vmatpush2.msra.mxu0 0.0
        %1497 = vmatprep.subr.mxu0 0.0
        %1498 = vmatpush2.msra.mxu0 0.0
        %1499 = vmatprep.subr.mxu0 0.0
        %1500 = vmatpush2.msra.mxu0 0.0
        %1501 = vmatprep.subr.mxu0 0.0
        %1502 = vmatpush2.msra.mxu0 0.0
        %1503 = vmatprep.subr.mxu0 0.0
        %1504 = vmatpush2.msra.mxu0 0.0
        %1505 = vmatprep.subr.mxu0 0.0
        %1506 = vmatpush2.msra.mxu0 0.0
        %1507 = vmatprep.subr.mxu0 0.0
        %1508 = vmatpush2.msra.mxu0 0.0
        %1509 = vmatprep.subr.mxu0 0.0
        %1510 = vmatpush2.msra.mxu0 0.0
        %1511 = vmatprep.subr.mxu0 0.0
        %1512 = vmatpush2.msra.mxu0 0.0
        %1513 = vmatprep.subr.mxu0 0.0
        %1514 = vmatpush2.msra.mxu0 0.0
        %1515 = vmatprep.subr.mxu0 0.0
        %1516 = vmatpush2.msra.mxu0 0.0
        %1517 = vmatprep.subr.mxu0 0.0
        %1518 = vmatpush2.msra.mxu0 0.0
        %1519 = vmatprep.mubr.f32.mxu0 0.0
        %1520 = vmatmul.mubr.f32.gmra.mxu0 %v1429
        %v1521 = vpop.f32.mrf.mxu0
        %v1522 = vadd.f32 0.0, %v1521
        %v1523 = vpop.f32.mrf.mxu0
        %1524 = vmatprep.mubr.f32.mxu0 0.0
        %1525 = vmatmul.mubr.f32.gmra.mxu0 %v1432
        %v1526 = vpop.f32.mrf.mxu0
        %v1527 = vadd.f32 0.0, %v1526
        %v1528 = vpop.f32.mrf.mxu0
        %1529 = vmatprep.mubr.f32.mxu0 0.0
        %1530 = vmatmul.mubr.f32.gmra.mxu0 %v1435
        %v1531 = vpop.f32.mrf.mxu0
        %v1532 = vadd.f32 0.0, %v1531
        %v1533 = vpop.f32.mrf.mxu0
        %1534 = vmatprep.mubr.f32.mxu0 0.0
        %1535 = vmatmul.mubr.f32.gmra.mxu0 %v1438
        %v1536 = vpop.f32.mrf.mxu0
        %v1537 = vadd.f32 0.0, %v1536
        %v1538 = vpop.f32.mrf.mxu0
        %1539 = vmatprep.mubr.f32.mxu0 0.0
        %1540 = vmatmul.mubr.f32.gmra.mxu0 %v1441
        %v1541 = vpop.f32.mrf.mxu0
        %v1542 = vadd.f32 0.0, %v1541
        %v1543 = vpop.f32.mrf.mxu0
        %1544 = vmatprep.mubr.f32.mxu0 0.0
        %1545 = vmatmul.mubr.f32.gmra.mxu0 %v1444
        %v1546 = vpop.f32.mrf.mxu0
        %v1547 = vadd.f32 0.0, %v1546
        %v1548 = vpop.f32.mrf.mxu0
        %1549 = vmatprep.mubr.f32.mxu0 0.0
        %1550 = vmatmul.mubr.f32.gmra.mxu0 %v1447
        %v1551 = vpop.f32.mrf.mxu0
        %v1552 = vadd.f32 0.0, %v1551
        %v1553 = vpop.f32.mrf.mxu0
        %1554 = vmatprep.mubr.f32.mxu0 0.0
        %1555 = vmatmul.mubr.f32.gmra.mxu0 %v1450
        %v1556 = vpop.f32.mrf.mxu0
        %v1557 = vadd.f32 0.0, %v1556
        %v1558 = vpop.f32.mrf.mxu0
        %1559 = vdwg.mxu0
        %v1560 = vadd.f32 %v1418, %v1522
        %v1561 = vadd.f32 %v1419, %v1527
        %v1562 = vadd.f32 %v1420, %v1532
        %v1563 = vadd.f32 %v1421, %v1537
        %v1564 = vadd.f32 %v1422, %v1542
        %v1565 = vadd.f32 %v1423, %v1547
        %v1566 = vadd.f32 %v1424, %v1552
        %v1567 = vadd.f32 %v1425, %v1557
        %s1568 = scalar_lea.vmem %s360, 32
        %v1569 = vld [vmem:[%s1568] sm:$0xf]
        %v1571 = vsel %vm450, %v439, 0
        %v1574 = vsel %vm450, %v440, 0
        %v1577 = vsel %vm450, %v441, 0
        %v1580 = vsel %vm450, %v442, 0
        %v1583 = vsel %vm450, %v443, 0
        %v1586 = vsel %vm450, %v444, 0
        %v1589 = vsel %vm450, %v445, 0
        %v1592 = vsel %vm450, %v446, 0
        %v1595 = vsel %vm475, %v1569, 0
        %1597 = vmatprep.subr.mxu0 0.0
        %1598 = vmatpush1.msra.mxu0 0.0
        %1599 = vmatprep.subr.mxu0 0.0
        %1600 = vmatpush1.msra.mxu0 0.0
        %1601 = vmatprep.subr.mxu0 0.0
        %1602 = vmatpush1.msra.mxu0 0.0
        %1603 = vmatprep.subr.mxu0 0.0
        %1604 = vmatpush1.msra.mxu0 0.0
        %1605 = vmatprep.subr.mxu0 0.0
        %1606 = vmatpush1.msra.mxu0 0.0
        %1607 = vmatprep.subr.mxu0 0.0
        %1608 = vmatpush1.msra.mxu0 0.0
        %1609 = vmatprep.subr.mxu0 0.0
        %1610 = vmatpush1.msra.mxu0 0.0
        %1611 = vmatprep.subr.mxu0 0.0
        %1612 = vmatpush1.msra.mxu0 0.0
        %1613 = vmatprep.subr.mxu0 0.0
        %1614 = vmatpush1.msra.mxu0 0.0
        %1615 = vmatprep.subr.mxu0 0.0
        %1616 = vmatpush1.msra.mxu0 0.0
        %1617 = vmatprep.subr.mxu0 0.0
        %1618 = vmatpush1.msra.mxu0 0.0
        %1619 = vmatprep.subr.mxu0 0.0
        %1620 = vmatpush1.msra.mxu0 0.0
        %1621 = vmatprep.subr.mxu0 0.0
        %1622 = vmatpush1.msra.mxu0 0.0
        %1623 = vmatprep.subr.mxu0 0.0
        %1624 = vmatpush1.msra.mxu0 0.0
        %1625 = vmatprep.subr.mxu0 0.0
        %1626 = vmatpush1.msra.mxu0 0.0
        %1627 = vmatprep.subr.mxu0 0.0
        %1628 = vmatpush1.msra.mxu0 %v1595
        %1629 = vmatprep.subr.mxu0 0.0
        %1630 = vmatpush2.msra.mxu0 0.0
        %1631 = vmatprep.subr.mxu0 0.0
        %1632 = vmatpush2.msra.mxu0 0.0
        %1633 = vmatprep.subr.mxu0 0.0
        %1634 = vmatpush2.msra.mxu0 0.0
        %1635 = vmatprep.subr.mxu0 0.0
        %1636 = vmatpush2.msra.mxu0 0.0
        %1637 = vmatprep.subr.mxu0 0.0
        %1638 = vmatpush2.msra.mxu0 0.0
        %1639 = vmatprep.subr.mxu0 0.0
        %1640 = vmatpush2.msra.mxu0 0.0
        %1641 = vmatprep.subr.mxu0 0.0
        %1642 = vmatpush2.msra.mxu0 0.0
        %1643 = vmatprep.subr.mxu0 0.0
        %1644 = vmatpush2.msra.mxu0 0.0
        %1645 = vmatprep.subr.mxu0 0.0
        %1646 = vmatpush2.msra.mxu0 0.0
        %1647 = vmatprep.subr.mxu0 0.0
        %1648 = vmatpush2.msra.mxu0 0.0
        %1649 = vmatprep.subr.mxu0 0.0
        %1650 = vmatpush2.msra.mxu0 0.0
        %1651 = vmatprep.subr.mxu0 0.0
        %1652 = vmatpush2.msra.mxu0 0.0
        %1653 = vmatprep.subr.mxu0 0.0
        %1654 = vmatpush2.msra.mxu0 0.0
        %1655 = vmatprep.subr.mxu0 0.0
        %1656 = vmatpush2.msra.mxu0 0.0
        %1657 = vmatprep.subr.mxu0 0.0
        %1658 = vmatpush2.msra.mxu0 0.0
        %1659 = vmatprep.subr.mxu0 0.0
        %1660 = vmatpush2.msra.mxu0 0.0
        %1661 = vmatprep.mubr.f32.mxu0 0.0
        %1662 = vmatmul.mubr.f32.gmra.mxu0 %v1571
        %v1663 = vpop.f32.mrf.mxu0
        %v1664 = vadd.f32 0.0, %v1663
        %v1665 = vpop.f32.mrf.mxu0
        %1666 = vmatprep.mubr.f32.mxu0 0.0
        %1667 = vmatmul.mubr.f32.gmra.mxu0 %v1574
        %v1668 = vpop.f32.mrf.mxu0
        %v1669 = vadd.f32 0.0, %v1668
        %v1670 = vpop.f32.mrf.mxu0
        %1671 = vmatprep.mubr.f32.mxu0 0.0
        %1672 = vmatmul.mubr.f32.gmra.mxu0 %v1577
        %v1673 = vpop.f32.mrf.mxu0
        %v1674 = vadd.f32 0.0, %v1673
        %v1675 = vpop.f32.mrf.mxu0
        %1676 = vmatprep.mubr.f32.mxu0 0.0
        %1677 = vmatmul.mubr.f32.gmra.mxu0 %v1580
        %v1678 = vpop.f32.mrf.mxu0
        %v1679 = vadd.f32 0.0, %v1678
        %v1680 = vpop.f32.mrf.mxu0
        %1681 = vmatprep.mubr.f32.mxu0 0.0
        %1682 = vmatmul.mubr.f32.gmra.mxu0 %v1583
        %v1683 = vpop.f32.mrf.mxu0
        %v1684 = vadd.f32 0.0, %v1683
        %v1685 = vpop.f32.mrf.mxu0
        %1686 = vmatprep.mubr.f32.mxu0 0.0
        %1687 = vmatmul.mubr.f32.gmra.mxu0 %v1586
        %v1688 = vpop.f32.mrf.mxu0
        %v1689 = vadd.f32 0.0, %v1688
        %v1690 = vpop.f32.mrf.mxu0
        %1691 = vmatprep.mubr.f32.mxu0 0.0
        %1692 = vmatmul.mubr.f32.gmra.mxu0 %v1589
        %v1693 = vpop.f32.mrf.mxu0
        %v1694 = vadd.f32 0.0, %v1693
        %v1695 = vpop.f32.mrf.mxu0
        %1696 = vmatprep.mubr.f32.mxu0 0.0
        %1697 = vmatmul.mubr.f32.gmra.mxu0 %v1592
        %v1698 = vpop.f32.mrf.mxu0
        %v1699 = vadd.f32 0.0, %v1698
        %v1700 = vpop.f32.mrf.mxu0
        %1701 = vdwg.mxu0
        %v1702 = vadd.f32 %v1560, %v1664
        %v1703 = vadd.f32 %v1561, %v1669
        %v1704 = vadd.f32 %v1562, %v1674
        %v1705 = vadd.f32 %v1563, %v1679
        %v1706 = vadd.f32 %v1564, %v1684
        %v1707 = vadd.f32 %v1565, %v1689
        %v1708 = vadd.f32 %v1566, %v1694
        %v1709 = vadd.f32 %v1567, %v1699
        %v1710 = vld [vmem:[%s363] sm:$0x1]
        %v1712 = vlaneseq
        %v1713 = vshrl.u32 %v1712, 7
        %v1714 = vsub.s32 0, %v1713
        %v1715 = vrot.slane %v1710, %v1714
        %v1717 = vadd.f32 %v1702, %v1715
        %v1718 = vadd.f32 %v1703, %v1715
        %v1719 = vadd.f32 %v1704, %v1715
        %v1720 = vadd.f32 %v1705, %v1715
        %v1721 = vadd.f32 %v1706, %v1715
        %v1722 = vadd.f32 %v1707, %v1715
        %v1723 = vadd.f32 %v1708, %v1715
        %v1724 = vadd.f32 %v1709, %v1715
        %1725 = vst [vmem:[%s336] sm:$0xff] %v1717
        %1726 = vst [vmem:[%s336 + $0x8] sm:$0xff] %v1718
        %1727 = vst [vmem:[%s336 + $0x10] sm:$0xff] %v1719
        %1728 = vst [vmem:[%s336 + $0x18] sm:$0xff] %v1720
        %1729 = vst [vmem:[%s336 + $0x20] sm:$0xff] %v1721
        %1730 = vst [vmem:[%s336 + $0x28] sm:$0xff] %v1722
        %1731 = vst [vmem:[%s336 + $0x30] sm:$0xff] %v1723
        %1732 = vst [vmem:[%s336 + $0x38] sm:$0xff] %v1724
        %s1733 = sand.u32 %s207, 1
        %s1734 = scalar_lea.sflag [#allocation3], %s1733
        %s1735 = sand.u32 %s207, 1
        %s1736 = smul.addr %s1735, 64
        %s1737 = scalar_lea.vmem [#allocation2], %s1736
        // Predicated region
        $region45: #{tpu_custom_call.1} parent=43 // pred_check
          %p1738 = pneg %p217
        $region46: #{tpu_custom_call.1} parent=43 // pred_check_branch
          %1740 = sbr.rel (%p1738) target = $region48
        $region47: #{tpu_custom_call.1} parent=43 // pred_region
          %s1741 = smul.u32 8, %s26
          %s1743 = ssub.s32 1024, 1024
          %1744 = vsyncadd %s1734, %s1743
          %s1745 = sadd.s32 %s27, %s1741
          %s1746 = smul.addr %s25, 8
          %s1747 = sadd.s32 %s1745, %s1746
          %s1748 = smul.addr %s1747, 128
          %s1749 = scalar_lea.hbm %s6, %s1748
          %s1750 = sshll.u32 %s1737, 4
          %s1751 = int_to_ptr.vmem [resolvable:$true] %s1750
          %1756 = dma.vmem_to_hbm [thread:$0]  %s1751, 1024, %s1749, %s1734, 128, 128, 8
        $region48: #{tpu_custom_call.1} parent=43 // pred_fallthru
          _
      $region44: #{tpu_custom_call.1} parent=5 // pred_fallthru
        _
      %p1757 = scmp.le.s32.totalorder 2, %s15
      // Predicated region
      $region49: #{tpu_custom_call.1} parent=5 // pred_check
        %p1758 = pneg %p1757
      $region50: #{tpu_custom_call.1} parent=5 // pred_check_branch
        %1760 = sbr.rel (%p1758) target = $region52
      $region51: #{tpu_custom_call.1} parent=5 // pred_region
        %s1761 = ssub.s32 %s15, 2
        // Predicated region
        $region53: #{tpu_custom_call.1} parent=51 // pred_check
          %p1762 = pneg %p223
        $region54: #{tpu_custom_call.1} parent=51 // pred_check_branch
          %1764 = sbr.rel (%p1762) target = $region56
        $region55: #{tpu_custom_call.1} parent=51 // pred_region
          %s1765 = sand.u32 %s208, 1
          %s1766 = scalar_lea.sflag [#allocation3], %s1765
          %s1767 = sand.u32 %s208, 1
          %s1768 = smul.addr %s1767, 64
          %s1769 = scalar_lea.vmem [#allocation2], %s1768
          %1770 = dma.done %s1766, 1024
        $region56: #{tpu_custom_call.1} parent=51 // pred_fallthru
          _
      $region52: #{tpu_custom_call.1} parent=5 // pred_fallthru
        _
    $region6: #{tpu_custom_call.1} parent=1 // loop_footer
      %s19 = sadd.s32 1, %s15
    $region7: #{tpu_custom_call.1} parent=1 // loop_footer_branch
      %14 = sbr.rel target = $region3
    $region8: #{tpu_custom_call.1} parent=1 // loop_exit
      _
    %1771 = vsyncpa [#allocation3], 1
    %s1772 = scalar_lea.sflag [#allocation3], 1
    %1773 = vsyncpa %s1772, 1

// kernel: tpu_custom_call.1
$region0: #{tpu_custom_call.1}
  #allocation0 [shape = 'u32[]', space=smem, size = 0x4, offset = 0x4, fixed_abs, tag = 'smem constant byte address 0x4 - core index']
  #allocation1 [shape = 'u32[144,128]{1,0:T(1,128)}', space=vmem, size = 0x12000, scoped, tag = 'internal scratch']
  %s0 = inlined_call_operand.vmem [shape: f32[2,9,9,4], index: 0, kind: input, shape index: {}]
  %s1 = inlined_call_operand.vmem [shape: f32[2,9,9,4], index: 1, kind: input, shape index: {}]
  %s2 = inlined_call_operand.vmem [shape: f32[2,9,9,4], index: 2, kind: input, shape index: {}]
  %s3 = inlined_call_operand.vmem [shape: f32[2,9,9,4], index: 3, kind: input, shape index: {}]
  %s4 = inlined_call_operand.vmem [shape: f32[9,4,128], index: 4, kind: input, shape index: {}]
  %s5 = inlined_call_operand.vmem [shape: f32[1,128], index: 5, kind: input, shape index: {}]
  %s6 = inlined_call_operand.hbm [shape: f32[2,64,128], index: 6, kind: output, shape index: {}]
  %s7 = sld [smem:[#allocation0]]
  $region57: #{tpu_custom_call.1} parent=0
    _
  %s9 = ssub.s32 1, %s7
  %s10 = scalar_select 0, %s9, %s7
  $region1: #{tpu_custom_call.1} parent=0
    #allocation2 [shape = 'u8[65536]{0}', space=vmem, size = 0x10000, scoped, tag = 'output window, operand 0']
    #allocation3 [shape = 's32[2]{0}', space=sflag, size = 0x8, scoped, tag = 'scoped memory for tpu_custom_call.1']
    %11 = vsyncpa [#allocation3], 0
    %s12 = scalar_lea.sflag [#allocation3], 1
    %13 = vsyncpa %s12, 0
    loop: start=0, step=1, limit=4
    $region2: #{tpu_custom_call.1} parent=1 // loop_pre_header
      _
    $region3: #{tpu_custom_call.1} parent=1 // loop_header
      %s15 = sphi 0, %s19
      %p16 = scmp.ge.s32.totalorder %s15, 4
      %s22 = sphi 0, %s41
      %s23 = sphi 0, %s37
      %s24 = sphi 0, %s33
      %s25 = sphi 0, %s22
      %s26 = sphi 0, %s23
      %s27 = sphi 0, %s24
      %s28 = sphi 0, %s25
      %s29 = sphi 0, %s26
      %s30 = sphi 0, %s27
      %s44 = sphi 0, %s46
      %s47 = sphi 0, %s44
      %s48 = sphi 0, %s47
      %s64 = sphi 0, %s48
      %s70 = sphi 0, %s72
      %s73 = sphi 0, %s70
      %s74 = sphi 0, %s73
      %s90 = sphi 0, %s74
      %s96 = sphi 0, %s98
      %s99 = sphi 0, %s96
      %s100 = sphi 0, %s99
      %s116 = sphi 0, %s100
      %s122 = sphi 0, %s124
      %s125 = sphi 0, %s122
      %s126 = sphi 0, %s125
      %s142 = sphi 0, %s126
      %s148 = sphi 0, %s150
      %s151 = sphi 0, %s148
      %s152 = sphi 0, %s151
      %s168 = sphi 0, %s152
      %s174 = sphi 0, %s176
      %s177 = sphi 0, %s174
      %s178 = sphi 0, %s177
      %s194 = sphi 0, %s178
      %s204 = sphi 0, %s206
      %s207 = sphi 0, %s204
      %s208 = sphi 0, %s207
      %s224 = sphi 0, %s208
    $region4: #{tpu_custom_call.1} parent=1 // loop_header_branch
      %18 = sbr.rel (%p16) target = $region8
    $region5: #{tpu_custom_call.1} parent=1 // loop_body
      %s20 = ssub.s32 %s15, 1
      %s21 = ssub.s32 %s15, 2
      %s31 = sadd.s32 1, %s24
      %p32 = scmp.ge.s32.totalorder %s31, 1
      %s33 = scalar_select %p32, 0, %s31
      %s34 = sadd.s32 1, %s23
      %s35 = scalar_select %p32, %s34, %s23
      %p36 = scmp.ge.s32.totalorder %s35, 1
      %s37 = scalar_select %p36, 0, %s35
      %s38 = sadd.s32 1, %s22
      %s39 = scalar_select %p36, %s38, %s22
      %p40 = scmp.ge.s32.totalorder %s39, 2
      %s41 = scalar_select %p40, 0, %s39
      %s42 = ssub.s32 %s22, %s41
      %p43 = scmp.eq.s32.totalorder %s42, 0
      %s45 = sadd.s32 %s44, 1
      %s46 = scalar_select %p43, %s44, %s45
      %p49 = pneg %p43
      %p50 = scmp.eq.s32.totalorder %s15, 1
      %p51 = por %p49, %p50
      %p52 = scmp.ne.s32.totalorder %s44, %s47
      %p53 = scmp.eq.s32.totalorder %s15, 0
      %p54 = por %p52, %p53
      %p55 = scmp.ne.s32.totalorder %s44, %s47
      %p56 = scmp.eq.s32.totalorder %s20, 1
      %p57 = por %p55, %p56
      %p58 = scmp.ne.s32.totalorder %s47, %s48
      %p59 = scmp.eq.s32.totalorder %s20, 0
      %p60 = por %p58, %p59
      %p61 = scmp.ne.s32.totalorder %s47, %s48
      %p62 = scmp.eq.s32.totalorder %s21, 1
      %p63 = por %p61, %p62
      %p65 = scmp.ne.s32.totalorder %s48, %s64
      %p66 = scmp.eq.s32.totalorder %s21, 0
      %p67 = por %p65, %p66
      %s68 = ssub.s32 %s22, %s41
      %p69 = scmp.eq.s32.totalorder %s68, 0
      %s71 = sadd.s32 %s70, 1
      %s72 = scalar_select %p69, %s70, %s71
      %p75 = pneg %p69
      %p76 = scmp.eq.s32.totalorder %s15, 1
      %p77 = por %p75, %p76
      %p78 = scmp.ne.s32.totalorder %s70, %s73
      %p79 = scmp.eq.s32.totalorder %s15, 0
      %p80 = por %p78, %p79
      %p81 = scmp.ne.s32.totalorder %s70, %s73
      %p82 = scmp.eq.s32.totalorder %s20, 1
      %p83 = por %p81, %p82
      %p84 = scmp.ne.s32.totalorder %s73, %s74
      %p85 = scmp.eq.s32.totalorder %s20, 0
      %p86 = por %p84, %p85
      %p87 = scmp.ne.s32.totalorder %s73, %s74
      %p88 = scmp.eq.s32.totalorder %s21, 1
      %p89 = por %p87, %p88
      %p91 = scmp.ne.s32.totalorder %s74, %s90
      %p92 = scmp.eq.s32.totalorder %s21, 0
      %p93 = por %p91, %p92
      %s94 = ssub.s32 %s22, %s41
      %p95 = scmp.eq.s32.totalorder %s94, 0
      %s97 = sadd.s32 %s96, 1
      %s98 = scalar_select %p95, %s96, %s97
      %p101 = pneg %p95
      %p102 = scmp.eq.s32.totalorder %s15, 1
      %p103 = por %p101, %p102
      %p104 = scmp.ne.s32.totalorder %s96, %s99
      %p105 = scmp.eq.s32.totalorder %s15, 0
      %p106 = por %p104, %p105
      %p107 = scmp.ne.s32.totalorder %s96, %s99
      %p108 = scmp.eq.s32.totalorder %s20, 1
      %p109 = por %p107, %p108
      %p110 = scmp.ne.s32.totalorder %s99, %s100
      %p111 = scmp.eq.s32.totalorder %s20, 0
      %p112 = por %p110, %p111
      %p113 = scmp.ne.s32.totalorder %s99, %s100
      %p114 = scmp.eq.s32.totalorder %s21, 1
      %p115 = por %p113, %p114
      %p117 = scmp.ne.s32.totalorder %s100, %s116
      %p118 = scmp.eq.s32.totalorder %s21, 0
      %p119 = por %p117, %p118
      %s120 = ssub.s32 %s22, %s41
      %p121 = scmp.eq.s32.totalorder %s120, 0
      %s123 = sadd.s32 %s122, 1
      %s124 = scalar_select %p121, %s122, %s123
      %p127 = pneg %p121
      %p128 = scmp.eq.s32.totalorder %s15, 1
      %p129 = por %p127, %p128
      %p130 = scmp.ne.s32.totalorder %s122, %s125
      %p131 = scmp.eq.s32.totalorder %s15, 0
      %p132 = por %p130, %p131
      %p133 = scmp.ne.s32.totalorder %s122, %s125
      %p134 = scmp.eq.s32.totalorder %s20, 1
      %p135 = por %p133, %p134
      %p136 = scmp.ne.s32.totalorder %s125, %s126
      %p137 = scmp.eq.s32.totalorder %s20, 0
      %p138 = por %p136, %p137
      %p139 = scmp.ne.s32.totalorder %s125, %s126
      %p140 = scmp.eq.s32.totalorder %s21, 1
      %p141 = por %p139, %p140
      %p143 = scmp.ne.s32.totalorder %s126, %s142
      %p144 = scmp.eq.s32.totalorder %s21, 0
      %p145 = por %p143, %p144
      %s146 = ssub.s32 %s24, %s33
      %p147 = scmp.eq.s32.totalorder %s146, 0
      %s149 = sadd.s32 %s148, 1
      %s150 = scalar_select %p147, %s148, %s149
      %p153 = pneg %p147
      %p154 = scmp.eq.s32.totalorder %s15, 1
      %p155 = por %p153, %p154
      %p156 = scmp.ne.s32.totalorder %s148, %s151
      %p157 = scmp.eq.s32.totalorder %s15, 0
      %p158 = por %p156, %p157
      %p159 = scmp.ne.s32.totalorder %s148, %s151
      %p160 = scmp.eq.s32.totalorder %s20, 1
      %p161 = por %p159, %p160
      %p162 = scmp.ne.s32.totalorder %s151, %s152
      %p163 = scmp.eq.s32.totalorder %s20, 0
      %p164 = por %p162, %p163
      %p165 = scmp.ne.s32.totalorder %s151, %s152
      %p166 = scmp.eq.s32.totalorder %s21, 1
      %p167 = por %p165, %p166
      %p169 = scmp.ne.s32.totalorder %s152, %s168
      %p170 = scmp.eq.s32.totalorder %s21, 0
      %p171 = por %p169, %p170
      %s172 = ssub.s32 %s24, %s33
      %p173 = scmp.eq.s32.totalorder %s172, 0
      %s175 = sadd.s32 %s174, 1
      %s176 = scalar_select %p173, %s174, %s175
      %p179 = pneg %p173
      %p180 = scmp.eq.s32.totalorder %s15, 1
      %p181 = por %p179, %p180
      %p182 = scmp.ne.s32.totalorder %s174, %s177
      %p183 = scmp.eq.s32.totalorder %s15, 0
      %p184 = por %p182, %p183
      %p185 = scmp.ne.s32.totalorder %s174, %s177
      %p186 = scmp.eq.s32.totalorder %s20, 1
      %p187 = por %p185, %p186
      %p188 = scmp.ne.s32.totalorder %s177, %s178
      %p189 = scmp.eq.s32.totalorder %s20, 0
      %p190 = por %p188, %p189
      %p191 = scmp.ne.s32.totalorder %s177, %s178
      %p192 = scmp.eq.s32.totalorder %s21, 1
      %p193 = por %p191, %p192
      %p195 = scmp.ne.s32.totalorder %s178, %s194
      %p196 = scmp.eq.s32.totalorder %s21, 0
      %p197 = por %p195, %p196
      %s198 = ssub.s32 %s22, %s41
      %s199 = ssub.s32 %s23, %s37
      %s200 = sor.u32 %s198, %s199
      %s201 = ssub.s32 %s24, %s33
      %s202 = sor.u32 %s200, %s201
      %p203 = scmp.eq.s32.totalorder %s202, 0
      %s205 = sadd.s32 %s204, 1
      %s206 = scalar_select %p203, %s204, %s205
      %p209 = pneg %p203
      %p210 = scmp.eq.s32.totalorder %s15, 1
      %p211 = por %p209, %p210
      %p212 = scmp.ne.s32.totalorder %s204, %s207
      %p213 = scmp.eq.s32.totalorder %s15, 0
      %p214 = por %p212, %p213
      %p215 = scmp.ne.s32.totalorder %s204, %s207
      %p216 = scmp.eq.s32.totalorder %s20, 1
      %p217 = por %p215, %p216
      %p218 = scmp.ne.s32.totalorder %s207, %s208
      %p219 = scmp.eq.s32.totalorder %s20, 0
      %p220 = por %p218, %p219
      %p221 = scmp.ne.s32.totalorder %s207, %s208
      %p222 = scmp.eq.s32.totalorder %s21, 1
      %p223 = por %p221, %p222
      %p225 = scmp.ne.s32.totalorder %s208, %s224
      %p226 = scmp.eq.s32.totalorder %s21, 0
      %p227 = por %p225, %p226
      %p228 = scmp.le.s32.totalorder 1, %s15
      %p229 = scmp.lt.s32.totalorder %s15, 3
      %p230 = pnand %p228, %p229
      %p231 = pneg %p230
      // Predicated region
      $region9: #{tpu_custom_call.1} parent=5 // pred_check
        _
      $region10: #{tpu_custom_call.1} parent=5 // pred_check_branch
        %233 = sbr.rel (%p230) target = $region12
      $region11: #{tpu_custom_call.1} parent=5 // pred_region
        %s234 = ssub.s32 %s15, 1
        // Predicated region
        $region13: #{tpu_custom_call.1} parent=11 // pred_check
          %p235 = pneg %p164
        $region14: #{tpu_custom_call.1} parent=11 // pred_check_branch
          %237 = sbr.rel (%p235) target = $region16
        $region15: #{tpu_custom_call.1} parent=11 // pred_region
          %p238 = scmp.lt.s32.totalorder %s27, 0
          %s239 = scalar_select %p238, %s27, 0
          %s240 = smul.addr %s239, 4
          %s241 = scalar_lea.vmem %s4, %s240
        $region16: #{tpu_custom_call.1} parent=11 // pred_fallthru
          _
        // Predicated region
        $region17: #{tpu_custom_call.1} parent=11 // pred_check
          %p242 = pneg %p190
        $region18: #{tpu_custom_call.1} parent=11 // pred_check_branch
          %244 = sbr.rel (%p242) target = $region20
        $region19: #{tpu_custom_call.1} parent=11 // pred_region
          %p245 = scmp.lt.s32.totalorder %s27, 0
          %s246 = scalar_select %p245, %s27, 0
          %s247 = scalar_lea.vmem %s5, %s246
        $region20: #{tpu_custom_call.1} parent=11 // pred_fallthru
          _
      $region12: #{tpu_custom_call.1} parent=5 // pred_fallthru
        _
      %p248 = scmp.lt.s32.totalorder %s15, 2
      // Predicated region
      $region21: #{tpu_custom_call.1} parent=5 // pred_check
        %p249 = pneg %p248
      $region22: #{tpu_custom_call.1} parent=5 // pred_check_branch
        %251 = sbr.rel (%p249) target = $region24
      $region23: #{tpu_custom_call.1} parent=5 // pred_region
        // Predicated region
        $region25: #{tpu_custom_call.1} parent=23 // pred_check
          %p252 = pneg %p54
        $region26: #{tpu_custom_call.1} parent=23 // pred_check_branch
          %254 = sbr.rel (%p252) target = $region28
        $region27: #{tpu_custom_call.1} parent=23 // pred_region
          %p255 = scmp.lt.s32.totalorder %s22, 1
          %s256 = scalar_select %p255, %s22, 1
          %s257 = smul.addr %s256, 18
          %s258 = smul.addr %s257, 8
          %s259 = scalar_lea.vmem %s0, %s258
        $region28: #{tpu_custom_call.1} parent=23 // pred_fallthru
          _
        // Predicated region
        $region29: #{tpu_custom_call.1} parent=23 // pred_check
          %p260 = pneg %p80
        $region30: #{tpu_custom_call.1} parent=23 // pred_check_branch
          %262 = sbr.rel (%p260) target = $region32
        $region31: #{tpu_custom_call.1} parent=23 // pred_region
          %p263 = scmp.lt.s32.totalorder %s22, 1
          %s264 = scalar_select %p263, %s22, 1
          %s265 = smul.addr %s264, 18
          %s266 = smul.addr %s265, 8
          %s267 = scalar_lea.vmem %s1, %s266
        $region32: #{tpu_custom_call.1} parent=23 // pred_fallthru
          _
        // Predicated region
        $region33: #{tpu_custom_call.1} parent=23 // pred_check
          %p268 = pneg %p106
        $region34: #{tpu_custom_call.1} parent=23 // pred_check_branch
          %270 = sbr.rel (%p268) target = $region36
        $region35: #{tpu_custom_call.1} parent=23 // pred_region
          %p271 = scmp.lt.s32.totalorder %s22, 1
          %s272 = scalar_select %p271, %s22, 1
          %s273 = smul.addr %s272, 18
          %s274 = smul.addr %s273, 8
          %s275 = scalar_lea.vmem %s2, %s274
        $region36: #{tpu_custom_call.1} parent=23 // pred_fallthru
          _
        // Predicated region
        $region37: #{tpu_custom_call.1} parent=23 // pred_check
          %p276 = pneg %p132
        $region38: #{tpu_custom_call.1} parent=23 // pred_check_branch
          %278 = sbr.rel (%p276) target = $region40
        $region39: #{tpu_custom_call.1} parent=23 // pred_region
          %p279 = scmp.lt.s32.totalorder %s22, 1
          %s280 = scalar_select %p279, %s22, 1
          %s281 = smul.addr %s280, 18
          %s282 = smul.addr %s281, 8
          %s283 = scalar_lea.vmem %s3, %s282
        $region40: #{tpu_custom_call.1} parent=23 // pred_fallthru
          _
      $region24: #{tpu_custom_call.1} parent=5 // pred_fallthru
        _
      %p284 = scmp.le.s32.totalorder 1, %s15
      %p285 = scmp.lt.s32.totalorder %s15, 3
      %p286 = pnand %p284, %p285
      %p287 = pneg %p286
      // Predicated region
      $region41: #{tpu_custom_call.1} parent=5 // pred_check
        _
      $region42: #{tpu_custom_call.1} parent=5 // pred_check_branch
        %289 = sbr.rel (%p286) target = $region44
      $region43: #{tpu_custom_call.1} parent=5 // pred_region
        %s290 = ssub.s32 %s15, 1
        %p291 = scmp.lt.s32.totalorder %s25, 1
        %s292 = scalar_select %p291, %s25, 1
        %s293 = smul.addr %s292, 18
        %s294 = smul.addr %s293, 8
        %s295 = scalar_lea.vmem %s0, %s294
        %p296 = pneg %p60
        %p297 = pneg %p57
        %p298 = scmp.lt.s32.totalorder %s25, 1
        %s299 = scalar_select %p298, %s25, 1
        %s300 = smul.addr %s299, 18
        %s301 = smul.addr %s300, 8
        %s302 = scalar_lea.vmem %s1, %s301
        %p303 = pneg %p86
        %p304 = pneg %p83
        %p305 = scmp.lt.s32.totalorder %s25, 1
        %s306 = scalar_select %p305, %s25, 1
        %s307 = smul.addr %s306, 18
        %s308 = smul.addr %s307, 8
        %s309 = scalar_lea.vmem %s2, %s308
        %p310 = pneg %p112
        %p311 = pneg %p109
        %p312 = scmp.lt.s32.totalorder %s25, 1
        %s313 = scalar_select %p312, %s25, 1
        %s314 = smul.addr %s313, 18
        %s315 = smul.addr %s314, 8
        %s316 = scalar_lea.vmem %s3, %s315
        %p317 = pneg %p138
        %p318 = pneg %p135
        %p319 = scmp.lt.s32.totalorder %s27, 0
        %s320 = scalar_select %p319, %s27, 0
        %s321 = smul.addr %s320, 4
        %s322 = scalar_lea.vmem %s4, %s321
        %p323 = pneg %p164
        %p324 = pneg %p161
        %p325 = scmp.lt.s32.totalorder %s27, 0
        %s326 = scalar_select %p325, %s27, 0
        %s327 = scalar_lea.vmem %s5, %s326
        %p328 = pneg %p190
        %p329 = pneg %p187
        %p330 = pneg %p220
        %p331 = pneg %p217
        %s332 = sand.u32 %s207, 1
        %s333 = scalar_lea.sflag [#allocation3], %s332
        %s334 = sand.u32 %s207, 1
        %s335 = smul.addr %s334, 64
        %s336 = scalar_lea.vmem [#allocation2], %s335
        %p337 = scmp.lt.s32.totalorder %s25, 1
        %s338 = scalar_select %p337, %s25, 1
        %s339 = smul.addr %s338, 18
        %s340 = smul.addr %s339, 8
        %s341 = scalar_lea.vmem %s0, %s340
        %p342 = scmp.lt.s32.totalorder %s25, 1
        %s343 = scalar_select %p342, %s25, 1
        %s344 = smul.addr %s343, 18
        %s345 = smul.addr %s344, 8
        %s346 = scalar_lea.vmem %s1, %s345
        %p347 = scmp.lt.s32.totalorder %s25, 1
        %s348 = scalar_select %p347, %s25, 1
        %s349 = smul.addr %s348, 18
        %s350 = smul.addr %s349, 8
        %s351 = scalar_lea.vmem %s2, %s350
        %p352 = scmp.lt.s32.totalorder %s25, 1
        %s353 = scalar_select %p352, %s25, 1
        %s354 = smul.addr %s353, 18
        %s355 = smul.addr %s354, 8
        %s356 = scalar_lea.vmem %s3, %s355
        %p357 = scmp.lt.s32.totalorder %s27, 0
        %s358 = scalar_select %p357, %s27, 0
        %s359 = smul.addr %s358, 4
        %s360 = scalar_lea.vmem %s4, %s359
        %p361 = scmp.lt.s32.totalorder %s27, 0
        %s362 = scalar_select %p361, %s27, 0
        %s363 = scalar_lea.vmem %s5, %s362
        %s364 = smul.u32 8, %s26
        %s365 = smul.u32 %s26, 8
        %s366 = smul.u32 %s365, 16
        %s367 = scalar_lea.vmem %s341, %s366
        %v368 = vld [vmem:[%s367] sm:$0xff]
        %v369 = vld [vmem:[%s367 + $0x10] sm:$0xff]
        %v370 = vld [vmem:[%s367 + $0x20] sm:$0xff]
        %v371 = vld [vmem:[%s367 + $0x30] sm:$0xff]
        %v372 = vld [vmem:[%s367 + $0x40] sm:$0xff]
        %v373 = vld [vmem:[%s367 + $0x50] sm:$0xff]
        %v374 = vld [vmem:[%s367 + $0x60] sm:$0xff]
        %v375 = vld [vmem:[%s367 + $0x70] sm:$0xff]
        %s376 = scalar_lea.vmem %s346, %s366
        %v377 = vld [vmem:[%s376] sm:$0xff]
        %v378 = vld [vmem:[%s376 + $0x10] sm:$0xff]
        %v379 = vld [vmem:[%s376 + $0x20] sm:$0xff]
        %v380 = vld [vmem:[%s376 + $0x30] sm:$0xff]
        %v381 = vld [vmem:[%s376 + $0x40] sm:$0xff]
        %v382 = vld [vmem:[%s376 + $0x50] sm:$0xff]
        %v383 = vld [vmem:[%s376 + $0x60] sm:$0xff]
        %v384 = vld [vmem:[%s376 + $0x70] sm:$0xff]
        %v385 = vld [vmem:[%s367 + $0x1] sm:$0xff]
        %v386 = vld [vmem:[%s367 + $0x11] sm:$0xff]
        %v387 = vld [vmem:[%s367 + $0x21] sm:$0xff]
        %v388 = vld [vmem:[%s367 + $0x31] sm:$0xff]
        %v389 = vld [vmem:[%s367 + $0x41] sm:$0xff]
        %v390 = vld [vmem:[%s367 + $0x51] sm:$0xff]
        %v391 = vld [vmem:[%s367 + $0x61] sm:$0xff]
        %v392 = vld [vmem:[%s367 + $0x71] sm:$0xff]
        %s393 = scalar_lea.vmem %s351, %s366
        %v394 = vld [vmem:[%s393] sm:$0xff]
        %v395 = vld [vmem:[%s393 + $0x10] sm:$0xff]
        %v396 = vld [vmem:[%s393 + $0x20] sm:$0xff]
        %v397 = vld [vmem:[%s393 + $0x30] sm:$0xff]
        %v398 = vld [vmem:[%s393 + $0x40] sm:$0xff]
        %v399 = vld [vmem:[%s393 + $0x50] sm:$0xff]
        %v400 = vld [vmem:[%s393 + $0x60] sm:$0xff]
        %v401 = vld [vmem:[%s393 + $0x70] sm:$0xff]
        %s402 = scalar_lea.vmem %s356, %s366
        %v403 = vld [vmem:[%s402] sm:$0xff]
        %v404 = vld [vmem:[%s402 + $0x10] sm:$0xff]
        %v405 = vld [vmem:[%s402 + $0x20] sm:$0xff]
        %v406 = vld [vmem:[%s402 + $0x30] sm:$0xff]
        %v407 = vld [vmem:[%s402 + $0x40] sm:$0xff]
        %v408 = vld [vmem:[%s402 + $0x50] sm:$0xff]
        %v409 = vld [vmem:[%s402 + $0x60] sm:$0xff]
        %v410 = vld [vmem:[%s402 + $0x70] sm:$0xff]
        %v411 = vld [vmem:[%s393 + $0x1] sm:$0xff]
        %v412 = vld [vmem:[%s393 + $0x11] sm:$0xff]
        %v413 = vld [vmem:[%s393 + $0x21] sm:$0xff]
        %v414 = vld [vmem:[%s393 + $0x31] sm:$0xff]
        %v415 = vld [vmem:[%s393 + $0x41] sm:$0xff]
        %v416 = vld [vmem:[%s393 + $0x51] sm:$0xff]
        %v417 = vld [vmem:[%s393 + $0x61] sm:$0xff]
        %v418 = vld [vmem:[%s393 + $0x71] sm:$0xff]
        %s419 = sadd.s32 %s365, 1
        %s420 = smul.u32 %s419, 16
        %s421 = scalar_lea.vmem %s341, %s420
        %v422 = vld [vmem:[%s421] sm:$0xff]
        %v423 = vld [vmem:[%s421 + $0x10] sm:$0xff]
        %v424 = vld [vmem:[%s421 + $0x20] sm:$0xff]
        %v425 = vld [vmem:[%s421 + $0x30] sm:$0xff]
        %v426 = vld [vmem:[%s421 + $0x40] sm:$0xff]
        %v427 = vld [vmem:[%s421 + $0x50] sm:$0xff]
        %v428 = vld [vmem:[%s421 + $0x60] sm:$0xff]
        %v429 = vld [vmem:[%s421 + $0x70] sm:$0xff]
        %s430 = scalar_lea.vmem %s346, %s420
        %v431 = vld [vmem:[%s430] sm:$0xff]
        %v432 = vld [vmem:[%s430 + $0x10] sm:$0xff]
        %v433 = vld [vmem:[%s430 + $0x20] sm:$0xff]
        %v434 = vld [vmem:[%s430 + $0x30] sm:$0xff]
        %v435 = vld [vmem:[%s430 + $0x40] sm:$0xff]
        %v436 = vld [vmem:[%s430 + $0x50] sm:$0xff]
        %v437 = vld [vmem:[%s430 + $0x60] sm:$0xff]
        %v438 = vld [vmem:[%s430 + $0x70] sm:$0xff]
        %v439 = vld [vmem:[%s421 + $0x1] sm:$0xff]
        %v440 = vld [vmem:[%s421 + $0x11] sm:$0xff]
        %v441 = vld [vmem:[%s421 + $0x21] sm:$0xff]
        %v442 = vld [vmem:[%s421 + $0x31] sm:$0xff]
        %v443 = vld [vmem:[%s421 + $0x41] sm:$0xff]
        %v444 = vld [vmem:[%s421 + $0x51] sm:$0xff]
        %v445 = vld [vmem:[%s421 + $0x61] sm:$0xff]
        %v446 = vld [vmem:[%s421 + $0x71] sm:$0xff]
        %v447 = vld [vmem:[%s360] sm:$0xf]
        %s448 = scalar_lea.vmem %s360, 4
        %v449 = vld [vmem:[%s448] sm:$0xf]
        %vm450 = vcmask 31744
        %v452 = vsel %vm450, %v377, 0
        %v455 = vsel %vm450, %v378, 0
        %v458 = vsel %vm450, %v379, 0
        %v461 = vsel %vm450, %v380, 0
        %v464 = vsel %vm450, %v381, 0
        %v467 = vsel %vm450, %v382, 0
        %v470 = vsel %vm450, %v383, 0
        %v473 = vsel %vm450, %v384, 0
        %vm475 = vcmask 1043456
        %v477 = vsel %vm475, %v449, 0
        %479 = vmatprep.subr.mxu0 0.0
        %480 = vmatpush1.msra.mxu0 0.0
        %481 = vmatprep.subr.mxu0 0.0
        %482 = vmatpush1.msra.mxu0 0.0
        %483 = vmatprep.subr.mxu0 0.0
        %484 = vmatpush1.msra.mxu0 0.0
        %485 = vmatprep.subr.mxu0 0.0
        %486 = vmatpush1.msra.mxu0 0.0
        %487 = vmatprep.subr.mxu0 0.0
        %488 = vmatpush1.msra.mxu0 0.0
        %489 = vmatprep.subr.mxu0 0.0
        %490 = vmatpush1.msra.mxu0 0.0
        %491 = vmatprep.subr.mxu0 0.0
        %492 = vmatpush1.msra.mxu0 0.0
        %493 = vmatprep.subr.mxu0 0.0
        %494 = vmatpush1.msra.mxu0 0.0
        %495 = vmatprep.subr.mxu0 0.0
        %496 = vmatpush1.msra.mxu0 0.0
        %497 = vmatprep.subr.mxu0 0.0
        %498 = vmatpush1.msra.mxu0 0.0
        %499 = vmatprep.subr.mxu0 0.0
        %500 = vmatpush1.msra.mxu0 0.0
        %501 = vmatprep.subr.mxu0 0.0
        %502 = vmatpush1.msra.mxu0 0.0
        %503 = vmatprep.subr.mxu0 0.0
        %504 = vmatpush1.msra.mxu0 0.0
        %505 = vmatprep.subr.mxu0 0.0
        %506 = vmatpush1.msra.mxu0 0.0
        %507 = vmatprep.subr.mxu0 0.0
        %508 = vmatpush1.msra.mxu0 0.0
        %509 = vmatprep.subr.mxu0 0.0
        %510 = vmatpush1.msra.mxu0 %v477
        %511 = vmatprep.subr.mxu0 0.0
        %512 = vmatpush2.msra.mxu0 0.0
        %513 = vmatprep.subr.mxu0 0.0
        %514 = vmatpush2.msra.mxu0 0.0
        %515 = vmatprep.subr.mxu0 0.0
        %516 = vmatpush2.msra.mxu0 0.0
        %517 = vmatprep.subr.mxu0 0.0
        %518 = vmatpush2.msra.mxu0 0.0
        %519 = vmatprep.subr.mxu0 0.0
        %520 = vmatpush2.msra.mxu0 0.0
        %521 = vmatprep.subr.mxu0 0.0
        %522 = vmatpush2.msra.mxu0 0.0
        %523 = vmatprep.subr.mxu0 0.0
        %524 = vmatpush2.msra.mxu0 0.0
        %525 = vmatprep.subr.mxu0 0.0
        %526 = vmatpush2.msra.mxu0 0.0
        %527 = vmatprep.subr.mxu0 0.0
        %528 = vmatpush2.msra.mxu0 0.0
        %529 = vmatprep.subr.mxu0 0.0
        %530 = vmatpush2.msra.mxu0 0.0
        %531 = vmatprep.subr.mxu0 0.0
        %532 = vmatpush2.msra.mxu0 0.0
        %533 = vmatprep.subr.mxu0 0.0
        %534 = vmatpush2.msra.mxu0 0.0
        %535 = vmatprep.subr.mxu0 0.0
        %536 = vmatpush2.msra.mxu0 0.0
        %537 = vmatprep.subr.mxu0 0.0
        %538 = vmatpush2.msra.mxu0 0.0
        %539 = vmatprep.subr.mxu0 0.0
        %540 = vmatpush2.msra.mxu0 0.0
        %541 = vmatprep.subr.mxu0 0.0
        %542 = vmatpush2.msra.mxu0 0.0
        %543 = vmatprep.mubr.f32.mxu0 0.0
        %544 = vmatmul.mubr.f32.gmra.mxu0 %v452
        %v545 = vpop.f32.mrf.mxu0
        %v546 = vadd.f32 0.0, %v545
        %v547 = vpop.f32.mrf.mxu0
        %548 = vmatprep.mubr.f32.mxu0 0.0
        %549 = vmatmul.mubr.f32.gmra.mxu0 %v455
        %v550 = vpop.f32.mrf.mxu0
        %v551 = vadd.f32 0.0, %v550
        %v552 = vpop.f32.mrf.mxu0
        %553 = vmatprep.mubr.f32.mxu0 0.0
        %554 = vmatmul.mubr.f32.gmra.mxu0 %v458
        %v555 = vpop.f32.mrf.mxu0
        %v556 = vadd.f32 0.0, %v555
        %v557 = vpop.f32.mrf.mxu0
        %558 = vmatprep.mubr.f32.mxu0 0.0
        %559 = vmatmul.mubr.f32.gmra.mxu0 %v461
        %v560 = vpop.f32.mrf.mxu0
        %v561 = vadd.f32 0.0, %v560
        %v562 = vpop.f32.mrf.mxu0
        %563 = vmatprep.mubr.f32.mxu0 0.0
        %564 = vmatmul.mubr.f32.gmra.mxu0 %v464
        %v565 = vpop.f32.mrf.mxu0
        %v566 = vadd.f32 0.0, %v565
        %v567 = vpop.f32.mrf.mxu0
        %568 = vmatprep.mubr.f32.mxu0 0.0
        %569 = vmatmul.mubr.f32.gmra.mxu0 %v467
        %v570 = vpop.f32.mrf.mxu0
        %v571 = vadd.f32 0.0, %v570
        %v572 = vpop.f32.mrf.mxu0
        %573 = vmatprep.mubr.f32.mxu0 0.0
        %574 = vmatmul.mubr.f32.gmra.mxu0 %v470
        %v575 = vpop.f32.mrf.mxu0
        %v576 = vadd.f32 0.0, %v575
        %v577 = vpop.f32.mrf.mxu0
        %578 = vmatprep.mubr.f32.mxu0 0.0
        %579 = vmatmul.mubr.f32.gmra.mxu0 %v473
        %v580 = vpop.f32.mrf.mxu0
        %v581 = vadd.f32 0.0, %v580
        %v582 = vpop.f32.mrf.mxu0
        %583 = vdwg.mxu0
        %v585 = vsel %vm450, %v368, 0
        %v588 = vsel %vm450, %v369, 0
        %v591 = vsel %vm450, %v370, 0
        %v594 = vsel %vm450, %v371, 0
        %v597 = vsel %vm450, %v372, 0
        %v600 = vsel %vm450, %v373, 0
        %v603 = vsel %vm450, %v374, 0
        %v606 = vsel %vm450, %v375, 0
        %v609 = vsel %vm475, %v447, 0
        %611 = vmatprep.subr.mxu0 0.0
        %612 = vmatpush1.msra.mxu0 0.0
        %613 = vmatprep.subr.mxu0 0.0
        %614 = vmatpush1.msra.mxu0 0.0
        %615 = vmatprep.subr.mxu0 0.0
        %616 = vmatpush1.msra.mxu0 0.0
        %617 = vmatprep.subr.mxu0 0.0
        %618 = vmatpush1.msra.mxu0 0.0
        %619 = vmatprep.subr.mxu0 0.0
        %620 = vmatpush1.msra.mxu0 0.0
        %621 = vmatprep.subr.mxu0 0.0
        %622 = vmatpush1.msra.mxu0 0.0
        %623 = vmatprep.subr.mxu0 0.0
        %624 = vmatpush1.msra.mxu0 0.0
        %625 = vmatprep.subr.mxu0 0.0
        %626 = vmatpush1.msra.mxu0 0.0
        %627 = vmatprep.subr.mxu0 0.0
        %628 = vmatpush1.msra.mxu0 0.0
        %629 = vmatprep.subr.mxu0 0.0
        %630 = vmatpush1.msra.mxu0 0.0
        %631 = vmatprep.subr.mxu0 0.0
        %632 = vmatpush1.msra.mxu0 0.0
        %633 = vmatprep.subr.mxu0 0.0
        %634 = vmatpush1.msra.mxu0 0.0
        %635 = vmatprep.subr.mxu0 0.0
        %636 = vmatpush1.msra.mxu0 0.0
        %637 = vmatprep.subr.mxu0 0.0
        %638 = vmatpush1.msra.mxu0 0.0
        %639 = vmatprep.subr.mxu0 0.0
        %640 = vmatpush1.msra.mxu0 0.0
        %641 = vmatprep.subr.mxu0 0.0
        %642 = vmatpush1.msra.mxu0 %v609
        %643 = vmatprep.subr.mxu0 0.0
        %644 = vmatpush2.msra.mxu0 0.0
        %645 = vmatprep.subr.mxu0 0.0
        %646 = vmatpush2.msra.mxu0 0.0
        %647 = vmatprep.subr.mxu0 0.0
        %648 = vmatpush2.msra.mxu0 0.0
        %649 = vmatprep.subr.mxu0 0.0
        %650 = vmatpush2.msra.mxu0 0.0
        %651 = vmatprep.subr.mxu0 0.0
        %652 = vmatpush2.msra.mxu0 0.0
        %653 = vmatprep.subr.mxu0 0.0
        %654 = vmatpush2.msra.mxu0 0.0
        %655 = vmatprep.subr.mxu0 0.0
        %656 = vmatpush2.msra.mxu0 0.0
        %657 = vmatprep.subr.mxu0 0.0
        %658 = vmatpush2.msra.mxu0 0.0
        %659 = vmatprep.subr.mxu0 0.0
        %660 = vmatpush2.msra.mxu0 0.0
        %661 = vmatprep.subr.mxu0 0.0
        %662 = vmatpush2.msra.mxu0 0.0
        %663 = vmatprep.subr.mxu0 0.0
        %664 = vmatpush2.msra.mxu0 0.0
        %665 = vmatprep.subr.mxu0 0.0
        %666 = vmatpush2.msra.mxu0 0.0
        %667 = vmatprep.subr.mxu0 0.0
        %668 = vmatpush2.msra.mxu0 0.0
        %669 = vmatprep.subr.mxu0 0.0
        %670 = vmatpush2.msra.mxu0 0.0
        %671 = vmatprep.subr.mxu0 0.0
        %672 = vmatpush2.msra.mxu0 0.0
        %673 = vmatprep.subr.mxu0 0.0
        %674 = vmatpush2.msra.mxu0 0.0
        %675 = vmatprep.mubr.f32.mxu0 0.0
        %676 = vmatmul.mubr.f32.gmra.mxu0 %v585
        %v677 = vpop.f32.mrf.mxu0
        %v678 = vadd.f32 %v546, %v677
        %v679 = vpop.f32.mrf.mxu0
        %680 = vmatprep.mubr.f32.mxu0 0.0
        %681 = vmatmul.mubr.f32.gmra.mxu0 %v588
        %v682 = vpop.f32.mrf.mxu0
        %v683 = vadd.f32 %v551, %v682
        %v684 = vpop.f32.mrf.mxu0
        %685 = vmatprep.mubr.f32.mxu0 0.0
        %686 = vmatmul.mubr.f32.gmra.mxu0 %v591
        %v687 = vpop.f32.mrf.mxu0
        %v688 = vadd.f32 %v556, %v687
        %v689 = vpop.f32.mrf.mxu0
        %690 = vmatprep.mubr.f32.mxu0 0.0
        %691 = vmatmul.mubr.f32.gmra.mxu0 %v594
        %v692 = vpop.f32.mrf.mxu0
        %v693 = vadd.f32 %v561, %v692
        %v694 = vpop.f32.mrf.mxu0
        %695 = vmatprep.mubr.f32.mxu0 0.0
        %696 = vmatmul.mubr.f32.gmra.mxu0 %v597
        %v697 = vpop.f32.mrf.mxu0
        %v698 = vadd.f32 %v566, %v697
        %v699 = vpop.f32.mrf.mxu0
        %700 = vmatprep.mubr.f32.mxu0 0.0
        %701 = vmatmul.mubr.f32.gmra.mxu0 %v600
        %v702 = vpop.f32.mrf.mxu0
        %v703 = vadd.f32 %v571, %v702
        %v704 = vpop.f32.mrf.mxu0
        %705 = vmatprep.mubr.f32.mxu0 0.0
        %706 = vmatmul.mubr.f32.gmra.mxu0 %v603
        %v707 = vpop.f32.mrf.mxu0
        %v708 = vadd.f32 %v576, %v707
        %v709 = vpop.f32.mrf.mxu0
        %710 = vmatprep.mubr.f32.mxu0 0.0
        %711 = vmatmul.mubr.f32.gmra.mxu0 %v606
        %v712 = vpop.f32.mrf.mxu0
        %v713 = vadd.f32 %v581, %v712
        %v714 = vpop.f32.mrf.mxu0
        %715 = vdwg.mxu0
        %s716 = scalar_lea.vmem %s360, 8
        %v717 = vld [vmem:[%s716] sm:$0xf]
        %v719 = vsel %vm450, %v385, 0
        %v722 = vsel %vm450, %v386, 0
        %v725 = vsel %vm450, %v387, 0
        %v728 = vsel %vm450, %v388, 0
        %v731 = vsel %vm450, %v389, 0
        %v734 = vsel %vm450, %v390, 0
        %v737 = vsel %vm450, %v391, 0
        %v740 = vsel %vm450, %v392, 0
        %v743 = vsel %vm475, %v717, 0
        %745 = vmatprep.subr.mxu0 0.0
        %746 = vmatpush1.msra.mxu0 0.0
        %747 = vmatprep.subr.mxu0 0.0
        %748 = vmatpush1.msra.mxu0 0.0
        %749 = vmatprep.subr.mxu0 0.0
        %750 = vmatpush1.msra.mxu0 0.0
        %751 = vmatprep.subr.mxu0 0.0
        %752 = vmatpush1.msra.mxu0 0.0
        %753 = vmatprep.subr.mxu0 0.0
        %754 = vmatpush1.msra.mxu0 0.0
        %755 = vmatprep.subr.mxu0 0.0
        %756 = vmatpush1.msra.mxu0 0.0
        %757 = vmatprep.subr.mxu0 0.0
        %758 = vmatpush1.msra.mxu0 0.0
        %759 = vmatprep.subr.mxu0 0.0
        %760 = vmatpush1.msra.mxu0 0.0
        %761 = vmatprep.subr.mxu0 0.0
        %762 = vmatpush1.msra.mxu0 0.0
        %763 = vmatprep.subr.mxu0 0.0
        %764 = vmatpush1.msra.mxu0 0.0
        %765 = vmatprep.subr.mxu0 0.0
        %766 = vmatpush1.msra.mxu0 0.0
        %767 = vmatprep.subr.mxu0 0.0
        %768 = vmatpush1.msra.mxu0 0.0
        %769 = vmatprep.subr.mxu0 0.0
        %770 = vmatpush1.msra.mxu0 0.0
        %771 = vmatprep.subr.mxu0 0.0
        %772 = vmatpush1.msra.mxu0 0.0
        %773 = vmatprep.subr.mxu0 0.0
        %774 = vmatpush1.msra.mxu0 0.0
        %775 = vmatprep.subr.mxu0 0.0
        %776 = vmatpush1.msra.mxu0 %v743
        %777 = vmatprep.subr.mxu0 0.0
        %778 = vmatpush2.msra.mxu0 0.0
        %779 = vmatprep.subr.mxu0 0.0
        %780 = vmatpush2.msra.mxu0 0.0
        %781 = vmatprep.subr.mxu0 0.0
        %782 = vmatpush2.msra.mxu0 0.0
        %783 = vmatprep.subr.mxu0 0.0
        %784 = vmatpush2.msra.mxu0 0.0
        %785 = vmatprep.subr.mxu0 0.0
        %786 = vmatpush2.msra.mxu0 0.0
        %787 = vmatprep.subr.mxu0 0.0
        %788 = vmatpush2.msra.mxu0 0.0
        %789 = vmatprep.subr.mxu0 0.0
        %790 = vmatpush2.msra.mxu0 0.0
        %791 = vmatprep.subr.mxu0 0.0
        %792 = vmatpush2.msra.mxu0 0.0
        %793 = vmatprep.subr.mxu0 0.0
        %794 = vmatpush2.msra.mxu0 0.0
        %795 = vmatprep.subr.mxu0 0.0
        %796 = vmatpush2.msra.mxu0 0.0
        %797 = vmatprep.subr.mxu0 0.0
        %798 = vmatpush2.msra.mxu0 0.0
        %799 = vmatprep.subr.mxu0 0.0
        %800 = vmatpush2.msra.mxu0 0.0
        %801 = vmatprep.subr.mxu0 0.0
        %802 = vmatpush2.msra.mxu0 0.0
        %803 = vmatprep.subr.mxu0 0.0
        %804 = vmatpush2.msra.mxu0 0.0
        %805 = vmatprep.subr.mxu0 0.0
        %806 = vmatpush2.msra.mxu0 0.0
        %807 = vmatprep.subr.mxu0 0.0
        %808 = vmatpush2.msra.mxu0 0.0
        %809 = vmatprep.mubr.f32.mxu0 0.0
        %810 = vmatmul.mubr.f32.gmra.mxu0 %v719
        %v811 = vpop.f32.mrf.mxu0
        %v812 = vadd.f32 0.0, %v811
        %v813 = vpop.f32.mrf.mxu0
        %814 = vmatprep.mubr.f32.mxu0 0.0
        %815 = vmatmul.mubr.f32.gmra.mxu0 %v722
        %v816 = vpop.f32.mrf.mxu0
        %v817 = vadd.f32 0.0, %v816
        %v818 = vpop.f32.mrf.mxu0
        %819 = vmatprep.mubr.f32.mxu0 0.0
        %820 = vmatmul.mubr.f32.gmra.mxu0 %v725
        %v821 = vpop.f32.mrf.mxu0
        %v822 = vadd.f32 0.0, %v821
        %v823 = vpop.f32.mrf.mxu0
        %824 = vmatprep.mubr.f32.mxu0 0.0
        %825 = vmatmul.mubr.f32.gmra.mxu0 %v728
        %v826 = vpop.f32.mrf.mxu0
        %v827 = vadd.f32 0.0, %v826
        %v828 = vpop.f32.mrf.mxu0
        %829 = vmatprep.mubr.f32.mxu0 0.0
        %830 = vmatmul.mubr.f32.gmra.mxu0 %v731
        %v831 = vpop.f32.mrf.mxu0
        %v832 = vadd.f32 0.0, %v831
        %v833 = vpop.f32.mrf.mxu0
        %834 = vmatprep.mubr.f32.mxu0 0.0
        %835 = vmatmul.mubr.f32.gmra.mxu0 %v734
        %v836 = vpop.f32.mrf.mxu0
        %v837 = vadd.f32 0.0, %v836
        %v838 = vpop.f32.mrf.mxu0
        %839 = vmatprep.mubr.f32.mxu0 0.0
        %840 = vmatmul.mubr.f32.gmra.mxu0 %v737
        %v841 = vpop.f32.mrf.mxu0
        %v842 = vadd.f32 0.0, %v841
        %v843 = vpop.f32.mrf.mxu0
        %844 = vmatprep.mubr.f32.mxu0 0.0
        %845 = vmatmul.mubr.f32.gmra.mxu0 %v740
        %v846 = vpop.f32.mrf.mxu0
        %v847 = vadd.f32 0.0, %v846
        %v848 = vpop.f32.mrf.mxu0
        %849 = vdwg.mxu0
        %v850 = vadd.f32 %v678, %v812
        %v851 = vadd.f32 %v683, %v817
        %v852 = vadd.f32 %v688, %v822
        %v853 = vadd.f32 %v693, %v827
        %v854 = vadd.f32 %v698, %v832
        %v855 = vadd.f32 %v703, %v837
        %v856 = vadd.f32 %v708, %v842
        %v857 = vadd.f32 %v713, %v847
        %s858 = scalar_lea.vmem %s360, 12
        %v859 = vld [vmem:[%s858] sm:$0xf]
        %v861 = vsel %vm450, %v394, 0
        %v864 = vsel %vm450, %v395, 0
        %v867 = vsel %vm450, %v396, 0
        %v870 = vsel %vm450, %v397, 0
        %v873 = vsel %vm450, %v398, 0
        %v876 = vsel %vm450, %v399, 0
        %v879 = vsel %vm450, %v400, 0
        %v882 = vsel %vm450, %v401, 0
        %v885 = vsel %vm475, %v859, 0
        %887 = vmatprep.subr.mxu0 0.0
        %888 = vmatpush1.msra.mxu0 0.0
        %889 = vmatprep.subr.mxu0 0.0
        %890 = vmatpush1.msra.mxu0 0.0
        %891 = vmatprep.subr.mxu0 0.0
        %892 = vmatpush1.msra.mxu0 0.0
        %893 = vmatprep.subr.mxu0 0.0
        %894 = vmatpush1.msra.mxu0 0.0
        %895 = vmatprep.subr.mxu0 0.0
        %896 = vmatpush1.msra.mxu0 0.0
        %897 = vmatprep.subr.mxu0 0.0
        %898 = vmatpush1.msra.mxu0 0.0
        %899 = vmatprep.subr.mxu0 0.0
        %900 = vmatpush1.msra.mxu0 0.0
        %901 = vmatprep.subr.mxu0 0.0
        %902 = vmatpush1.msra.mxu0 0.0
        %903 = vmatprep.subr.mxu0 0.0
        %904 = vmatpush1.msra.mxu0 0.0
        %905 = vmatprep.subr.mxu0 0.0
        %906 = vmatpush1.msra.mxu0 0.0
        %907 = vmatprep.subr.mxu0 0.0
        %908 = vmatpush1.msra.mxu0 0.0
        %909 = vmatprep.subr.mxu0 0.0
        %910 = vmatpush1.msra.mxu0 0.0
        %911 = vmatprep.subr.mxu0 0.0
        %912 = vmatpush1.msra.mxu0 0.0
        %913 = vmatprep.subr.mxu0 0.0
        %914 = vmatpush1.msra.mxu0 0.0
        %915 = vmatprep.subr.mxu0 0.0
        %916 = vmatpush1.msra.mxu0 0.0
        %917 = vmatprep.subr.mxu0 0.0
        %918 = vmatpush1.msra.mxu0 %v885
        %919 = vmatprep.subr.mxu0 0.0
        %920 = vmatpush2.msra.mxu0 0.0
        %921 = vmatprep.subr.mxu0 0.0
        %922 = vmatpush2.msra.mxu0 0.0
        %923 = vmatprep.subr.mxu0 0.0
        %924 = vmatpush2.msra.mxu0 0.0
        %925 = vmatprep.subr.mxu0 0.0
        %926 = vmatpush2.msra.mxu0 0.0
        %927 = vmatprep.subr.mxu0 0.0
        %928 = vmatpush2.msra.mxu0 0.0
        %929 = vmatprep.subr.mxu0 0.0
        %930 = vmatpush2.msra.mxu0 0.0
        %931 = vmatprep.subr.mxu0 0.0
        %932 = vmatpush2.msra.mxu0 0.0
        %933 = vmatprep.subr.mxu0 0.0
        %934 = vmatpush2.msra.mxu0 0.0
        %935 = vmatprep.subr.mxu0 0.0
        %936 = vmatpush2.msra.mxu0 0.0
        %937 = vmatprep.subr.mxu0 0.0
        %938 = vmatpush2.msra.mxu0 0.0
        %939 = vmatprep.subr.mxu0 0.0
        %940 = vmatpush2.msra.mxu0 0.0
        %941 = vmatprep.subr.mxu0 0.0
        %942 = vmatpush2.msra.mxu0 0.0
        %943 = vmatprep.subr.mxu0 0.0
        %944 = vmatpush2.msra.mxu0 0.0
        %945 = vmatprep.subr.mxu0 0.0
        %946 = vmatpush2.msra.mxu0 0.0
        %947 = vmatprep.subr.mxu0 0.0
        %948 = vmatpush2.msra.mxu0 0.0
        %949 = vmatprep.subr.mxu0 0.0
        %950 = vmatpush2.msra.mxu0 0.0
        %951 = vmatprep.mubr.f32.mxu0 0.0
        %952 = vmatmul.mubr.f32.gmra.mxu0 %v861
        %v953 = vpop.f32.mrf.mxu0
        %v954 = vadd.f32 0.0, %v953
        %v955 = vpop.f32.mrf.mxu0
        %956 = vmatprep.mubr.f32.mxu0 0.0
        %957 = vmatmul.mubr.f32.gmra.mxu0 %v864
        %v958 = vpop.f32.mrf.mxu0
        %v959 = vadd.f32 0.0, %v958
        %v960 = vpop.f32.mrf.mxu0
        %961 = vmatprep.mubr.f32.mxu0 0.0
        %962 = vmatmul.mubr.f32.gmra.mxu0 %v867
        %v963 = vpop.f32.mrf.mxu0
        %v964 = vadd.f32 0.0, %v963
        %v965 = vpop.f32.mrf.mxu0
        %966 = vmatprep.mubr.f32.mxu0 0.0
        %967 = vmatmul.mubr.f32.gmra.mxu0 %v870
        %v968 = vpop.f32.mrf.mxu0
        %v969 = vadd.f32 0.0, %v968
        %v970 = vpop.f32.mrf.mxu0
        %971 = vmatprep.mubr.f32.mxu0 0.0
        %972 = vmatmul.mubr.f32.gmra.mxu0 %v873
        %v973 = vpop.f32.mrf.mxu0
        %v974 = vadd.f32 0.0, %v973
        %v975 = vpop.f32.mrf.mxu0
        %976 = vmatprep.mubr.f32.mxu0 0.0
        %977 = vmatmul.mubr.f32.gmra.mxu0 %v876
        %v978 = vpop.f32.mrf.mxu0
        %v979 = vadd.f32 0.0, %v978
        %v980 = vpop.f32.mrf.mxu0
        %981 = vmatprep.mubr.f32.mxu0 0.0
        %982 = vmatmul.mubr.f32.gmra.mxu0 %v879
        %v983 = vpop.f32.mrf.mxu0
        %v984 = vadd.f32 0.0, %v983
        %v985 = vpop.f32.mrf.mxu0
        %986 = vmatprep.mubr.f32.mxu0 0.0
        %987 = vmatmul.mubr.f32.gmra.mxu0 %v882
        %v988 = vpop.f32.mrf.mxu0
        %v989 = vadd.f32 0.0, %v988
        %v990 = vpop.f32.mrf.mxu0
        %991 = vdwg.mxu0
        %v992 = vadd.f32 %v850, %v954
        %v993 = vadd.f32 %v851, %v959
        %v994 = vadd.f32 %v852, %v964
        %v995 = vadd.f32 %v853, %v969
        %v996 = vadd.f32 %v854, %v974
        %v997 = vadd.f32 %v855, %v979
        %v998 = vadd.f32 %v856, %v984
        %v999 = vadd.f32 %v857, %v989
        %s1000 = scalar_lea.vmem %s360, 16
        %v1001 = vld [vmem:[%s1000] sm:$0xf]
        %v1003 = vsel %vm450, %v403, 0
        %v1006 = vsel %vm450, %v404, 0
        %v1009 = vsel %vm450, %v405, 0
        %v1012 = vsel %vm450, %v406, 0
        %v1015 = vsel %vm450, %v407, 0
        %v1018 = vsel %vm450, %v408, 0
        %v1021 = vsel %vm450, %v409, 0
        %v1024 = vsel %vm450, %v410, 0
        %v1027 = vsel %vm475, %v1001, 0
        %1029 = vmatprep.subr.mxu0 0.0
        %1030 = vmatpush1.msra.mxu0 0.0
        %1031 = vmatprep.subr.mxu0 0.0
        %1032 = vmatpush1.msra.mxu0 0.0
        %1033 = vmatprep.subr.mxu0 0.0
        %1034 = vmatpush1.msra.mxu0 0.0
        %1035 = vmatprep.subr.mxu0 0.0
        %1036 = vmatpush1.msra.mxu0 0.0
        %1037 = vmatprep.subr.mxu0 0.0
        %1038 = vmatpush1.msra.mxu0 0.0
        %1039 = vmatprep.subr.mxu0 0.0
        %1040 = vmatpush1.msra.mxu0 0.0
        %1041 = vmatprep.subr.mxu0 0.0
        %1042 = vmatpush1.msra.mxu0 0.0
        %1043 = vmatprep.subr.mxu0 0.0
        %1044 = vmatpush1.msra.mxu0 0.0
        %1045 = vmatprep.subr.mxu0 0.0
        %1046 = vmatpush1.msra.mxu0 0.0
        %1047 = vmatprep.subr.mxu0 0.0
        %1048 = vmatpush1.msra.mxu0 0.0
        %1049 = vmatprep.subr.mxu0 0.0
        %1050 = vmatpush1.msra.mxu0 0.0
        %1051 = vmatprep.subr.mxu0 0.0
        %1052 = vmatpush1.msra.mxu0 0.0
        %1053 = vmatprep.subr.mxu0 0.0
        %1054 = vmatpush1.msra.mxu0 0.0
        %1055 = vmatprep.subr.mxu0 0.0
        %1056 = vmatpush1.msra.mxu0 0.0
        %1057 = vmatprep.subr.mxu0 0.0
        %1058 = vmatpush1.msra.mxu0 0.0
        %1059 = vmatprep.subr.mxu0 0.0
        %1060 = vmatpush1.msra.mxu0 %v1027
        %1061 = vmatprep.subr.mxu0 0.0
        %1062 = vmatpush2.msra.mxu0 0.0
        %1063 = vmatprep.subr.mxu0 0.0
        %1064 = vmatpush2.msra.mxu0 0.0
        %1065 = vmatprep.subr.mxu0 0.0
        %1066 = vmatpush2.msra.mxu0 0.0
        %1067 = vmatprep.subr.mxu0 0.0
        %1068 = vmatpush2.msra.mxu0 0.0
        %1069 = vmatprep.subr.mxu0 0.0
        %1070 = vmatpush2.msra.mxu0 0.0
        %1071 = vmatprep.subr.mxu0 0.0
        %1072 = vmatpush2.msra.mxu0 0.0
        %1073 = vmatprep.subr.mxu0 0.0
        %1074 = vmatpush2.msra.mxu0 0.0
        %1075 = vmatprep.subr.mxu0 0.0
        %1076 = vmatpush2.msra.mxu0 0.0
        %1077 = vmatprep.subr.mxu0 0.0
        %1078 = vmatpush2.msra.mxu0 0.0
        %1079 = vmatprep.subr.mxu0 0.0
        %1080 = vmatpush2.msra.mxu0 0.0
        %1081 = vmatprep.subr.mxu0 0.0
        %1082 = vmatpush2.msra.mxu0 0.0
        %1083 = vmatprep.subr.mxu0 0.0
        %1084 = vmatpush2.msra.mxu0 0.0
        %1085 = vmatprep.subr.mxu0 0.0
        %1086 = vmatpush2.msra.mxu0 0.0
        %1087 = vmatprep.subr.mxu0 0.0
        %1088 = vmatpush2.msra.mxu0 0.0
        %1089 = vmatprep.subr.mxu0 0.0
        %1090 = vmatpush2.msra.mxu0 0.0
        %1091 = vmatprep.subr.mxu0 0.0
        %1092 = vmatpush2.msra.mxu0 0.0
        %1093 = vmatprep.mubr.f32.mxu0 0.0
        %1094 = vmatmul.mubr.f32.gmra.mxu0 %v1003
        %v1095 = vpop.f32.mrf.mxu0
        %v1096 = vadd.f32 0.0, %v1095
        %v1097 = vpop.f32.mrf.mxu0
        %1098 = vmatprep.mubr.f32.mxu0 0.0
        %1099 = vmatmul.mubr.f32.gmra.mxu0 %v1006
        %v1100 = vpop.f32.mrf.mxu0
        %v1101 = vadd.f32 0.0, %v1100
        %v1102 = vpop.f32.mrf.mxu0
        %1103 = vmatprep.mubr.f32.mxu0 0.0
        %1104 = vmatmul.mubr.f32.gmra.mxu0 %v1009
        %v1105 = vpop.f32.mrf.mxu0
        %v1106 = vadd.f32 0.0, %v1105
        %v1107 = vpop.f32.mrf.mxu0
        %1108 = vmatprep.mubr.f32.mxu0 0.0
        %1109 = vmatmul.mubr.f32.gmra.mxu0 %v1012
        %v1110 = vpop.f32.mrf.mxu0
        %v1111 = vadd.f32 0.0, %v1110
        %v1112 = vpop.f32.mrf.mxu0
        %1113 = vmatprep.mubr.f32.mxu0 0.0
        %1114 = vmatmul.mubr.f32.gmra.mxu0 %v1015
        %v1115 = vpop.f32.mrf.mxu0
        %v1116 = vadd.f32 0.0, %v1115
        %v1117 = vpop.f32.mrf.mxu0
        %1118 = vmatprep.mubr.f32.mxu0 0.0
        %1119 = vmatmul.mubr.f32.gmra.mxu0 %v1018
        %v1120 = vpop.f32.mrf.mxu0
        %v1121 = vadd.f32 0.0, %v1120
        %v1122 = vpop.f32.mrf.mxu0
        %1123 = vmatprep.mubr.f32.mxu0 0.0
        %1124 = vmatmul.mubr.f32.gmra.mxu0 %v1021
        %v1125 = vpop.f32.mrf.mxu0
        %v1126 = vadd.f32 0.0, %v1125
        %v1127 = vpop.f32.mrf.mxu0
        %1128 = vmatprep.mubr.f32.mxu0 0.0
        %1129 = vmatmul.mubr.f32.gmra.mxu0 %v1024
        %v1130 = vpop.f32.mrf.mxu0
        %v1131 = vadd.f32 0.0, %v1130
        %v1132 = vpop.f32.mrf.mxu0
        %1133 = vdwg.mxu0
        %v1134 = vadd.f32 %v992, %v1096
        %v1135 = vadd.f32 %v993, %v1101
        %v1136 = vadd.f32 %v994, %v1106
        %v1137 = vadd.f32 %v995, %v1111
        %v1138 = vadd.f32 %v996, %v1116
        %v1139 = vadd.f32 %v997, %v1121
        %v1140 = vadd.f32 %v998, %v1126
        %v1141 = vadd.f32 %v999, %v1131
        %s1142 = scalar_lea.vmem %s360, 20
        %v1143 = vld [vmem:[%s1142] sm:$0xf]
        %v1145 = vsel %vm450, %v411, 0
        %v1148 = vsel %vm450, %v412, 0
        %v1151 = vsel %vm450, %v413, 0
        %v1154 = vsel %vm450, %v414, 0
        %v1157 = vsel %vm450, %v415, 0
        %v1160 = vsel %vm450, %v416, 0
        %v1163 = vsel %vm450, %v417, 0
        %v1166 = vsel %vm450, %v418, 0
        %v1169 = vsel %vm475, %v1143, 0
        %1171 = vmatprep.subr.mxu0 0.0
        %1172 = vmatpush1.msra.mxu0 0.0
        %1173 = vmatprep.subr.mxu0 0.0
        %1174 = vmatpush1.msra.mxu0 0.0
        %1175 = vmatprep.subr.mxu0 0.0
        %1176 = vmatpush1.msra.mxu0 0.0
        %1177 = vmatprep.subr.mxu0 0.0
        %1178 = vmatpush1.msra.mxu0 0.0
        %1179 = vmatprep.subr.mxu0 0.0
        %1180 = vmatpush1.msra.mxu0 0.0
        %1181 = vmatprep.subr.mxu0 0.0
        %1182 = vmatpush1.msra.mxu0 0.0
        %1183 = vmatprep.subr.mxu0 0.0
        %1184 = vmatpush1.msra.mxu0 0.0
        %1185 = vmatprep.subr.mxu0 0.0
        %1186 = vmatpush1.msra.mxu0 0.0
        %1187 = vmatprep.subr.mxu0 0.0
        %1188 = vmatpush1.msra.mxu0 0.0
        %1189 = vmatprep.subr.mxu0 0.0
        %1190 = vmatpush1.msra.mxu0 0.0
        %1191 = vmatprep.subr.mxu0 0.0
        %1192 = vmatpush1.msra.mxu0 0.0
        %1193 = vmatprep.subr.mxu0 0.0
        %1194 = vmatpush1.msra.mxu0 0.0
        %1195 = vmatprep.subr.mxu0 0.0
        %1196 = vmatpush1.msra.mxu0 0.0
        %1197 = vmatprep.subr.mxu0 0.0
        %1198 = vmatpush1.msra.mxu0 0.0
        %1199 = vmatprep.subr.mxu0 0.0
        %1200 = vmatpush1.msra.mxu0 0.0
        %1201 = vmatprep.subr.mxu0 0.0
        %1202 = vmatpush1.msra.mxu0 %v1169
        %1203 = vmatprep.subr.mxu0 0.0
        %1204 = vmatpush2.msra.mxu0 0.0
        %1205 = vmatprep.subr.mxu0 0.0
        %1206 = vmatpush2.msra.mxu0 0.0
        %1207 = vmatprep.subr.mxu0 0.0
        %1208 = vmatpush2.msra.mxu0 0.0
        %1209 = vmatprep.subr.mxu0 0.0
        %1210 = vmatpush2.msra.mxu0 0.0
        %1211 = vmatprep.subr.mxu0 0.0
        %1212 = vmatpush2.msra.mxu0 0.0
        %1213 = vmatprep.subr.mxu0 0.0
        %1214 = vmatpush2.msra.mxu0 0.0
        %1215 = vmatprep.subr.mxu0 0.0
        %1216 = vmatpush2.msra.mxu0 0.0
        %1217 = vmatprep.subr.mxu0 0.0
        %1218 = vmatpush2.msra.mxu0 0.0
        %1219 = vmatprep.subr.mxu0 0.0
        %1220 = vmatpush2.msra.mxu0 0.0
        %1221 = vmatprep.subr.mxu0 0.0
        %1222 = vmatpush2.msra.mxu0 0.0
        %1223 = vmatprep.subr.mxu0 0.0
        %1224 = vmatpush2.msra.mxu0 0.0
        %1225 = vmatprep.subr.mxu0 0.0
        %1226 = vmatpush2.msra.mxu0 0.0
        %1227 = vmatprep.subr.mxu0 0.0
        %1228 = vmatpush2.msra.mxu0 0.0
        %1229 = vmatprep.subr.mxu0 0.0
        %1230 = vmatpush2.msra.mxu0 0.0
        %1231 = vmatprep.subr.mxu0 0.0
        %1232 = vmatpush2.msra.mxu0 0.0
        %1233 = vmatprep.subr.mxu0 0.0
        %1234 = vmatpush2.msra.mxu0 0.0
        %1235 = vmatprep.mubr.f32.mxu0 0.0
        %1236 = vmatmul.mubr.f32.gmra.mxu0 %v1145
        %v1237 = vpop.f32.mrf.mxu0
        %v1238 = vadd.f32 0.0, %v1237
        %v1239 = vpop.f32.mrf.mxu0
        %1240 = vmatprep.mubr.f32.mxu0 0.0
        %1241 = vmatmul.mubr.f32.gmra.mxu0 %v1148
        %v1242 = vpop.f32.mrf.mxu0
        %v1243 = vadd.f32 0.0, %v1242
        %v1244 = vpop.f32.mrf.mxu0
        %1245 = vmatprep.mubr.f32.mxu0 0.0
        %1246 = vmatmul.mubr.f32.gmra.mxu0 %v1151
        %v1247 = vpop.f32.mrf.mxu0
        %v1248 = vadd.f32 0.0, %v1247
        %v1249 = vpop.f32.mrf.mxu0
        %1250 = vmatprep.mubr.f32.mxu0 0.0
        %1251 = vmatmul.mubr.f32.gmra.mxu0 %v1154
        %v1252 = vpop.f32.mrf.mxu0
        %v1253 = vadd.f32 0.0, %v1252
        %v1254 = vpop.f32.mrf.mxu0
        %1255 = vmatprep.mubr.f32.mxu0 0.0
        %1256 = vmatmul.mubr.f32.gmra.mxu0 %v1157
        %v1257 = vpop.f32.mrf.mxu0
        %v1258 = vadd.f32 0.0, %v1257
        %v1259 = vpop.f32.mrf.mxu0
        %1260 = vmatprep.mubr.f32.mxu0 0.0
        %1261 = vmatmul.mubr.f32.gmra.mxu0 %v1160
        %v1262 = vpop.f32.mrf.mxu0
        %v1263 = vadd.f32 0.0, %v1262
        %v1264 = vpop.f32.mrf.mxu0
        %1265 = vmatprep.mubr.f32.mxu0 0.0
        %1266 = vmatmul.mubr.f32.gmra.mxu0 %v1163
        %v1267 = vpop.f32.mrf.mxu0
        %v1268 = vadd.f32 0.0, %v1267
        %v1269 = vpop.f32.mrf.mxu0
        %1270 = vmatprep.mubr.f32.mxu0 0.0
        %1271 = vmatmul.mubr.f32.gmra.mxu0 %v1166
        %v1272 = vpop.f32.mrf.mxu0
        %v1273 = vadd.f32 0.0, %v1272
        %v1274 = vpop.f32.mrf.mxu0
        %1275 = vdwg.mxu0
        %v1276 = vadd.f32 %v1134, %v1238
        %v1277 = vadd.f32 %v1135, %v1243
        %v1278 = vadd.f32 %v1136, %v1248
        %v1279 = vadd.f32 %v1137, %v1253
        %v1280 = vadd.f32 %v1138, %v1258
        %v1281 = vadd.f32 %v1139, %v1263
        %v1282 = vadd.f32 %v1140, %v1268
        %v1283 = vadd.f32 %v1141, %v1273
        %s1284 = scalar_lea.vmem %s360, 24
        %v1285 = vld [vmem:[%s1284] sm:$0xf]
        %v1287 = vsel %vm450, %v422, 0
        %v1290 = vsel %vm450, %v423, 0
        %v1293 = vsel %vm450, %v424, 0
        %v1296 = vsel %vm450, %v425, 0
        %v1299 = vsel %vm450, %v426, 0
        %v1302 = vsel %vm450, %v427, 0
        %v1305 = vsel %vm450, %v428, 0
        %v1308 = vsel %vm450, %v429, 0
        %v1311 = vsel %vm475, %v1285, 0
        %1313 = vmatprep.subr.mxu0 0.0
        %1314 = vmatpush1.msra.mxu0 0.0
        %1315 = vmatprep.subr.mxu0 0.0
        %1316 = vmatpush1.msra.mxu0 0.0
        %1317 = vmatprep.subr.mxu0 0.0
        %1318 = vmatpush1.msra.mxu0 0.0
        %1319 = vmatprep.subr.mxu0 0.0
        %1320 = vmatpush1.msra.mxu0 0.0
        %1321 = vmatprep.subr.mxu0 0.0
        %1322 = vmatpush1.msra.mxu0 0.0
        %1323 = vmatprep.subr.mxu0 0.0
        %1324 = vmatpush1.msra.mxu0 0.0
        %1325 = vmatprep.subr.mxu0 0.0
        %1326 = vmatpush1.msra.mxu0 0.0
        %1327 = vmatprep.subr.mxu0 0.0
        %1328 = vmatpush1.msra.mxu0 0.0
        %1329 = vmatprep.subr.mxu0 0.0
        %1330 = vmatpush1.msra.mxu0 0.0
        %1331 = vmatprep.subr.mxu0 0.0
        %1332 = vmatpush1.msra.mxu0 0.0
        %1333 = vmatprep.subr.mxu0 0.0
        %1334 = vmatpush1.msra.mxu0 0.0
        %1335 = vmatprep.subr.mxu0 0.0
        %1336 = vmatpush1.msra.mxu0 0.0
        %1337 = vmatprep.subr.mxu0 0.0
        %1338 = vmatpush1.msra.mxu0 0.0
        %1339 = vmatprep.subr.mxu0 0.0
        %1340 = vmatpush1.msra.mxu0 0.0
        %1341 = vmatprep.subr.mxu0 0.0
        %1342 = vmatpush1.msra.mxu0 0.0
        %1343 = vmatprep.subr.mxu0 0.0
        %1344 = vmatpush1.msra.mxu0 %v1311
        %1345 = vmatprep.subr.mxu0 0.0
        %1346 = vmatpush2.msra.mxu0 0.0
        %1347 = vmatprep.subr.mxu0 0.0
        %1348 = vmatpush2.msra.mxu0 0.0
        %1349 = vmatprep.subr.mxu0 0.0
        %1350 = vmatpush2.msra.mxu0 0.0
        %1351 = vmatprep.subr.mxu0 0.0
        %1352 = vmatpush2.msra.mxu0 0.0
        %1353 = vmatprep.subr.mxu0 0.0
        %1354 = vmatpush2.msra.mxu0 0.0
        %1355 = vmatprep.subr.mxu0 0.0
        %1356 = vmatpush2.msra.mxu0 0.0
        %1357 = vmatprep.subr.mxu0 0.0
        %1358 = vmatpush2.msra.mxu0 0.0
        %1359 = vmatprep.subr.mxu0 0.0
        %1360 = vmatpush2.msra.mxu0 0.0
        %1361 = vmatprep.subr.mxu0 0.0
        %1362 = vmatpush2.msra.mxu0 0.0
        %1363 = vmatprep.subr.mxu0 0.0
        %1364 = vmatpush2.msra.mxu0 0.0
        %1365 = vmatprep.subr.mxu0 0.0
        %1366 = vmatpush2.msra.mxu0 0.0
        %1367 = vmatprep.subr.mxu0 0.0
        %1368 = vmatpush2.msra.mxu0 0.0
        %1369 = vmatprep.subr.mxu0 0.0
        %1370 = vmatpush2.msra.mxu0 0.0
        %1371 = vmatprep.subr.mxu0 0.0
        %1372 = vmatpush2.msra.mxu0 0.0
        %1373 = vmatprep.subr.mxu0 0.0
        %1374 = vmatpush2.msra.mxu0 0.0
        %1375 = vmatprep.subr.mxu0 0.0
        %1376 = vmatpush2.msra.mxu0 0.0
        %1377 = vmatprep.mubr.f32.mxu0 0.0
        %1378 = vmatmul.mubr.f32.gmra.mxu0 %v1287
        %v1379 = vpop.f32.mrf.mxu0
        %v1380 = vadd.f32 0.0, %v1379
        %v1381 = vpop.f32.mrf.mxu0
        %1382 = vmatprep.mubr.f32.mxu0 0.0
        %1383 = vmatmul.mubr.f32.gmra.mxu0 %v1290
        %v1384 = vpop.f32.mrf.mxu0
        %v1385 = vadd.f32 0.0, %v1384
        %v1386 = vpop.f32.mrf.mxu0
        %1387 = vmatprep.mubr.f32.mxu0 0.0
        %1388 = vmatmul.mubr.f32.gmra.mxu0 %v1293
        %v1389 = vpop.f32.mrf.mxu0
        %v1390 = vadd.f32 0.0, %v1389
        %v1391 = vpop.f32.mrf.mxu0
        %1392 = vmatprep.mubr.f32.mxu0 0.0
        %1393 = vmatmul.mubr.f32.gmra.mxu0 %v1296
        %v1394 = vpop.f32.mrf.mxu0
        %v1395 = vadd.f32 0.0, %v1394
        %v1396 = vpop.f32.mrf.mxu0
        %1397 = vmatprep.mubr.f32.mxu0 0.0
        %1398 = vmatmul.mubr.f32.gmra.mxu0 %v1299
        %v1399 = vpop.f32.mrf.mxu0
        %v1400 = vadd.f32 0.0, %v1399
        %v1401 = vpop.f32.mrf.mxu0
        %1402 = vmatprep.mubr.f32.mxu0 0.0
        %1403 = vmatmul.mubr.f32.gmra.mxu0 %v1302
        %v1404 = vpop.f32.mrf.mxu0
        %v1405 = vadd.f32 0.0, %v1404
        %v1406 = vpop.f32.mrf.mxu0
        %1407 = vmatprep.mubr.f32.mxu0 0.0
        %1408 = vmatmul.mubr.f32.gmra.mxu0 %v1305
        %v1409 = vpop.f32.mrf.mxu0
        %v1410 = vadd.f32 0.0, %v1409
        %v1411 = vpop.f32.mrf.mxu0
        %1412 = vmatprep.mubr.f32.mxu0 0.0
        %1413 = vmatmul.mubr.f32.gmra.mxu0 %v1308
        %v1414 = vpop.f32.mrf.mxu0
        %v1415 = vadd.f32 0.0, %v1414
        %v1416 = vpop.f32.mrf.mxu0
        %1417 = vdwg.mxu0
        %v1418 = vadd.f32 %v1276, %v1380
        %v1419 = vadd.f32 %v1277, %v1385
        %v1420 = vadd.f32 %v1278, %v1390
        %v1421 = vadd.f32 %v1279, %v1395
        %v1422 = vadd.f32 %v1280, %v1400
        %v1423 = vadd.f32 %v1281, %v1405
        %v1424 = vadd.f32 %v1282, %v1410
        %v1425 = vadd.f32 %v1283, %v1415
        %s1426 = scalar_lea.vmem %s360, 28
        %v1427 = vld [vmem:[%s1426] sm:$0xf]
        %v1429 = vsel %vm450, %v431, 0
        %v1432 = vsel %vm450, %v432, 0
        %v1435 = vsel %vm450, %v433, 0
        %v1438 = vsel %vm450, %v434, 0
        %v1441 = vsel %vm450, %v435, 0
        %v1444 = vsel %vm450, %v436, 0
        %v1447 = vsel %vm450, %v437, 0
        %v1450 = vsel %vm450, %v438, 0
        %v1453 = vsel %vm475, %v1427, 0
        %1455 = vmatprep.subr.mxu0 0.0
        %1456 = vmatpush1.msra.mxu0 0.0
        %1457 = vmatprep.subr.mxu0 0.0
        %1458 = vmatpush1.msra.mxu0 0.0
        %1459 = vmatprep.subr.mxu0 0.0
        %1460 = vmatpush1.msra.mxu0 0.0
        %1461 = vmatprep.subr.mxu0 0.0
        %1462 = vmatpush1.msra.mxu0 0.0
        %1463 = vmatprep.subr.mxu0 0.0
        %1464 = vmatpush1.msra.mxu0 0.0
        %1465 = vmatprep.subr.mxu0 0.0
        %1466 = vmatpush1.msra.mxu0 0.0
        %1467 = vmatprep.subr.mxu0 0.0
        %1468 = vmatpush1.msra.mxu0 0.0
        %1469 = vmatprep.subr.mxu0 0.0
        %1470 = vmatpush1.msra.mxu0 0.0
        %1471 = vmatprep.subr.mxu0 0.0
        %1472 = vmatpush1.msra.mxu0 0.0
        %1473 = vmatprep.subr.mxu0 0.0
        %1474 = vmatpush1.msra.mxu0 0.0
        %1475 = vmatprep.subr.mxu0 0.0
        %1476 = vmatpush1.msra.mxu0 0.0
        %1477 = vmatprep.subr.mxu0 0.0
        %1478 = vmatpush1.msra.mxu0 0.0
        %1479 = vmatprep.subr.mxu0 0.0
        %1480 = vmatpush1.msra.mxu0 0.0
        %1481 = vmatprep.subr.mxu0 0.0
        %1482 = vmatpush1.msra.mxu0 0.0
        %1483 = vmatprep.subr.mxu0 0.0
        %1484 = vmatpush1.msra.mxu0 0.0
        %1485 = vmatprep.subr.mxu0 0.0
        %1486 = vmatpush1.msra.mxu0 %v1453
        %1487 = vmatprep.subr.mxu0 0.0
        %1488 = vmatpush2.msra.mxu0 0.0
        %1489 = vmatprep.subr.mxu0 0.0
        %1490 = vmatpush2.msra.mxu0 0.0
        %1491 = vmatprep.subr.mxu0 0.0
        %1492 = vmatpush2.msra.mxu0 0.0
        %1493 = vmatprep.subr.mxu0 0.0
        %1494 = vmatpush2.msra.mxu0 0.0
        %1495 = vmatprep.subr.mxu0 0.0
        %1496 = vmatpush2.msra.mxu0 0.0
        %1497 = vmatprep.subr.mxu0 0.0
        %1498 = vmatpush2.msra.mxu0 0.0
        %1499 = vmatprep.subr.mxu0 0.0
        %1500 = vmatpush2.msra.mxu0 0.0
        %1501 = vmatprep.subr.mxu0 0.0
        %1502 = vmatpush2.msra.mxu0 0.0
        %1503 = vmatprep.subr.mxu0 0.0
        %1504 = vmatpush2.msra.mxu0 0.0
        %1505 = vmatprep.subr.mxu0 0.0
        %1506 = vmatpush2.msra.mxu0 0.0
        %1507 = vmatprep.subr.mxu0 0.0
        %1508 = vmatpush2.msra.mxu0 0.0
        %1509 = vmatprep.subr.mxu0 0.0
        %1510 = vmatpush2.msra.mxu0 0.0
        %1511 = vmatprep.subr.mxu0 0.0
        %1512 = vmatpush2.msra.mxu0 0.0
        %1513 = vmatprep.subr.mxu0 0.0
        %1514 = vmatpush2.msra.mxu0 0.0
        %1515 = vmatprep.subr.mxu0 0.0
        %1516 = vmatpush2.msra.mxu0 0.0
        %1517 = vmatprep.subr.mxu0 0.0
        %1518 = vmatpush2.msra.mxu0 0.0
        %1519 = vmatprep.mubr.f32.mxu0 0.0
        %1520 = vmatmul.mubr.f32.gmra.mxu0 %v1429
        %v1521 = vpop.f32.mrf.mxu0
        %v1522 = vadd.f32 0.0, %v1521
        %v1523 = vpop.f32.mrf.mxu0
        %1524 = vmatprep.mubr.f32.mxu0 0.0
        %1525 = vmatmul.mubr.f32.gmra.mxu0 %v1432
        %v1526 = vpop.f32.mrf.mxu0
        %v1527 = vadd.f32 0.0, %v1526
        %v1528 = vpop.f32.mrf.mxu0
        %1529 = vmatprep.mubr.f32.mxu0 0.0
        %1530 = vmatmul.mubr.f32.gmra.mxu0 %v1435
        %v1531 = vpop.f32.mrf.mxu0
        %v1532 = vadd.f32 0.0, %v1531
        %v1533 = vpop.f32.mrf.mxu0
        %1534 = vmatprep.mubr.f32.mxu0 0.0
        %1535 = vmatmul.mubr.f32.gmra.mxu0 %v1438
        %v1536 = vpop.f32.mrf.mxu0
        %v1537 = vadd.f32 0.0, %v1536
        %v1538 = vpop.f32.mrf.mxu0
        %1539 = vmatprep.mubr.f32.mxu0 0.0
        %1540 = vmatmul.mubr.f32.gmra.mxu0 %v1441
        %v1541 = vpop.f32.mrf.mxu0
        %v1542 = vadd.f32 0.0, %v1541
        %v1543 = vpop.f32.mrf.mxu0
        %1544 = vmatprep.mubr.f32.mxu0 0.0
        %1545 = vmatmul.mubr.f32.gmra.mxu0 %v1444
        %v1546 = vpop.f32.mrf.mxu0
        %v1547 = vadd.f32 0.0, %v1546
        %v1548 = vpop.f32.mrf.mxu0
        %1549 = vmatprep.mubr.f32.mxu0 0.0
        %1550 = vmatmul.mubr.f32.gmra.mxu0 %v1447
        %v1551 = vpop.f32.mrf.mxu0
        %v1552 = vadd.f32 0.0, %v1551
        %v1553 = vpop.f32.mrf.mxu0
        %1554 = vmatprep.mubr.f32.mxu0 0.0
        %1555 = vmatmul.mubr.f32.gmra.mxu0 %v1450
        %v1556 = vpop.f32.mrf.mxu0
        %v1557 = vadd.f32 0.0, %v1556
        %v1558 = vpop.f32.mrf.mxu0
        %1559 = vdwg.mxu0
        %v1560 = vadd.f32 %v1418, %v1522
        %v1561 = vadd.f32 %v1419, %v1527
        %v1562 = vadd.f32 %v1420, %v1532
        %v1563 = vadd.f32 %v1421, %v1537
        %v1564 = vadd.f32 %v1422, %v1542
        %v1565 = vadd.f32 %v1423, %v1547
        %v1566 = vadd.f32 %v1424, %v1552
        %v1567 = vadd.f32 %v1425, %v1557
        %s1568 = scalar_lea.vmem %s360, 32
        %v1569 = vld [vmem:[%s1568] sm:$0xf]
        %v1571 = vsel %vm450, %v439, 0
        %v1574 = vsel %vm450, %v440, 0
        %v1577 = vsel %vm450, %v441, 0
        %v1580 = vsel %vm450, %v442, 0
        %v1583 = vsel %vm450, %v443, 0
        %v1586 = vsel %vm450, %v444, 0
        %v1589 = vsel %vm450, %v445, 0
        %v1592 = vsel %vm450, %v446, 0
        %v1595 = vsel %vm475, %v1569, 0
        %1597 = vmatprep.subr.mxu0 0.0
        %1598 = vmatpush1.msra.mxu0 0.0
        %1599 = vmatprep.subr.mxu0 0.0
        %1600 = vmatpush1.msra.mxu0 0.0
        %1601 = vmatprep.subr.mxu0 0.0
        %1602 = vmatpush1.msra.mxu0 0.0
        %1603 = vmatprep.subr.mxu0 0.0
        %1604 = vmatpush1.msra.mxu0 0.0
        %1605 = vmatprep.subr.mxu0 0.0
        %1606 = vmatpush1.msra.mxu0 0.0
        %1607 = vmatprep.subr.mxu0 0.0
        %1608 = vmatpush1.msra.mxu0 0.0
        %1609 = vmatprep.subr.mxu0 0.0
        %1610 = vmatpush1.msra.mxu0 0.0
        %1611 = vmatprep.subr.mxu0 0.0
        %1612 = vmatpush1.msra.mxu0 0.0
        %1613 = vmatprep.subr.mxu0 0.0
        %1614 = vmatpush1.msra.mxu0 0.0
        %1615 = vmatprep.subr.mxu0 0.0
        %1616 = vmatpush1.msra.mxu0 0.0
        %1617 = vmatprep.subr.mxu0 0.0
        %1618 = vmatpush1.msra.mxu0 0.0
        %1619 = vmatprep.subr.mxu0 0.0
        %1620 = vmatpush1.msra.mxu0 0.0
        %1621 = vmatprep.subr.mxu0 0.0
        %1622 = vmatpush1.msra.mxu0 0.0
        %1623 = vmatprep.subr.mxu0 0.0
        %1624 = vmatpush1.msra.mxu0 0.0
        %1625 = vmatprep.subr.mxu0 0.0
        %1626 = vmatpush1.msra.mxu0 0.0
        %1627 = vmatprep.subr.mxu0 0.0
        %1628 = vmatpush1.msra.mxu0 %v1595
        %1629 = vmatprep.subr.mxu0 0.0
        %1630 = vmatpush2.msra.mxu0 0.0
        %1631 = vmatprep.subr.mxu0 0.0
        %1632 = vmatpush2.msra.mxu0 0.0
        %1633 = vmatprep.subr.mxu0 0.0
        %1634 = vmatpush2.msra.mxu0 0.0
        %1635 = vmatprep.subr.mxu0 0.0
        %1636 = vmatpush2.msra.mxu0 0.0
        %1637 = vmatprep.subr.mxu0 0.0
        %1638 = vmatpush2.msra.mxu0 0.0
        %1639 = vmatprep.subr.mxu0 0.0
        %1640 = vmatpush2.msra.mxu0 0.0
        %1641 = vmatprep.subr.mxu0 0.0
        %1642 = vmatpush2.msra.mxu0 0.0
        %1643 = vmatprep.subr.mxu0 0.0
        %1644 = vmatpush2.msra.mxu0 0.0
        %1645 = vmatprep.subr.mxu0 0.0
        %1646 = vmatpush2.msra.mxu0 0.0
        %1647 = vmatprep.subr.mxu0 0.0
        %1648 = vmatpush2.msra.mxu0 0.0
        %1649 = vmatprep.subr.mxu0 0.0
        %1650 = vmatpush2.msra.mxu0 0.0
        %1651 = vmatprep.subr.mxu0 0.0
        %1652 = vmatpush2.msra.mxu0 0.0
        %1653 = vmatprep.subr.mxu0 0.0
        %1654 = vmatpush2.msra.mxu0 0.0
        %1655 = vmatprep.subr.mxu0 0.0
        %1656 = vmatpush2.msra.mxu0 0.0
        %1657 = vmatprep.subr.mxu0 0.0
        %1658 = vmatpush2.msra.mxu0 0.0
        %1659 = vmatprep.subr.mxu0 0.0
        %1660 = vmatpush2.msra.mxu0 0.0
        %1661 = vmatprep.mubr.f32.mxu0 0.0
        %1662 = vmatmul.mubr.f32.gmra.mxu0 %v1571
        %v1663 = vpop.f32.mrf.mxu0
        %v1664 = vadd.f32 0.0, %v1663
        %v1665 = vpop.f32.mrf.mxu0
        %1666 = vmatprep.mubr.f32.mxu0 0.0
        %1667 = vmatmul.mubr.f32.gmra.mxu0 %v1574
        %v1668 = vpop.f32.mrf.mxu0
        %v1669 = vadd.f32 0.0, %v1668
        %v1670 = vpop.f32.mrf.mxu0
        %1671 = vmatprep.mubr.f32.mxu0 0.0
        %1672 = vmatmul.mubr.f32.gmra.mxu0 %v1577
        %v1673 = vpop.f32.mrf.mxu0
        %v1674 = vadd.f32 0.0, %v1673
        %v1675 = vpop.f32.mrf.mxu0
        %1676 = vmatprep.mubr.f32.mxu0 0.0
        %1677 = vmatmul.mubr.f32.gmra.mxu0 %v1580
        %v1678 = vpop.f32.mrf.mxu0
        %v1679 = vadd.f32 0.0, %v1678
        %v1680 = vpop.f32.mrf.mxu0
        %1681 = vmatprep.mubr.f32.mxu0 0.0
        %1682 = vmatmul.mubr.f32.gmra.mxu0 %v1583
        %v1683 = vpop.f32.mrf.mxu0
        %v1684 = vadd.f32 0.0, %v1683
        %v1685 = vpop.f32.mrf.mxu0
        %1686 = vmatprep.mubr.f32.mxu0 0.0
        %1687 = vmatmul.mubr.f32.gmra.mxu0 %v1586
        %v1688 = vpop.f32.mrf.mxu0
        %v1689 = vadd.f32 0.0, %v1688
        %v1690 = vpop.f32.mrf.mxu0
        %1691 = vmatprep.mubr.f32.mxu0 0.0
        %1692 = vmatmul.mubr.f32.gmra.mxu0 %v1589
        %v1693 = vpop.f32.mrf.mxu0
        %v1694 = vadd.f32 0.0, %v1693
        %v1695 = vpop.f32.mrf.mxu0
        %1696 = vmatprep.mubr.f32.mxu0 0.0
        %1697 = vmatmul.mubr.f32.gmra.mxu0 %v1592
        %v1698 = vpop.f32.mrf.mxu0
        %v1699 = vadd.f32 0.0, %v1698
        %v1700 = vpop.f32.mrf.mxu0
        %1701 = vdwg.mxu0
        %v1702 = vadd.f32 %v1560, %v1664
        %v1703 = vadd.f32 %v1561, %v1669
        %v1704 = vadd.f32 %v1562, %v1674
        %v1705 = vadd.f32 %v1563, %v1679
        %v1706 = vadd.f32 %v1564, %v1684
        %v1707 = vadd.f32 %v1565, %v1689
        %v1708 = vadd.f32 %v1566, %v1694
        %v1709 = vadd.f32 %v1567, %v1699
        %v1710 = vld [vmem:[%s363] sm:$0x1]
        %v1712 = vlaneseq
        %v1713 = vshrl.u32 %v1712, 7
        %v1714 = vsub.s32 0, %v1713
        %v1715 = vrot.slane %v1710, %v1714
        %v1717 = vadd.f32 %v1702, %v1715
        %v1718 = vadd.f32 %v1703, %v1715
        %v1719 = vadd.f32 %v1704, %v1715
        %v1720 = vadd.f32 %v1705, %v1715
        %v1721 = vadd.f32 %v1706, %v1715
        %v1722 = vadd.f32 %v1707, %v1715
        %v1723 = vadd.f32 %v1708, %v1715
        %v1724 = vadd.f32 %v1709, %v1715
        %1725 = vst [vmem:[%s336] sm:$0xff] %v1717
        %1726 = vst [vmem:[%s336 + $0x8] sm:$0xff] %v1718
        %1727 = vst [vmem:[%s336 + $0x10] sm:$0xff] %v1719
        %1728 = vst [vmem:[%s336 + $0x18] sm:$0xff] %v1720
        %1729 = vst [vmem:[%s336 + $0x20] sm:$0xff] %v1721
        %1730 = vst [vmem:[%s336 + $0x28] sm:$0xff] %v1722
        %1731 = vst [vmem:[%s336 + $0x30] sm:$0xff] %v1723
        %1732 = vst [vmem:[%s336 + $0x38] sm:$0xff] %v1724
        %s1733 = sand.u32 %s207, 1
        %s1734 = scalar_lea.sflag [#allocation3], %s1733
        %s1735 = sand.u32 %s207, 1
        %s1736 = smul.addr %s1735, 64
        %s1737 = scalar_lea.vmem [#allocation2], %s1736
        // Predicated region
        $region45: #{tpu_custom_call.1} parent=43 // pred_check
          %p1738 = pneg %p217
        $region46: #{tpu_custom_call.1} parent=43 // pred_check_branch
          %1740 = sbr.rel (%p1738) target = $region48
        $region47: #{tpu_custom_call.1} parent=43 // pred_region
          %s1741 = smul.u32 8, %s26
          %s1743 = ssub.s32 1024, 1024
          %1744 = vsyncadd %s1734, %s1743
          %s1745 = sadd.s32 %s27, %s1741
          %s1746 = smul.addr %s25, 8
          %s1747 = sadd.s32 %s1745, %s1746
          %s1748 = smul.addr %s1747, 128
          %s1749 = scalar_lea.hbm %s6, %s1748
          %s1750 = sshll.u32 %s1737, 4
          %s1751 = int_to_ptr.vmem [resolvable:$true] %s1750
          %1756 = dma.vmem_to_hbm [thread:$0]  %s1751, 1024, %s1749, %s1734, 128, 128, 8
        $region48: #{tpu_custom_call.1} parent=43 // pred_fallthru
          _
      $region44: #{tpu_custom_call.1} parent=5 // pred_fallthru
        _
      %p1757 = scmp.le.s32.totalorder 2, %s15
      // Predicated region
      $region49: #{tpu_custom_call.1} parent=5 // pred_check
        %p1758 = pneg %p1757
      $region50: #{tpu_custom_call.1} parent=5 // pred_check_branch
        %1760 = sbr.rel (%p1758) target = $region52
      $region51: #{tpu_custom_call.1} parent=5 // pred_region
        %s1761 = ssub.s32 %s15, 2
        // Predicated region
        $region53: #{tpu_custom_call.1} parent=51 // pred_check
          %p1762 = pneg %p223
        $region54: #{tpu_custom_call.1} parent=51 // pred_check_branch
          %1764 = sbr.rel (%p1762) target = $region56
        $region55: #{tpu_custom_call.1} parent=51 // pred_region
          %s1765 = sand.u32 %s208, 1
          %s1766 = scalar_lea.sflag [#allocation3], %s1765
          %s1767 = sand.u32 %s208, 1
          %s1768 = smul.addr %s1767, 64
          %s1769 = scalar_lea.vmem [#allocation2], %s1768
          %1770 = dma.done %s1766, 1024
        $region56: #{tpu_custom_call.1} parent=51 // pred_fallthru
          _
      $region52: #{tpu_custom_call.1} parent=5 // pred_fallthru
        _
    $region6: #{tpu_custom_call.1} parent=1 // loop_footer
      %s19 = sadd.s32 1, %s15
    $region7: #{tpu_custom_call.1} parent=1 // loop_footer_branch
      %14 = sbr.rel target = $region3
    $region8: #{tpu_custom_call.1} parent=1 // loop_exit
      _
    %1771 = vsyncpa [#allocation3], 1
    %s1772 = scalar_lea.sflag [#allocation3], 1
    %1773 = vsyncpa %s1772, 1

</llo_original>
